<compile_context>
chip_gen: v6e
topology: v6e:2x2x1
jax: 0.10.0
libtpu: 0.0.40
codegen_flags: <defaults>
</compile_context>

<pallas_src>
import jax
import jax.numpy as jnp
import numpy as np
from jax.experimental import pallas as pl
from jax.experimental.pallas import tpu as pltpu

K = 13            # ResBlock conv kernel size
PAD = 6           # ResBlock conv padding
N_RESBLOCKS = 5


def discriminator_kernel(x_ref, w1_ref, b1_ref, wrb_ref, brb_ref,
                         wlin_ref, blin_ref, out_ref):
    NB, L, Cin = x_ref.shape
    ndf = w1_ref.shape[1]
    KC = wrb_ref.shape[1]                       # K * ndf packed contraction depth
    LP = ((L + 2 * PAD + 7) // 8) * 8           # sublane-aligned padded length

    # ---- Conv1 (1x1 conv == channel matmul), batch folded into the MXU M dim.
    # Cin is tiny so MXU depth utilization is poor, but it is a single push and
    # not on the hot path; deliberately left on the MXU (review: "or leave it").
    x2 = x_ref[...].reshape(NB * L, Cin)
    h2 = jnp.dot(x2, w1_ref[...], preferred_element_type=jnp.float32) + b1_ref[...]
    h = h2.reshape(NB, L, ndf)

    # Zero constants for in-register 'same' padding; hoisted once, reused by all
    # 10 convs (JAX does not CSE broadcast_in_dim).
    zlead = jnp.zeros((NB, PAD, ndf), jnp.float32)
    ztrail = jnp.zeros((NB, LP - PAD - L, ndf), jnp.float32)

    def conv13(t, idx):
        """'same' Conv1d(k=13, p=6) as ONE (NB*L, K*ndf) @ (K*ndf, ndf) matmul.

        The im2col patch is assembled fully in-register: zero-pad once, then
        derive the 13 shifted copies with pltpu.roll on the batch-merged 2-D
        view.  No VMEM scratch round-trip, no unaligned Ref loads/stores.
        """
        hp = jnp.concatenate([zlead, t, ztrail], axis=1)        # (NB, LP, ndf)
        hp2 = hp.reshape(NB * LP, ndf)                          # merge major dims
        segs = []
        for k in range(K):
            # roll by -k (as a positive shift); rows l < L of each LP block are
            # then original rows l+k.  Since l+k <= L-1+K-1 < LP the window never
            # crosses a batch boundary or the circular wrap.
            r = hp2 if k == 0 else pltpu.roll(hp2, shift=NB * LP - k, axis=0)
            segs.append(r.reshape(NB, LP, ndf)[:, :L, :])
        # lane index of the patch = k*ndf + c, matching the packed weight rows
        patch = jnp.concatenate(segs, axis=-1)                  # (NB, L, K*ndf)
        o = jnp.dot(patch.reshape(NB * L, KC), wrb_ref[idx],
                    preferred_element_type=jnp.float32)         # (NB*L, ndf)
        o = o + brb_ref[idx:idx + 1, :]
        return o.reshape(NB, L, ndf)

    # ---- 5 ResBlocks: h + 0.3 * conv(relu(conv(relu(h)))) ----
    for rb in range(N_RESBLOCKS):
        t = jnp.maximum(h, 0.0)
        t = conv13(t, 2 * rb)
        t = jnp.maximum(t, 0.0)
        t = conv13(t, 2 * rb + 1)
        h = h + 0.3 * t

    # ---- last_linear for the whole shard, emitted lane-dense as a (1, NB) row.
    prod = h * wlin_ref[...][None, :, :]                         # (NB, L, ndf)
    col = jnp.sum(jnp.sum(prod, axis=2, keepdims=True), axis=1)  # (NB, 1)
    # relayout-free column->row "transpose" via a one-hot reduction
    onehot = (jax.lax.broadcasted_iota(jnp.int32, (NB, NB), 0) ==
              jax.lax.broadcasted_iota(jnp.int32, (NB, NB), 1)).astype(jnp.float32)
    row = jnp.sum(col * onehot, axis=0, keepdims=True)           # (1, NB)
    out_ref[...] = row + blin_ref[0]


def _pick_batch_shards(n, l):
    """2-way 'parallel' split only on dual-TC chips AND only when each shard
    still fills a full MXU M-tile (NB*L >= 256) and the lane-dense sharded
    output block stays layout-legal (NB % 128 == 0)."""
    try:
        kind = jax.devices()[0].device_kind.lower()
    except Exception:
        return 1
    dual_tc = any(tok in kind for tok in ("v4", "v5p", "v7", "7x"))
    if not dual_tc or n % 2 != 0:
        return 1
    nb = n // 2
    if nb * l >= 256 and nb % 128 == 0:
        return 2
    return 1


def _vmem_limit_bytes(nb, l, cin, ndf):
    """Footprint rule: weights + activations, with the fused im2col patch being
    ~13x the activation footprint, times double-buffering headroom.  Clamped so
    the same number is valid on v5e/v6e (128 MiB) and v7x (64 MiB physical)."""
    f32 = 4
    weights = (cin * ndf + ndf + 2 * N_RESBLOCKS * (K * ndf * ndf + ndf)
               + l * ndf + 8) * f32
    acts = nb * l * (cin + ndf * (K + 6)) * f32
    need = 2 * (weights + acts)
    return int(min(max(4 * need, 16 * 2 ** 20), 48 * 2 ** 20))


def discriminator_forward(x_ncl, params, *, batch_shards=None):
    N, Cin, L = x_ncl.shape
    ndf = params["w1"].shape[1]
    G = _pick_batch_shards(N, L) if batch_shards is None else batch_shards
    assert N % G == 0
    NB = N // G

    x_nlc = jnp.transpose(x_ncl, (0, 2, 1)).astype(jnp.float32)          # (N, L, Cin)
    # Pack conv weights for the fused K*ndf contraction: row index = k*ndf + c_in.
    wrb_packed = params["wrb"].reshape(2 * N_RESBLOCKS, K * ndf, ndf).astype(jnp.float32)
    # PyTorch flatten order is channel-major: index c*L + l -> (ndf, L) -> (L, ndf)
    wlin_t = jnp.transpose(params["wlin"].reshape(ndf, L), (1, 0)).astype(jnp.float32)
    blin = params["blin"].reshape(1).astype(jnp.float32)

    out_row = pl.pallas_call(
        discriminator_kernel,
        out_shape=jax.ShapeDtypeStruct((1, N), jnp.float32),
        grid_spec=pltpu.PrefetchScalarGridSpec(
            num_scalar_prefetch=0,
            grid=(G,),
            in_specs=[
                pl.BlockSpec((NB, L, Cin), lambda g: (g, 0, 0)),
                pl.BlockSpec((Cin, ndf), lambda g: (0, 0)),
                pl.BlockSpec((1, ndf), lambda g: (0, 0)),
                pl.BlockSpec((2 * N_RESBLOCKS, K * ndf, ndf), lambda g: (0, 0, 0)),
                pl.BlockSpec((2 * N_RESBLOCKS, ndf), lambda g: (0, 0)),
                pl.BlockSpec((L, ndf), lambda g: (0, 0)),
                pl.BlockSpec(memory_space=pltpu.MemorySpace.SMEM),     # blin scalar
            ],
            out_specs=pl.BlockSpec((1, NB), lambda g: (0, g)),
        ),
        compiler_params=pltpu.CompilerParams(
            dimension_semantics=("parallel",),
            vmem_limit_bytes=_vmem_limit_bytes(NB, L, Cin, ndf)),
    )(x_nlc, params["w1"].astype(jnp.float32), params["b1"].astype(jnp.float32),
      wrb_packed, params["brb"].astype(jnp.float32), wlin_t, blin)

    return jnp.transpose(out_row)                                        # (N, 1)


def reference_forward(x_ncl, params):
    """Pure-JAX reference with identical math (validates im2col/weight packing)."""
    N, Cin, L = x_ncl.shape
    ndf = params["w1"].shape[1]
    x = jnp.transpose(x_ncl, (0, 2, 1)).astype(jnp.float32)              # (N, L, Cin)
    h = jnp.einsum("nlc,cd->nld", x, params["w1"]) + params["b1"][None]

    def conv(hh, idx):
        hp = jnp.pad(hh, ((0, 0), (PAD, PAD), (0, 0)))
        acc = jnp.zeros((N, L, ndf), jnp.float32)
        for k in range(K):
            acc = acc + jnp.einsum("nlc,cd->nld", hp[:, k:k + L, :],
                                   params["wrb"][idx, k])
        return acc + params["brb"][idx][None, None]

    for rb in range(N_RESBLOCKS):
        t = jnp.maximum(h, 0.0)
        t = conv(t, 2 * rb)
        t = jnp.maximum(t, 0.0)
        t = conv(t, 2 * rb + 1)
        h = h + 0.3 * t

    flat = jnp.transpose(h, (0, 2, 1)).reshape(N, ndf * L)               # channel-major
    return flat @ params["wlin"][:, None] + params["blin"]


if __name__ == "__main__":
    # small shapes consistent with the module: batch=2, output_nc=4, ndf=32, seqL=16
    N, Cin, ndf, L = 2, 4, 32, 16

    key = jax.random.PRNGKey(0)
    ks = jax.random.split(key, 7)
    params = {
        "w1":   jax.random.normal(ks[0], (Cin, ndf), jnp.float32) * 0.1,
        "b1":   jax.random.normal(ks[1], (1, ndf), jnp.float32) * 0.1,
        "wrb":  jax.random.normal(ks[2], (2 * N_RESBLOCKS, K, ndf, ndf),
                                  jnp.float32) * 0.02,
        "brb":  jax.random.normal(ks[3], (2 * N_RESBLOCKS, ndf), jnp.float32) * 0.02,
        "wlin": jax.random.normal(ks[4], (ndf * L,), jnp.float32) * 0.05,
        "blin": jax.random.normal(ks[5], (1,), jnp.float32) * 0.05,
    }
    x = jax.random.normal(ks[6], (N, Cin, L), jnp.float32)

    out = jax.block_until_ready(discriminator_forward(x, params))
    ref = jax.block_until_ready(reference_forward(x, params))

    assert out.shape == (N, 1), out.shape
    np.testing.assert_allclose(np.asarray(out), np.asarray(ref),
                               rtol=1e-3, atol=1e-3)
    print("KERNEL_OK")
</pallas_src>

<mosaic_0001>
module attributes {stable_mosaic.version = 11 : i64} {
  func.func @discriminator_kernel(%arg0: i32, %arg1: memref<2x16x4xf32, #tpu.memory_space<vmem>>, %arg2: memref<4x32xf32, #tpu.memory_space<vmem>>, %arg3: memref<1x32xf32, #tpu.memory_space<vmem>>, %arg4: memref<10x416x32xf32, #tpu.memory_space<vmem>>, %arg5: memref<10x32xf32, #tpu.memory_space<vmem>>, %arg6: memref<16x32xf32, #tpu.memory_space<vmem>>, %arg7: memref<1xf32, #tpu.memory_space<smem>>, %arg8: memref<1x2xf32, #tpu.memory_space<vmem>>) attributes {dimension_semantics = [#tpu.dimension_semantics<parallel>], iteration_bounds = array<i64: 1>, scalar_prefetch = 0 : i64, scratch_operands = 0 : i64, tpu.core_type = #tpu.core_type<tc>, window_params = [{transform_indices = @transform_0, window_bounds = array<i64: 2, 16, 4>}, {pipeline_mode = #tpu.pipeline_mode<synchronous>, transform_indices = @transform_1, window_bounds = array<i64: 4, 32>}, {pipeline_mode = #tpu.pipeline_mode<synchronous>, transform_indices = @transform_2, window_bounds = array<i64: 1, 32>}, {pipeline_mode = #tpu.pipeline_mode<synchronous>, transform_indices = @transform_3, window_bounds = array<i64: 10, 416, 32>}, {pipeline_mode = #tpu.pipeline_mode<synchronous>, transform_indices = @transform_4, window_bounds = array<i64: 10, 32>}, {pipeline_mode = #tpu.pipeline_mode<synchronous>, transform_indices = @transform_5, window_bounds = array<i64: 16, 32>}, {transform_indices = @transform_6, window_bounds = array<i64: 1>}, {transform_indices = @transform_7, window_bounds = array<i64: 1, 2>}]} {
    %c0 = arith.constant 0 : index
    %c0_0 = arith.constant 0 : index
    %c0_1 = arith.constant 0 : index
    %0 = vector.load %arg1[%c0, %c0_0, %c0_1] : memref<2x16x4xf32, #tpu.memory_space<vmem>>, vector<2x16x4xf32>
    %1 = vector.shape_cast %0 : vector<2x16x4xf32> to vector<32x4xf32>
    %c0_2 = arith.constant 0 : index
    %c0_3 = arith.constant 0 : index
    %2 = vector.load %arg2[%c0_2, %c0_3] : memref<4x32xf32, #tpu.memory_space<vmem>>, vector<4x32xf32>
    %cst = arith.constant dense<0.000000e+00> : vector<32x32xf32>
    %3 = tpu.matmul %1, %2, %cst {dimension_numbers = #tpu.dot_dimension_numbers<[1], [0], [0], [1], [0, 0, 1, 1], [], []>} : vector<32x4xf32>, vector<4x32xf32>, vector<32x32xf32> -> vector<32x32xf32>
    %c0_4 = arith.constant 0 : index
    %c0_5 = arith.constant 0 : index
    %4 = vector.load %arg3[%c0_4, %c0_5] : memref<1x32xf32, #tpu.memory_space<vmem>>, vector<1x32xf32>
    %5 = vector.broadcast %4 : vector<1x32xf32> to vector<32x32xf32>
    %6 = arith.addf %3, %5 : vector<32x32xf32>
    %7 = vector.shape_cast %6 : vector<32x32xf32> to vector<2x16x32xf32>
    %cst_6 = arith.constant 0.000000e+00 : f32
    %8 = vector.broadcast %cst_6 : f32 to vector<2x6x32xf32>
    %cst_7 = arith.constant 0.000000e+00 : f32
    %9 = vector.broadcast %cst_7 : f32 to vector<2x10x32xf32>
    %cst_8 = arith.constant 0.000000e+00 : f32
    %10 = vector.broadcast %cst_8 : f32 to vector<2x16x32xf32>
    %11 = arith.maximumf %7, %10 : vector<2x16x32xf32>
    %12 = tpu.concatenate %8, %11, %9 in 1 : vector<2x6x32xf32>, vector<2x16x32xf32>, vector<2x10x32xf32> -> vector<2x32x32xf32>
    %13 = vector.shape_cast %12 : vector<2x32x32xf32> to vector<64x32xf32>
    %14 = vector.shape_cast %13 : vector<64x32xf32> to vector<2x32x32xf32>
    %15 = vector.extract_strided_slice %14 {offsets = [0, 0, 0], sizes = [2, 16, 32], strides = [1, 1, 1]} : vector<2x32x32xf32> to vector<2x16x32xf32>
    %c63_i32 = arith.constant 63 : i32
    %16 = tpu.dynamic_rotate %13 by %c63_i32 dim 0 : vector<64x32xf32>, i32 -> vector<64x32xf32>
    %17 = vector.shape_cast %16 : vector<64x32xf32> to vector<2x32x32xf32>
    %18 = vector.extract_strided_slice %17 {offsets = [0, 0, 0], sizes = [2, 16, 32], strides = [1, 1, 1]} : vector<2x32x32xf32> to vector<2x16x32xf32>
    %c62_i32 = arith.constant 62 : i32
    %19 = tpu.dynamic_rotate %13 by %c62_i32 dim 0 : vector<64x32xf32>, i32 -> vector<64x32xf32>
    %20 = vector.shape_cast %19 : vector<64x32xf32> to vector<2x32x32xf32>
    %21 = vector.extract_strided_slice %20 {offsets = [0, 0, 0], sizes = [2, 16, 32], strides = [1, 1, 1]} : vector<2x32x32xf32> to vector<2x16x32xf32>
    %c61_i32 = arith.constant 61 : i32
    %22 = tpu.dynamic_rotate %13 by %c61_i32 dim 0 : vector<64x32xf32>, i32 -> vector<64x32xf32>
    %23 = vector.shape_cast %22 : vector<64x32xf32> to vector<2x32x32xf32>
    %24 = vector.extract_strided_slice %23 {offsets = [0, 0, 0], sizes = [2, 16, 32], strides = [1, 1, 1]} : vector<2x32x32xf32> to vector<2x16x32xf32>
    %c60_i32 = arith.constant 60 : i32
    %25 = tpu.dynamic_rotate %13 by %c60_i32 dim 0 : vector<64x32xf32>, i32 -> vector<64x32xf32>
    %26 = vector.shape_cast %25 : vector<64x32xf32> to vector<2x32x32xf32>
    %27 = vector.extract_strided_slice %26 {offsets = [0, 0, 0], sizes = [2, 16, 32], strides = [1, 1, 1]} : vector<2x32x32xf32> to vector<2x16x32xf32>
    %c59_i32 = arith.constant 59 : i32
    %28 = tpu.dynamic_rotate %13 by %c59_i32 dim 0 : vector<64x32xf32>, i32 -> vector<64x32xf32>
    %29 = vector.shape_cast %28 : vector<64x32xf32> to vector<2x32x32xf32>
    %30 = vector.extract_strided_slice %29 {offsets = [0, 0, 0], sizes = [2, 16, 32], strides = [1, 1, 1]} : vector<2x32x32xf32> to vector<2x16x32xf32>
    %c58_i32 = arith.constant 58 : i32
    %31 = tpu.dynamic_rotate %13 by %c58_i32 dim 0 : vector<64x32xf32>, i32 -> vector<64x32xf32>
    %32 = vector.shape_cast %31 : vector<64x32xf32> to vector<2x32x32xf32>
    %33 = vector.extract_strided_slice %32 {offsets = [0, 0, 0], sizes = [2, 16, 32], strides = [1, 1, 1]} : vector<2x32x32xf32> to vector<2x16x32xf32>
    %c57_i32 = arith.constant 57 : i32
    %34 = tpu.dynamic_rotate %13 by %c57_i32 dim 0 : vector<64x32xf32>, i32 -> vector<64x32xf32>
    %35 = vector.shape_cast %34 : vector<64x32xf32> to vector<2x32x32xf32>
    %36 = vector.extract_strided_slice %35 {offsets = [0, 0, 0], sizes = [2, 16, 32], strides = [1, 1, 1]} : vector<2x32x32xf32> to vector<2x16x32xf32>
    %c56_i32 = arith.constant 56 : i32
    %37 = tpu.dynamic_rotate %13 by %c56_i32 dim 0 : vector<64x32xf32>, i32 -> vector<64x32xf32>
    %38 = vector.shape_cast %37 : vector<64x32xf32> to vector<2x32x32xf32>
    %39 = vector.extract_strided_slice %38 {offsets = [0, 0, 0], sizes = [2, 16, 32], strides = [1, 1, 1]} : vector<2x32x32xf32> to vector<2x16x32xf32>
    %c55_i32 = arith.constant 55 : i32
    %40 = tpu.dynamic_rotate %13 by %c55_i32 dim 0 : vector<64x32xf32>, i32 -> vector<64x32xf32>
    %41 = vector.shape_cast %40 : vector<64x32xf32> to vector<2x32x32xf32>
    %42 = vector.extract_strided_slice %41 {offsets = [0, 0, 0], sizes = [2, 16, 32], strides = [1, 1, 1]} : vector<2x32x32xf32> to vector<2x16x32xf32>
    %c54_i32 = arith.constant 54 : i32
    %43 = tpu.dynamic_rotate %13 by %c54_i32 dim 0 : vector<64x32xf32>, i32 -> vector<64x32xf32>
    %44 = vector.shape_cast %43 : vector<64x32xf32> to vector<2x32x32xf32>
    %45 = vector.extract_strided_slice %44 {offsets = [0, 0, 0], sizes = [2, 16, 32], strides = [1, 1, 1]} : vector<2x32x32xf32> to vector<2x16x32xf32>
    %c53_i32 = arith.constant 53 : i32
    %46 = tpu.dynamic_rotate %13 by %c53_i32 dim 0 : vector<64x32xf32>, i32 -> vector<64x32xf32>
    %47 = vector.shape_cast %46 : vector<64x32xf32> to vector<2x32x32xf32>
    %48 = vector.extract_strided_slice %47 {offsets = [0, 0, 0], sizes = [2, 16, 32], strides = [1, 1, 1]} : vector<2x32x32xf32> to vector<2x16x32xf32>
    %c52_i32 = arith.constant 52 : i32
    %49 = tpu.dynamic_rotate %13 by %c52_i32 dim 0 : vector<64x32xf32>, i32 -> vector<64x32xf32>
    %50 = vector.shape_cast %49 : vector<64x32xf32> to vector<2x32x32xf32>
    %51 = vector.extract_strided_slice %50 {offsets = [0, 0, 0], sizes = [2, 16, 32], strides = [1, 1, 1]} : vector<2x32x32xf32> to vector<2x16x32xf32>
    %52 = tpu.concatenate %15, %18, %21, %24, %27, %30, %33, %36, %39, %42, %45, %48, %51 in 2 : vector<2x16x32xf32>, vector<2x16x32xf32>, vector<2x16x32xf32>, vector<2x16x32xf32>, vector<2x16x32xf32>, vector<2x16x32xf32>, vector<2x16x32xf32>, vector<2x16x32xf32>, vector<2x16x32xf32>, vector<2x16x32xf32>, vector<2x16x32xf32>, vector<2x16x32xf32>, vector<2x16x32xf32> -> vector<2x16x416xf32>
    %53 = vector.shape_cast %52 : vector<2x16x416xf32> to vector<32x416xf32>
    %c0_9 = arith.constant 0 : index
    %c0_10 = arith.constant 0 : index
    %c0_11 = arith.constant 0 : index
    %54 = vector.load %arg4[%c0_9, %c0_10, %c0_11] : memref<10x416x32xf32, #tpu.memory_space<vmem>>, vector<1x416x32xf32>
    %55 = vector.shape_cast %54 : vector<1x416x32xf32> to vector<416x32xf32>
    %cst_12 = arith.constant dense<0.000000e+00> : vector<32x32xf32>
    %56 = tpu.matmul %53, %55, %cst_12 {dimension_numbers = #tpu.dot_dimension_numbers<[1], [0], [0], [1], [0, 0, 1, 1], [], []>} : vector<32x416xf32>, vector<416x32xf32>, vector<32x32xf32> -> vector<32x32xf32>
    %c0_13 = arith.constant 0 : index
    %c0_14 = arith.constant 0 : index
    %57 = vector.load %arg5[%c0_13, %c0_14] : memref<10x32xf32, #tpu.memory_space<vmem>>, vector<1x32xf32>
    %58 = vector.broadcast %57 : vector<1x32xf32> to vector<32x32xf32>
    %59 = arith.addf %56, %58 : vector<32x32xf32>
    %60 = vector.shape_cast %59 : vector<32x32xf32> to vector<2x16x32xf32>
    %cst_15 = arith.constant 0.000000e+00 : f32
    %61 = vector.broadcast %cst_15 : f32 to vector<2x16x32xf32>
    %62 = arith.maximumf %60, %61 : vector<2x16x32xf32>
    %63 = tpu.concatenate %8, %62, %9 in 1 : vector<2x6x32xf32>, vector<2x16x32xf32>, vector<2x10x32xf32> -> vector<2x32x32xf32>
    %64 = vector.shape_cast %63 : vector<2x32x32xf32> to vector<64x32xf32>
    %65 = vector.shape_cast %64 : vector<64x32xf32> to vector<2x32x32xf32>
    %66 = vector.extract_strided_slice %65 {offsets = [0, 0, 0], sizes = [2, 16, 32], strides = [1, 1, 1]} : vector<2x32x32xf32> to vector<2x16x32xf32>
    %c63_i32_16 = arith.constant 63 : i32
    %67 = tpu.dynamic_rotate %64 by %c63_i32_16 dim 0 : vector<64x32xf32>, i32 -> vector<64x32xf32>
    %68 = vector.shape_cast %67 : vector<64x32xf32> to vector<2x32x32xf32>
    %69 = vector.extract_strided_slice %68 {offsets = [0, 0, 0], sizes = [2, 16, 32], strides = [1, 1, 1]} : vector<2x32x32xf32> to vector<2x16x32xf32>
    %c62_i32_17 = arith.constant 62 : i32
    %70 = tpu.dynamic_rotate %64 by %c62_i32_17 dim 0 : vector<64x32xf32>, i32 -> vector<64x32xf32>
    %71 = vector.shape_cast %70 : vector<64x32xf32> to vector<2x32x32xf32>
    %72 = vector.extract_strided_slice %71 {offsets = [0, 0, 0], sizes = [2, 16, 32], strides = [1, 1, 1]} : vector<2x32x32xf32> to vector<2x16x32xf32>
    %c61_i32_18 = arith.constant 61 : i32
    %73 = tpu.dynamic_rotate %64 by %c61_i32_18 dim 0 : vector<64x32xf32>, i32 -> vector<64x32xf32>
    %74 = vector.shape_cast %73 : vector<64x32xf32> to vector<2x32x32xf32>
    %75 = vector.extract_strided_slice %74 {offsets = [0, 0, 0], sizes = [2, 16, 32], strides = [1, 1, 1]} : vector<2x32x32xf32> to vector<2x16x32xf32>
    %c60_i32_19 = arith.constant 60 : i32
    %76 = tpu.dynamic_rotate %64 by %c60_i32_19 dim 0 : vector<64x32xf32>, i32 -> vector<64x32xf32>
    %77 = vector.shape_cast %76 : vector<64x32xf32> to vector<2x32x32xf32>
    %78 = vector.extract_strided_slice %77 {offsets = [0, 0, 0], sizes = [2, 16, 32], strides = [1, 1, 1]} : vector<2x32x32xf32> to vector<2x16x32xf32>
    %c59_i32_20 = arith.constant 59 : i32
    %79 = tpu.dynamic_rotate %64 by %c59_i32_20 dim 0 : vector<64x32xf32>, i32 -> vector<64x32xf32>
    %80 = vector.shape_cast %79 : vector<64x32xf32> to vector<2x32x32xf32>
    %81 = vector.extract_strided_slice %80 {offsets = [0, 0, 0], sizes = [2, 16, 32], strides = [1, 1, 1]} : vector<2x32x32xf32> to vector<2x16x32xf32>
    %c58_i32_21 = arith.constant 58 : i32
    %82 = tpu.dynamic_rotate %64 by %c58_i32_21 dim 0 : vector<64x32xf32>, i32 -> vector<64x32xf32>
    %83 = vector.shape_cast %82 : vector<64x32xf32> to vector<2x32x32xf32>
    %84 = vector.extract_strided_slice %83 {offsets = [0, 0, 0], sizes = [2, 16, 32], strides = [1, 1, 1]} : vector<2x32x32xf32> to vector<2x16x32xf32>
    %c57_i32_22 = arith.constant 57 : i32
    %85 = tpu.dynamic_rotate %64 by %c57_i32_22 dim 0 : vector<64x32xf32>, i32 -> vector<64x32xf32>
    %86 = vector.shape_cast %85 : vector<64x32xf32> to vector<2x32x32xf32>
    %87 = vector.extract_strided_slice %86 {offsets = [0, 0, 0], sizes = [2, 16, 32], strides = [1, 1, 1]} : vector<2x32x32xf32> to vector<2x16x32xf32>
    %c56_i32_23 = arith.constant 56 : i32
    %88 = tpu.dynamic_rotate %64 by %c56_i32_23 dim 0 : vector<64x32xf32>, i32 -> vector<64x32xf32>
    %89 = vector.shape_cast %88 : vector<64x32xf32> to vector<2x32x32xf32>
    %90 = vector.extract_strided_slice %89 {offsets = [0, 0, 0], sizes = [2, 16, 32], strides = [1, 1, 1]} : vector<2x32x32xf32> to vector<2x16x32xf32>
    %c55_i32_24 = arith.constant 55 : i32
    %91 = tpu.dynamic_rotate %64 by %c55_i32_24 dim 0 : vector<64x32xf32>, i32 -> vector<64x32xf32>
    %92 = vector.shape_cast %91 : vector<64x32xf32> to vector<2x32x32xf32>
    %93 = vector.extract_strided_slice %92 {offsets = [0, 0, 0], sizes = [2, 16, 32], strides = [1, 1, 1]} : vector<2x32x32xf32> to vector<2x16x32xf32>
    %c54_i32_25 = arith.constant 54 : i32
    %94 = tpu.dynamic_rotate %64 by %c54_i32_25 dim 0 : vector<64x32xf32>, i32 -> vector<64x32xf32>
    %95 = vector.shape_cast %94 : vector<64x32xf32> to vector<2x32x32xf32>
    %96 = vector.extract_strided_slice %95 {offsets = [0, 0, 0], sizes = [2, 16, 32], strides = [1, 1, 1]} : vector<2x32x32xf32> to vector<2x16x32xf32>
    %c53_i32_26 = arith.constant 53 : i32
    %97 = tpu.dynamic_rotate %64 by %c53_i32_26 dim 0 : vector<64x32xf32>, i32 -> vector<64x32xf32>
    %98 = vector.shape_cast %97 : vector<64x32xf32> to vector<2x32x32xf32>
    %99 = vector.extract_strided_slice %98 {offsets = [0, 0, 0], sizes = [2, 16, 32], strides = [1, 1, 1]} : vector<2x32x32xf32> to vector<2x16x32xf32>
    %c52_i32_27 = arith.constant 52 : i32
    %100 = tpu.dynamic_rotate %64 by %c52_i32_27 dim 0 : vector<64x32xf32>, i32 -> vector<64x32xf32>
    %101 = vector.shape_cast %100 : vector<64x32xf32> to vector<2x32x32xf32>
    %102 = vector.extract_strided_slice %101 {offsets = [0, 0, 0], sizes = [2, 16, 32], strides = [1, 1, 1]} : vector<2x32x32xf32> to vector<2x16x32xf32>
    %103 = tpu.concatenate %66, %69, %72, %75, %78, %81, %84, %87, %90, %93, %96, %99, %102 in 2 : vector<2x16x32xf32>, vector<2x16x32xf32>, vector<2x16x32xf32>, vector<2x16x32xf32>, vector<2x16x32xf32>, vector<2x16x32xf32>, vector<2x16x32xf32>, vector<2x16x32xf32>, vector<2x16x32xf32>, vector<2x16x32xf32>, vector<2x16x32xf32>, vector<2x16x32xf32>, vector<2x16x32xf32> -> vector<2x16x416xf32>
    %104 = vector.shape_cast %103 : vector<2x16x416xf32> to vector<32x416xf32>
    %c1 = arith.constant 1 : index
    %c0_28 = arith.constant 0 : index
    %c0_29 = arith.constant 0 : index
    %105 = vector.load %arg4[%c1, %c0_28, %c0_29] : memref<10x416x32xf32, #tpu.memory_space<vmem>>, vector<1x416x32xf32>
    %106 = vector.shape_cast %105 : vector<1x416x32xf32> to vector<416x32xf32>
    %cst_30 = arith.constant dense<0.000000e+00> : vector<32x32xf32>
    %107 = tpu.matmul %104, %106, %cst_30 {dimension_numbers = #tpu.dot_dimension_numbers<[1], [0], [0], [1], [0, 0, 1, 1], [], []>} : vector<32x416xf32>, vector<416x32xf32>, vector<32x32xf32> -> vector<32x32xf32>
    %c1_31 = arith.constant 1 : index
    %c0_32 = arith.constant 0 : index
    %108 = vector.load %arg5[%c1_31, %c0_32] : memref<10x32xf32, #tpu.memory_space<vmem>>, vector<1x32xf32>
    %109 = vector.broadcast %108 : vector<1x32xf32> to vector<32x32xf32>
    %110 = arith.addf %107, %109 : vector<32x32xf32>
    %111 = vector.shape_cast %110 : vector<32x32xf32> to vector<2x16x32xf32>
    %cst_33 = arith.constant 3.000000e-01 : f32
    %112 = vector.broadcast %cst_33 : f32 to vector<2x16x32xf32>
    %113 = arith.mulf %112, %111 : vector<2x16x32xf32>
    %114 = arith.addf %7, %113 : vector<2x16x32xf32>
    %cst_34 = arith.constant 0.000000e+00 : f32
    %115 = vector.broadcast %cst_34 : f32 to vector<2x16x32xf32>
    %116 = arith.maximumf %114, %115 : vector<2x16x32xf32>
    %117 = tpu.concatenate %8, %116, %9 in 1 : vector<2x6x32xf32>, vector<2x16x32xf32>, vector<2x10x32xf32> -> vector<2x32x32xf32>
    %118 = vector.shape_cast %117 : vector<2x32x32xf32> to vector<64x32xf32>
    %119 = vector.shape_cast %118 : vector<64x32xf32> to vector<2x32x32xf32>
    %120 = vector.extract_strided_slice %119 {offsets = [0, 0, 0], sizes = [2, 16, 32], strides = [1, 1, 1]} : vector<2x32x32xf32> to vector<2x16x32xf32>
    %c63_i32_35 = arith.constant 63 : i32
    %121 = tpu.dynamic_rotate %118 by %c63_i32_35 dim 0 : vector<64x32xf32>, i32 -> vector<64x32xf32>
    %122 = vector.shape_cast %121 : vector<64x32xf32> to vector<2x32x32xf32>
    %123 = vector.extract_strided_slice %122 {offsets = [0, 0, 0], sizes = [2, 16, 32], strides = [1, 1, 1]} : vector<2x32x32xf32> to vector<2x16x32xf32>
    %c62_i32_36 = arith.constant 62 : i32
    %124 = tpu.dynamic_rotate %118 by %c62_i32_36 dim 0 : vector<64x32xf32>, i32 -> vector<64x32xf32>
    %125 = vector.shape_cast %124 : vector<64x32xf32> to vector<2x32x32xf32>
    %126 = vector.extract_strided_slice %125 {offsets = [0, 0, 0], sizes = [2, 16, 32], strides = [1, 1, 1]} : vector<2x32x32xf32> to vector<2x16x32xf32>
    %c61_i32_37 = arith.constant 61 : i32
    %127 = tpu.dynamic_rotate %118 by %c61_i32_37 dim 0 : vector<64x32xf32>, i32 -> vector<64x32xf32>
    %128 = vector.shape_cast %127 : vector<64x32xf32> to vector<2x32x32xf32>
    %129 = vector.extract_strided_slice %128 {offsets = [0, 0, 0], sizes = [2, 16, 32], strides = [1, 1, 1]} : vector<2x32x32xf32> to vector<2x16x32xf32>
    %c60_i32_38 = arith.constant 60 : i32
    %130 = tpu.dynamic_rotate %118 by %c60_i32_38 dim 0 : vector<64x32xf32>, i32 -> vector<64x32xf32>
    %131 = vector.shape_cast %130 : vector<64x32xf32> to vector<2x32x32xf32>
    %132 = vector.extract_strided_slice %131 {offsets = [0, 0, 0], sizes = [2, 16, 32], strides = [1, 1, 1]} : vector<2x32x32xf32> to vector<2x16x32xf32>
    %c59_i32_39 = arith.constant 59 : i32
    %133 = tpu.dynamic_rotate %118 by %c59_i32_39 dim 0 : vector<64x32xf32>, i32 -> vector<64x32xf32>
    %134 = vector.shape_cast %133 : vector<64x32xf32> to vector<2x32x32xf32>
    %135 = vector.extract_strided_slice %134 {offsets = [0, 0, 0], sizes = [2, 16, 32], strides = [1, 1, 1]} : vector<2x32x32xf32> to vector<2x16x32xf32>
    %c58_i32_40 = arith.constant 58 : i32
    %136 = tpu.dynamic_rotate %118 by %c58_i32_40 dim 0 : vector<64x32xf32>, i32 -> vector<64x32xf32>
    %137 = vector.shape_cast %136 : vector<64x32xf32> to vector<2x32x32xf32>
    %138 = vector.extract_strided_slice %137 {offsets = [0, 0, 0], sizes = [2, 16, 32], strides = [1, 1, 1]} : vector<2x32x32xf32> to vector<2x16x32xf32>
    %c57_i32_41 = arith.constant 57 : i32
    %139 = tpu.dynamic_rotate %118 by %c57_i32_41 dim 0 : vector<64x32xf32>, i32 -> vector<64x32xf32>
    %140 = vector.shape_cast %139 : vector<64x32xf32> to vector<2x32x32xf32>
    %141 = vector.extract_strided_slice %140 {offsets = [0, 0, 0], sizes = [2, 16, 32], strides = [1, 1, 1]} : vector<2x32x32xf32> to vector<2x16x32xf32>
    %c56_i32_42 = arith.constant 56 : i32
    %142 = tpu.dynamic_rotate %118 by %c56_i32_42 dim 0 : vector<64x32xf32>, i32 -> vector<64x32xf32>
    %143 = vector.shape_cast %142 : vector<64x32xf32> to vector<2x32x32xf32>
    %144 = vector.extract_strided_slice %143 {offsets = [0, 0, 0], sizes = [2, 16, 32], strides = [1, 1, 1]} : vector<2x32x32xf32> to vector<2x16x32xf32>
    %c55_i32_43 = arith.constant 55 : i32
    %145 = tpu.dynamic_rotate %118 by %c55_i32_43 dim 0 : vector<64x32xf32>, i32 -> vector<64x32xf32>
    %146 = vector.shape_cast %145 : vector<64x32xf32> to vector<2x32x32xf32>
    %147 = vector.extract_strided_slice %146 {offsets = [0, 0, 0], sizes = [2, 16, 32], strides = [1, 1, 1]} : vector<2x32x32xf32> to vector<2x16x32xf32>
    %c54_i32_44 = arith.constant 54 : i32
    %148 = tpu.dynamic_rotate %118 by %c54_i32_44 dim 0 : vector<64x32xf32>, i32 -> vector<64x32xf32>
    %149 = vector.shape_cast %148 : vector<64x32xf32> to vector<2x32x32xf32>
    %150 = vector.extract_strided_slice %149 {offsets = [0, 0, 0], sizes = [2, 16, 32], strides = [1, 1, 1]} : vector<2x32x32xf32> to vector<2x16x32xf32>
    %c53_i32_45 = arith.constant 53 : i32
    %151 = tpu.dynamic_rotate %118 by %c53_i32_45 dim 0 : vector<64x32xf32>, i32 -> vector<64x32xf32>
    %152 = vector.shape_cast %151 : vector<64x32xf32> to vector<2x32x32xf32>
    %153 = vector.extract_strided_slice %152 {offsets = [0, 0, 0], sizes = [2, 16, 32], strides = [1, 1, 1]} : vector<2x32x32xf32> to vector<2x16x32xf32>
    %c52_i32_46 = arith.constant 52 : i32
    %154 = tpu.dynamic_rotate %118 by %c52_i32_46 dim 0 : vector<64x32xf32>, i32 -> vector<64x32xf32>
    %155 = vector.shape_cast %154 : vector<64x32xf32> to vector<2x32x32xf32>
    %156 = vector.extract_strided_slice %155 {offsets = [0, 0, 0], sizes = [2, 16, 32], strides = [1, 1, 1]} : vector<2x32x32xf32> to vector<2x16x32xf32>
    %157 = tpu.concatenate %120, %123, %126, %129, %132, %135, %138, %141, %144, %147, %150, %153, %156 in 2 : vector<2x16x32xf32>, vector<2x16x32xf32>, vector<2x16x32xf32>, vector<2x16x32xf32>, vector<2x16x32xf32>, vector<2x16x32xf32>, vector<2x16x32xf32>, vector<2x16x32xf32>, vector<2x16x32xf32>, vector<2x16x32xf32>, vector<2x16x32xf32>, vector<2x16x32xf32>, vector<2x16x32xf32> -> vector<2x16x416xf32>
    %158 = vector.shape_cast %157 : vector<2x16x416xf32> to vector<32x416xf32>
    %c2 = arith.constant 2 : index
    %c0_47 = arith.constant 0 : index
    %c0_48 = arith.constant 0 : index
    %159 = vector.load %arg4[%c2, %c0_47, %c0_48] : memref<10x416x32xf32, #tpu.memory_space<vmem>>, vector<1x416x32xf32>
    %160 = vector.shape_cast %159 : vector<1x416x32xf32> to vector<416x32xf32>
    %cst_49 = arith.constant dense<0.000000e+00> : vector<32x32xf32>
    %161 = tpu.matmul %158, %160, %cst_49 {dimension_numbers = #tpu.dot_dimension_numbers<[1], [0], [0], [1], [0, 0, 1, 1], [], []>} : vector<32x416xf32>, vector<416x32xf32>, vector<32x32xf32> -> vector<32x32xf32>
    %c2_50 = arith.constant 2 : index
    %c0_51 = arith.constant 0 : index
    %162 = vector.load %arg5[%c2_50, %c0_51] : memref<10x32xf32, #tpu.memory_space<vmem>>, vector<1x32xf32>
    %163 = vector.broadcast %162 : vector<1x32xf32> to vector<32x32xf32>
    %164 = arith.addf %161, %163 : vector<32x32xf32>
    %165 = vector.shape_cast %164 : vector<32x32xf32> to vector<2x16x32xf32>
    %cst_52 = arith.constant 0.000000e+00 : f32
    %166 = vector.broadcast %cst_52 : f32 to vector<2x16x32xf32>
    %167 = arith.maximumf %165, %166 : vector<2x16x32xf32>
    %168 = tpu.concatenate %8, %167, %9 in 1 : vector<2x6x32xf32>, vector<2x16x32xf32>, vector<2x10x32xf32> -> vector<2x32x32xf32>
    %169 = vector.shape_cast %168 : vector<2x32x32xf32> to vector<64x32xf32>
    %170 = vector.shape_cast %169 : vector<64x32xf32> to vector<2x32x32xf32>
    %171 = vector.extract_strided_slice %170 {offsets = [0, 0, 0], sizes = [2, 16, 32], strides = [1, 1, 1]} : vector<2x32x32xf32> to vector<2x16x32xf32>
    %c63_i32_53 = arith.constant 63 : i32
    %172 = tpu.dynamic_rotate %169 by %c63_i32_53 dim 0 : vector<64x32xf32>, i32 -> vector<64x32xf32>
    %173 = vector.shape_cast %172 : vector<64x32xf32> to vector<2x32x32xf32>
    %174 = vector.extract_strided_slice %173 {offsets = [0, 0, 0], sizes = [2, 16, 32], strides = [1, 1, 1]} : vector<2x32x32xf32> to vector<2x16x32xf32>
    %c62_i32_54 = arith.constant 62 : i32
    %175 = tpu.dynamic_rotate %169 by %c62_i32_54 dim 0 : vector<64x32xf32>, i32 -> vector<64x32xf32>
    %176 = vector.shape_cast %175 : vector<64x32xf32> to vector<2x32x32xf32>
    %177 = vector.extract_strided_slice %176 {offsets = [0, 0, 0], sizes = [2, 16, 32], strides = [1, 1, 1]} : vector<2x32x32xf32> to vector<2x16x32xf32>
    %c61_i32_55 = arith.constant 61 : i32
    %178 = tpu.dynamic_rotate %169 by %c61_i32_55 dim 0 : vector<64x32xf32>, i32 -> vector<64x32xf32>
    %179 = vector.shape_cast %178 : vector<64x32xf32> to vector<2x32x32xf32>
    %180 = vector.extract_strided_slice %179 {offsets = [0, 0, 0], sizes = [2, 16, 32], strides = [1, 1, 1]} : vector<2x32x32xf32> to vector<2x16x32xf32>
    %c60_i32_56 = arith.constant 60 : i32
    %181 = tpu.dynamic_rotate %169 by %c60_i32_56 dim 0 : vector<64x32xf32>, i32 -> vector<64x32xf32>
    %182 = vector.shape_cast %181 : vector<64x32xf32> to vector<2x32x32xf32>
    %183 = vector.extract_strided_slice %182 {offsets = [0, 0, 0], sizes = [2, 16, 32], strides = [1, 1, 1]} : vector<2x32x32xf32> to vector<2x16x32xf32>
    %c59_i32_57 = arith.constant 59 : i32
    %184 = tpu.dynamic_rotate %169 by %c59_i32_57 dim 0 : vector<64x32xf32>, i32 -> vector<64x32xf32>
    %185 = vector.shape_cast %184 : vector<64x32xf32> to vector<2x32x32xf32>
    %186 = vector.extract_strided_slice %185 {offsets = [0, 0, 0], sizes = [2, 16, 32], strides = [1, 1, 1]} : vector<2x32x32xf32> to vector<2x16x32xf32>
    %c58_i32_58 = arith.constant 58 : i32
    %187 = tpu.dynamic_rotate %169 by %c58_i32_58 dim 0 : vector<64x32xf32>, i32 -> vector<64x32xf32>
    %188 = vector.shape_cast %187 : vector<64x32xf32> to vector<2x32x32xf32>
    %189 = vector.extract_strided_slice %188 {offsets = [0, 0, 0], sizes = [2, 16, 32], strides = [1, 1, 1]} : vector<2x32x32xf32> to vector<2x16x32xf32>
    %c57_i32_59 = arith.constant 57 : i32
    %190 = tpu.dynamic_rotate %169 by %c57_i32_59 dim 0 : vector<64x32xf32>, i32 -> vector<64x32xf32>
    %191 = vector.shape_cast %190 : vector<64x32xf32> to vector<2x32x32xf32>
    %192 = vector.extract_strided_slice %191 {offsets = [0, 0, 0], sizes = [2, 16, 32], strides = [1, 1, 1]} : vector<2x32x32xf32> to vector<2x16x32xf32>
    %c56_i32_60 = arith.constant 56 : i32
    %193 = tpu.dynamic_rotate %169 by %c56_i32_60 dim 0 : vector<64x32xf32>, i32 -> vector<64x32xf32>
    %194 = vector.shape_cast %193 : vector<64x32xf32> to vector<2x32x32xf32>
    %195 = vector.extract_strided_slice %194 {offsets = [0, 0, 0], sizes = [2, 16, 32], strides = [1, 1, 1]} : vector<2x32x32xf32> to vector<2x16x32xf32>
    %c55_i32_61 = arith.constant 55 : i32
    %196 = tpu.dynamic_rotate %169 by %c55_i32_61 dim 0 : vector<64x32xf32>, i32 -> vector<64x32xf32>
    %197 = vector.shape_cast %196 : vector<64x32xf32> to vector<2x32x32xf32>
    %198 = vector.extract_strided_slice %197 {offsets = [0, 0, 0], sizes = [2, 16, 32], strides = [1, 1, 1]} : vector<2x32x32xf32> to vector<2x16x32xf32>
    %c54_i32_62 = arith.constant 54 : i32
    %199 = tpu.dynamic_rotate %169 by %c54_i32_62 dim 0 : vector<64x32xf32>, i32 -> vector<64x32xf32>
    %200 = vector.shape_cast %199 : vector<64x32xf32> to vector<2x32x32xf32>
    %201 = vector.extract_strided_slice %200 {offsets = [0, 0, 0], sizes = [2, 16, 32], strides = [1, 1, 1]} : vector<2x32x32xf32> to vector<2x16x32xf32>
    %c53_i32_63 = arith.constant 53 : i32
    %202 = tpu.dynamic_rotate %169 by %c53_i32_63 dim 0 : vector<64x32xf32>, i32 -> vector<64x32xf32>
    %203 = vector.shape_cast %202 : vector<64x32xf32> to vector<2x32x32xf32>
    %204 = vector.extract_strided_slice %203 {offsets = [0, 0, 0], sizes = [2, 16, 32], strides = [1, 1, 1]} : vector<2x32x32xf32> to vector<2x16x32xf32>
    %c52_i32_64 = arith.constant 52 : i32
    %205 = tpu.dynamic_rotate %169 by %c52_i32_64 dim 0 : vector<64x32xf32>, i32 -> vector<64x32xf32>
    %206 = vector.shape_cast %205 : vector<64x32xf32> to vector<2x32x32xf32>
    %207 = vector.extract_strided_slice %206 {offsets = [0, 0, 0], sizes = [2, 16, 32], strides = [1, 1, 1]} : vector<2x32x32xf32> to vector<2x16x32xf32>
    %208 = tpu.concatenate %171, %174, %177, %180, %183, %186, %189, %192, %195, %198, %201, %204, %207 in 2 : vector<2x16x32xf32>, vector<2x16x32xf32>, vector<2x16x32xf32>, vector<2x16x32xf32>, vector<2x16x32xf32>, vector<2x16x32xf32>, vector<2x16x32xf32>, vector<2x16x32xf32>, vector<2x16x32xf32>, vector<2x16x32xf32>, vector<2x16x32xf32>, vector<2x16x32xf32>, vector<2x16x32xf32> -> vector<2x16x416xf32>
    %209 = vector.shape_cast %208 : vector<2x16x416xf32> to vector<32x416xf32>
    %c3 = arith.constant 3 : index
    %c0_65 = arith.constant 0 : index
    %c0_66 = arith.constant 0 : index
    %210 = vector.load %arg4[%c3, %c0_65, %c0_66] : memref<10x416x32xf32, #tpu.memory_space<vmem>>, vector<1x416x32xf32>
    %211 = vector.shape_cast %210 : vector<1x416x32xf32> to vector<416x32xf32>
    %cst_67 = arith.constant dense<0.000000e+00> : vector<32x32xf32>
    %212 = tpu.matmul %209, %211, %cst_67 {dimension_numbers = #tpu.dot_dimension_numbers<[1], [0], [0], [1], [0, 0, 1, 1], [], []>} : vector<32x416xf32>, vector<416x32xf32>, vector<32x32xf32> -> vector<32x32xf32>
    %c3_68 = arith.constant 3 : index
    %c0_69 = arith.constant 0 : index
    %213 = vector.load %arg5[%c3_68, %c0_69] : memref<10x32xf32, #tpu.memory_space<vmem>>, vector<1x32xf32>
    %214 = vector.broadcast %213 : vector<1x32xf32> to vector<32x32xf32>
    %215 = arith.addf %212, %214 : vector<32x32xf32>
    %216 = vector.shape_cast %215 : vector<32x32xf32> to vector<2x16x32xf32>
    %cst_70 = arith.constant 3.000000e-01 : f32
    %217 = vector.broadcast %cst_70 : f32 to vector<2x16x32xf32>
    %218 = arith.mulf %217, %216 : vector<2x16x32xf32>
    %219 = arith.addf %114, %218 : vector<2x16x32xf32>
    %cst_71 = arith.constant 0.000000e+00 : f32
    %220 = vector.broadcast %cst_71 : f32 to vector<2x16x32xf32>
    %221 = arith.maximumf %219, %220 : vector<2x16x32xf32>
    %222 = tpu.concatenate %8, %221, %9 in 1 : vector<2x6x32xf32>, vector<2x16x32xf32>, vector<2x10x32xf32> -> vector<2x32x32xf32>
    %223 = vector.shape_cast %222 : vector<2x32x32xf32> to vector<64x32xf32>
    %224 = vector.shape_cast %223 : vector<64x32xf32> to vector<2x32x32xf32>
    %225 = vector.extract_strided_slice %224 {offsets = [0, 0, 0], sizes = [2, 16, 32], strides = [1, 1, 1]} : vector<2x32x32xf32> to vector<2x16x32xf32>
    %c63_i32_72 = arith.constant 63 : i32
    %226 = tpu.dynamic_rotate %223 by %c63_i32_72 dim 0 : vector<64x32xf32>, i32 -> vector<64x32xf32>
    %227 = vector.shape_cast %226 : vector<64x32xf32> to vector<2x32x32xf32>
    %228 = vector.extract_strided_slice %227 {offsets = [0, 0, 0], sizes = [2, 16, 32], strides = [1, 1, 1]} : vector<2x32x32xf32> to vector<2x16x32xf32>
    %c62_i32_73 = arith.constant 62 : i32
    %229 = tpu.dynamic_rotate %223 by %c62_i32_73 dim 0 : vector<64x32xf32>, i32 -> vector<64x32xf32>
    %230 = vector.shape_cast %229 : vector<64x32xf32> to vector<2x32x32xf32>
    %231 = vector.extract_strided_slice %230 {offsets = [0, 0, 0], sizes = [2, 16, 32], strides = [1, 1, 1]} : vector<2x32x32xf32> to vector<2x16x32xf32>
    %c61_i32_74 = arith.constant 61 : i32
    %232 = tpu.dynamic_rotate %223 by %c61_i32_74 dim 0 : vector<64x32xf32>, i32 -> vector<64x32xf32>
    %233 = vector.shape_cast %232 : vector<64x32xf32> to vector<2x32x32xf32>
    %234 = vector.extract_strided_slice %233 {offsets = [0, 0, 0], sizes = [2, 16, 32], strides = [1, 1, 1]} : vector<2x32x32xf32> to vector<2x16x32xf32>
    %c60_i32_75 = arith.constant 60 : i32
    %235 = tpu.dynamic_rotate %223 by %c60_i32_75 dim 0 : vector<64x32xf32>, i32 -> vector<64x32xf32>
    %236 = vector.shape_cast %235 : vector<64x32xf32> to vector<2x32x32xf32>
    %237 = vector.extract_strided_slice %236 {offsets = [0, 0, 0], sizes = [2, 16, 32], strides = [1, 1, 1]} : vector<2x32x32xf32> to vector<2x16x32xf32>
    %c59_i32_76 = arith.constant 59 : i32
    %238 = tpu.dynamic_rotate %223 by %c59_i32_76 dim 0 : vector<64x32xf32>, i32 -> vector<64x32xf32>
    %239 = vector.shape_cast %238 : vector<64x32xf32> to vector<2x32x32xf32>
    %240 = vector.extract_strided_slice %239 {offsets = [0, 0, 0], sizes = [2, 16, 32], strides = [1, 1, 1]} : vector<2x32x32xf32> to vector<2x16x32xf32>
    %c58_i32_77 = arith.constant 58 : i32
    %241 = tpu.dynamic_rotate %223 by %c58_i32_77 dim 0 : vector<64x32xf32>, i32 -> vector<64x32xf32>
    %242 = vector.shape_cast %241 : vector<64x32xf32> to vector<2x32x32xf32>
    %243 = vector.extract_strided_slice %242 {offsets = [0, 0, 0], sizes = [2, 16, 32], strides = [1, 1, 1]} : vector<2x32x32xf32> to vector<2x16x32xf32>
    %c57_i32_78 = arith.constant 57 : i32
    %244 = tpu.dynamic_rotate %223 by %c57_i32_78 dim 0 : vector<64x32xf32>, i32 -> vector<64x32xf32>
    %245 = vector.shape_cast %244 : vector<64x32xf32> to vector<2x32x32xf32>
    %246 = vector.extract_strided_slice %245 {offsets = [0, 0, 0], sizes = [2, 16, 32], strides = [1, 1, 1]} : vector<2x32x32xf32> to vector<2x16x32xf32>
    %c56_i32_79 = arith.constant 56 : i32
    %247 = tpu.dynamic_rotate %223 by %c56_i32_79 dim 0 : vector<64x32xf32>, i32 -> vector<64x32xf32>
    %248 = vector.shape_cast %247 : vector<64x32xf32> to vector<2x32x32xf32>
    %249 = vector.extract_strided_slice %248 {offsets = [0, 0, 0], sizes = [2, 16, 32], strides = [1, 1, 1]} : vector<2x32x32xf32> to vector<2x16x32xf32>
    %c55_i32_80 = arith.constant 55 : i32
    %250 = tpu.dynamic_rotate %223 by %c55_i32_80 dim 0 : vector<64x32xf32>, i32 -> vector<64x32xf32>
    %251 = vector.shape_cast %250 : vector<64x32xf32> to vector<2x32x32xf32>
    %252 = vector.extract_strided_slice %251 {offsets = [0, 0, 0], sizes = [2, 16, 32], strides = [1, 1, 1]} : vector<2x32x32xf32> to vector<2x16x32xf32>
    %c54_i32_81 = arith.constant 54 : i32
    %253 = tpu.dynamic_rotate %223 by %c54_i32_81 dim 0 : vector<64x32xf32>, i32 -> vector<64x32xf32>
    %254 = vector.shape_cast %253 : vector<64x32xf32> to vector<2x32x32xf32>
    %255 = vector.extract_strided_slice %254 {offsets = [0, 0, 0], sizes = [2, 16, 32], strides = [1, 1, 1]} : vector<2x32x32xf32> to vector<2x16x32xf32>
    %c53_i32_82 = arith.constant 53 : i32
    %256 = tpu.dynamic_rotate %223 by %c53_i32_82 dim 0 : vector<64x32xf32>, i32 -> vector<64x32xf32>
    %257 = vector.shape_cast %256 : vector<64x32xf32> to vector<2x32x32xf32>
    %258 = vector.extract_strided_slice %257 {offsets = [0, 0, 0], sizes = [2, 16, 32], strides = [1, 1, 1]} : vector<2x32x32xf32> to vector<2x16x32xf32>
    %c52_i32_83 = arith.constant 52 : i32
    %259 = tpu.dynamic_rotate %223 by %c52_i32_83 dim 0 : vector<64x32xf32>, i32 -> vector<64x32xf32>
    %260 = vector.shape_cast %259 : vector<64x32xf32> to vector<2x32x32xf32>
    %261 = vector.extract_strided_slice %260 {offsets = [0, 0, 0], sizes = [2, 16, 32], strides = [1, 1, 1]} : vector<2x32x32xf32> to vector<2x16x32xf32>
    %262 = tpu.concatenate %225, %228, %231, %234, %237, %240, %243, %246, %249, %252, %255, %258, %261 in 2 : vector<2x16x32xf32>, vector<2x16x32xf32>, vector<2x16x32xf32>, vector<2x16x32xf32>, vector<2x16x32xf32>, vector<2x16x32xf32>, vector<2x16x32xf32>, vector<2x16x32xf32>, vector<2x16x32xf32>, vector<2x16x32xf32>, vector<2x16x32xf32>, vector<2x16x32xf32>, vector<2x16x32xf32> -> vector<2x16x416xf32>
    %263 = vector.shape_cast %262 : vector<2x16x416xf32> to vector<32x416xf32>
    %c4 = arith.constant 4 : index
    %c0_84 = arith.constant 0 : index
    %c0_85 = arith.constant 0 : index
    %264 = vector.load %arg4[%c4, %c0_84, %c0_85] : memref<10x416x32xf32, #tpu.memory_space<vmem>>, vector<1x416x32xf32>
    %265 = vector.shape_cast %264 : vector<1x416x32xf32> to vector<416x32xf32>
    %cst_86 = arith.constant dense<0.000000e+00> : vector<32x32xf32>
    %266 = tpu.matmul %263, %265, %cst_86 {dimension_numbers = #tpu.dot_dimension_numbers<[1], [0], [0], [1], [0, 0, 1, 1], [], []>} : vector<32x416xf32>, vector<416x32xf32>, vector<32x32xf32> -> vector<32x32xf32>
    %c4_87 = arith.constant 4 : index
    %c0_88 = arith.constant 0 : index
    %267 = vector.load %arg5[%c4_87, %c0_88] : memref<10x32xf32, #tpu.memory_space<vmem>>, vector<1x32xf32>
    %268 = vector.broadcast %267 : vector<1x32xf32> to vector<32x32xf32>
    %269 = arith.addf %266, %268 : vector<32x32xf32>
    %270 = vector.shape_cast %269 : vector<32x32xf32> to vector<2x16x32xf32>
    %cst_89 = arith.constant 0.000000e+00 : f32
    %271 = vector.broadcast %cst_89 : f32 to vector<2x16x32xf32>
    %272 = arith.maximumf %270, %271 : vector<2x16x32xf32>
    %273 = tpu.concatenate %8, %272, %9 in 1 : vector<2x6x32xf32>, vector<2x16x32xf32>, vector<2x10x32xf32> -> vector<2x32x32xf32>
    %274 = vector.shape_cast %273 : vector<2x32x32xf32> to vector<64x32xf32>
    %275 = vector.shape_cast %274 : vector<64x32xf32> to vector<2x32x32xf32>
    %276 = vector.extract_strided_slice %275 {offsets = [0, 0, 0], sizes = [2, 16, 32], strides = [1, 1, 1]} : vector<2x32x32xf32> to vector<2x16x32xf32>
    %c63_i32_90 = arith.constant 63 : i32
    %277 = tpu.dynamic_rotate %274 by %c63_i32_90 dim 0 : vector<64x32xf32>, i32 -> vector<64x32xf32>
    %278 = vector.shape_cast %277 : vector<64x32xf32> to vector<2x32x32xf32>
    %279 = vector.extract_strided_slice %278 {offsets = [0, 0, 0], sizes = [2, 16, 32], strides = [1, 1, 1]} : vector<2x32x32xf32> to vector<2x16x32xf32>
    %c62_i32_91 = arith.constant 62 : i32
    %280 = tpu.dynamic_rotate %274 by %c62_i32_91 dim 0 : vector<64x32xf32>, i32 -> vector<64x32xf32>
    %281 = vector.shape_cast %280 : vector<64x32xf32> to vector<2x32x32xf32>
    %282 = vector.extract_strided_slice %281 {offsets = [0, 0, 0], sizes = [2, 16, 32], strides = [1, 1, 1]} : vector<2x32x32xf32> to vector<2x16x32xf32>
    %c61_i32_92 = arith.constant 61 : i32
    %283 = tpu.dynamic_rotate %274 by %c61_i32_92 dim 0 : vector<64x32xf32>, i32 -> vector<64x32xf32>
    %284 = vector.shape_cast %283 : vector<64x32xf32> to vector<2x32x32xf32>
    %285 = vector.extract_strided_slice %284 {offsets = [0, 0, 0], sizes = [2, 16, 32], strides = [1, 1, 1]} : vector<2x32x32xf32> to vector<2x16x32xf32>
    %c60_i32_93 = arith.constant 60 : i32
    %286 = tpu.dynamic_rotate %274 by %c60_i32_93 dim 0 : vector<64x32xf32>, i32 -> vector<64x32xf32>
    %287 = vector.shape_cast %286 : vector<64x32xf32> to vector<2x32x32xf32>
    %288 = vector.extract_strided_slice %287 {offsets = [0, 0, 0], sizes = [2, 16, 32], strides = [1, 1, 1]} : vector<2x32x32xf32> to vector<2x16x32xf32>
    %c59_i32_94 = arith.constant 59 : i32
    %289 = tpu.dynamic_rotate %274 by %c59_i32_94 dim 0 : vector<64x32xf32>, i32 -> vector<64x32xf32>
    %290 = vector.shape_cast %289 : vector<64x32xf32> to vector<2x32x32xf32>
    %291 = vector.extract_strided_slice %290 {offsets = [0, 0, 0], sizes = [2, 16, 32], strides = [1, 1, 1]} : vector<2x32x32xf32> to vector<2x16x32xf32>
    %c58_i32_95 = arith.constant 58 : i32
    %292 = tpu.dynamic_rotate %274 by %c58_i32_95 dim 0 : vector<64x32xf32>, i32 -> vector<64x32xf32>
    %293 = vector.shape_cast %292 : vector<64x32xf32> to vector<2x32x32xf32>
    %294 = vector.extract_strided_slice %293 {offsets = [0, 0, 0], sizes = [2, 16, 32], strides = [1, 1, 1]} : vector<2x32x32xf32> to vector<2x16x32xf32>
    %c57_i32_96 = arith.constant 57 : i32
    %295 = tpu.dynamic_rotate %274 by %c57_i32_96 dim 0 : vector<64x32xf32>, i32 -> vector<64x32xf32>
    %296 = vector.shape_cast %295 : vector<64x32xf32> to vector<2x32x32xf32>
    %297 = vector.extract_strided_slice %296 {offsets = [0, 0, 0], sizes = [2, 16, 32], strides = [1, 1, 1]} : vector<2x32x32xf32> to vector<2x16x32xf32>
    %c56_i32_97 = arith.constant 56 : i32
    %298 = tpu.dynamic_rotate %274 by %c56_i32_97 dim 0 : vector<64x32xf32>, i32 -> vector<64x32xf32>
    %299 = vector.shape_cast %298 : vector<64x32xf32> to vector<2x32x32xf32>
    %300 = vector.extract_strided_slice %299 {offsets = [0, 0, 0], sizes = [2, 16, 32], strides = [1, 1, 1]} : vector<2x32x32xf32> to vector<2x16x32xf32>
    %c55_i32_98 = arith.constant 55 : i32
    %301 = tpu.dynamic_rotate %274 by %c55_i32_98 dim 0 : vector<64x32xf32>, i32 -> vector<64x32xf32>
    %302 = vector.shape_cast %301 : vector<64x32xf32> to vector<2x32x32xf32>
    %303 = vector.extract_strided_slice %302 {offsets = [0, 0, 0], sizes = [2, 16, 32], strides = [1, 1, 1]} : vector<2x32x32xf32> to vector<2x16x32xf32>
    %c54_i32_99 = arith.constant 54 : i32
    %304 = tpu.dynamic_rotate %274 by %c54_i32_99 dim 0 : vector<64x32xf32>, i32 -> vector<64x32xf32>
    %305 = vector.shape_cast %304 : vector<64x32xf32> to vector<2x32x32xf32>
    %306 = vector.extract_strided_slice %305 {offsets = [0, 0, 0], sizes = [2, 16, 32], strides = [1, 1, 1]} : vector<2x32x32xf32> to vector<2x16x32xf32>
    %c53_i32_100 = arith.constant 53 : i32
    %307 = tpu.dynamic_rotate %274 by %c53_i32_100 dim 0 : vector<64x32xf32>, i32 -> vector<64x32xf32>
    %308 = vector.shape_cast %307 : vector<64x32xf32> to vector<2x32x32xf32>
    %309 = vector.extract_strided_slice %308 {offsets = [0, 0, 0], sizes = [2, 16, 32], strides = [1, 1, 1]} : vector<2x32x32xf32> to vector<2x16x32xf32>
    %c52_i32_101 = arith.constant 52 : i32
    %310 = tpu.dynamic_rotate %274 by %c52_i32_101 dim 0 : vector<64x32xf32>, i32 -> vector<64x32xf32>
    %311 = vector.shape_cast %310 : vector<64x32xf32> to vector<2x32x32xf32>
    %312 = vector.extract_strided_slice %311 {offsets = [0, 0, 0], sizes = [2, 16, 32], strides = [1, 1, 1]} : vector<2x32x32xf32> to vector<2x16x32xf32>
    %313 = tpu.concatenate %276, %279, %282, %285, %288, %291, %294, %297, %300, %303, %306, %309, %312 in 2 : vector<2x16x32xf32>, vector<2x16x32xf32>, vector<2x16x32xf32>, vector<2x16x32xf32>, vector<2x16x32xf32>, vector<2x16x32xf32>, vector<2x16x32xf32>, vector<2x16x32xf32>, vector<2x16x32xf32>, vector<2x16x32xf32>, vector<2x16x32xf32>, vector<2x16x32xf32>, vector<2x16x32xf32> -> vector<2x16x416xf32>
    %314 = vector.shape_cast %313 : vector<2x16x416xf32> to vector<32x416xf32>
    %c5 = arith.constant 5 : index
    %c0_102 = arith.constant 0 : index
    %c0_103 = arith.constant 0 : index
    %315 = vector.load %arg4[%c5, %c0_102, %c0_103] : memref<10x416x32xf32, #tpu.memory_space<vmem>>, vector<1x416x32xf32>
    %316 = vector.shape_cast %315 : vector<1x416x32xf32> to vector<416x32xf32>
    %cst_104 = arith.constant dense<0.000000e+00> : vector<32x32xf32>
    %317 = tpu.matmul %314, %316, %cst_104 {dimension_numbers = #tpu.dot_dimension_numbers<[1], [0], [0], [1], [0, 0, 1, 1], [], []>} : vector<32x416xf32>, vector<416x32xf32>, vector<32x32xf32> -> vector<32x32xf32>
    %c5_105 = arith.constant 5 : index
    %c0_106 = arith.constant 0 : index
    %318 = vector.load %arg5[%c5_105, %c0_106] : memref<10x32xf32, #tpu.memory_space<vmem>>, vector<1x32xf32>
    %319 = vector.broadcast %318 : vector<1x32xf32> to vector<32x32xf32>
    %320 = arith.addf %317, %319 : vector<32x32xf32>
    %321 = vector.shape_cast %320 : vector<32x32xf32> to vector<2x16x32xf32>
    %cst_107 = arith.constant 3.000000e-01 : f32
    %322 = vector.broadcast %cst_107 : f32 to vector<2x16x32xf32>
    %323 = arith.mulf %322, %321 : vector<2x16x32xf32>
    %324 = arith.addf %219, %323 : vector<2x16x32xf32>
    %cst_108 = arith.constant 0.000000e+00 : f32
    %325 = vector.broadcast %cst_108 : f32 to vector<2x16x32xf32>
    %326 = arith.maximumf %324, %325 : vector<2x16x32xf32>
    %327 = tpu.concatenate %8, %326, %9 in 1 : vector<2x6x32xf32>, vector<2x16x32xf32>, vector<2x10x32xf32> -> vector<2x32x32xf32>
    %328 = vector.shape_cast %327 : vector<2x32x32xf32> to vector<64x32xf32>
    %329 = vector.shape_cast %328 : vector<64x32xf32> to vector<2x32x32xf32>
    %330 = vector.extract_strided_slice %329 {offsets = [0, 0, 0], sizes = [2, 16, 32], strides = [1, 1, 1]} : vector<2x32x32xf32> to vector<2x16x32xf32>
    %c63_i32_109 = arith.constant 63 : i32
    %331 = tpu.dynamic_rotate %328 by %c63_i32_109 dim 0 : vector<64x32xf32>, i32 -> vector<64x32xf32>
    %332 = vector.shape_cast %331 : vector<64x32xf32> to vector<2x32x32xf32>
    %333 = vector.extract_strided_slice %332 {offsets = [0, 0, 0], sizes = [2, 16, 32], strides = [1, 1, 1]} : vector<2x32x32xf32> to vector<2x16x32xf32>
    %c62_i32_110 = arith.constant 62 : i32
    %334 = tpu.dynamic_rotate %328 by %c62_i32_110 dim 0 : vector<64x32xf32>, i32 -> vector<64x32xf32>
    %335 = vector.shape_cast %334 : vector<64x32xf32> to vector<2x32x32xf32>
    %336 = vector.extract_strided_slice %335 {offsets = [0, 0, 0], sizes = [2, 16, 32], strides = [1, 1, 1]} : vector<2x32x32xf32> to vector<2x16x32xf32>
    %c61_i32_111 = arith.constant 61 : i32
    %337 = tpu.dynamic_rotate %328 by %c61_i32_111 dim 0 : vector<64x32xf32>, i32 -> vector<64x32xf32>
    %338 = vector.shape_cast %337 : vector<64x32xf32> to vector<2x32x32xf32>
    %339 = vector.extract_strided_slice %338 {offsets = [0, 0, 0], sizes = [2, 16, 32], strides = [1, 1, 1]} : vector<2x32x32xf32> to vector<2x16x32xf32>
    %c60_i32_112 = arith.constant 60 : i32
    %340 = tpu.dynamic_rotate %328 by %c60_i32_112 dim 0 : vector<64x32xf32>, i32 -> vector<64x32xf32>
    %341 = vector.shape_cast %340 : vector<64x32xf32> to vector<2x32x32xf32>
    %342 = vector.extract_strided_slice %341 {offsets = [0, 0, 0], sizes = [2, 16, 32], strides = [1, 1, 1]} : vector<2x32x32xf32> to vector<2x16x32xf32>
    %c59_i32_113 = arith.constant 59 : i32
    %343 = tpu.dynamic_rotate %328 by %c59_i32_113 dim 0 : vector<64x32xf32>, i32 -> vector<64x32xf32>
    %344 = vector.shape_cast %343 : vector<64x32xf32> to vector<2x32x32xf32>
    %345 = vector.extract_strided_slice %344 {offsets = [0, 0, 0], sizes = [2, 16, 32], strides = [1, 1, 1]} : vector<2x32x32xf32> to vector<2x16x32xf32>
    %c58_i32_114 = arith.constant 58 : i32
    %346 = tpu.dynamic_rotate %328 by %c58_i32_114 dim 0 : vector<64x32xf32>, i32 -> vector<64x32xf32>
    %347 = vector.shape_cast %346 : vector<64x32xf32> to vector<2x32x32xf32>
    %348 = vector.extract_strided_slice %347 {offsets = [0, 0, 0], sizes = [2, 16, 32], strides = [1, 1, 1]} : vector<2x32x32xf32> to vector<2x16x32xf32>
    %c57_i32_115 = arith.constant 57 : i32
    %349 = tpu.dynamic_rotate %328 by %c57_i32_115 dim 0 : vector<64x32xf32>, i32 -> vector<64x32xf32>
    %350 = vector.shape_cast %349 : vector<64x32xf32> to vector<2x32x32xf32>
    %351 = vector.extract_strided_slice %350 {offsets = [0, 0, 0], sizes = [2, 16, 32], strides = [1, 1, 1]} : vector<2x32x32xf32> to vector<2x16x32xf32>
    %c56_i32_116 = arith.constant 56 : i32
    %352 = tpu.dynamic_rotate %328 by %c56_i32_116 dim 0 : vector<64x32xf32>, i32 -> vector<64x32xf32>
    %353 = vector.shape_cast %352 : vector<64x32xf32> to vector<2x32x32xf32>
    %354 = vector.extract_strided_slice %353 {offsets = [0, 0, 0], sizes = [2, 16, 32], strides = [1, 1, 1]} : vector<2x32x32xf32> to vector<2x16x32xf32>
    %c55_i32_117 = arith.constant 55 : i32
    %355 = tpu.dynamic_rotate %328 by %c55_i32_117 dim 0 : vector<64x32xf32>, i32 -> vector<64x32xf32>
    %356 = vector.shape_cast %355 : vector<64x32xf32> to vector<2x32x32xf32>
    %357 = vector.extract_strided_slice %356 {offsets = [0, 0, 0], sizes = [2, 16, 32], strides = [1, 1, 1]} : vector<2x32x32xf32> to vector<2x16x32xf32>
    %c54_i32_118 = arith.constant 54 : i32
    %358 = tpu.dynamic_rotate %328 by %c54_i32_118 dim 0 : vector<64x32xf32>, i32 -> vector<64x32xf32>
    %359 = vector.shape_cast %358 : vector<64x32xf32> to vector<2x32x32xf32>
    %360 = vector.extract_strided_slice %359 {offsets = [0, 0, 0], sizes = [2, 16, 32], strides = [1, 1, 1]} : vector<2x32x32xf32> to vector<2x16x32xf32>
    %c53_i32_119 = arith.constant 53 : i32
    %361 = tpu.dynamic_rotate %328 by %c53_i32_119 dim 0 : vector<64x32xf32>, i32 -> vector<64x32xf32>
    %362 = vector.shape_cast %361 : vector<64x32xf32> to vector<2x32x32xf32>
    %363 = vector.extract_strided_slice %362 {offsets = [0, 0, 0], sizes = [2, 16, 32], strides = [1, 1, 1]} : vector<2x32x32xf32> to vector<2x16x32xf32>
    %c52_i32_120 = arith.constant 52 : i32
    %364 = tpu.dynamic_rotate %328 by %c52_i32_120 dim 0 : vector<64x32xf32>, i32 -> vector<64x32xf32>
    %365 = vector.shape_cast %364 : vector<64x32xf32> to vector<2x32x32xf32>
    %366 = vector.extract_strided_slice %365 {offsets = [0, 0, 0], sizes = [2, 16, 32], strides = [1, 1, 1]} : vector<2x32x32xf32> to vector<2x16x32xf32>
    %367 = tpu.concatenate %330, %333, %336, %339, %342, %345, %348, %351, %354, %357, %360, %363, %366 in 2 : vector<2x16x32xf32>, vector<2x16x32xf32>, vector<2x16x32xf32>, vector<2x16x32xf32>, vector<2x16x32xf32>, vector<2x16x32xf32>, vector<2x16x32xf32>, vector<2x16x32xf32>, vector<2x16x32xf32>, vector<2x16x32xf32>, vector<2x16x32xf32>, vector<2x16x32xf32>, vector<2x16x32xf32> -> vector<2x16x416xf32>
    %368 = vector.shape_cast %367 : vector<2x16x416xf32> to vector<32x416xf32>
    %c6 = arith.constant 6 : index
    %c0_121 = arith.constant 0 : index
    %c0_122 = arith.constant 0 : index
    %369 = vector.load %arg4[%c6, %c0_121, %c0_122] : memref<10x416x32xf32, #tpu.memory_space<vmem>>, vector<1x416x32xf32>
    %370 = vector.shape_cast %369 : vector<1x416x32xf32> to vector<416x32xf32>
    %cst_123 = arith.constant dense<0.000000e+00> : vector<32x32xf32>
    %371 = tpu.matmul %368, %370, %cst_123 {dimension_numbers = #tpu.dot_dimension_numbers<[1], [0], [0], [1], [0, 0, 1, 1], [], []>} : vector<32x416xf32>, vector<416x32xf32>, vector<32x32xf32> -> vector<32x32xf32>
    %c6_124 = arith.constant 6 : index
    %c0_125 = arith.constant 0 : index
    %372 = vector.load %arg5[%c6_124, %c0_125] : memref<10x32xf32, #tpu.memory_space<vmem>>, vector<1x32xf32>
    %373 = vector.broadcast %372 : vector<1x32xf32> to vector<32x32xf32>
    %374 = arith.addf %371, %373 : vector<32x32xf32>
    %375 = vector.shape_cast %374 : vector<32x32xf32> to vector<2x16x32xf32>
    %cst_126 = arith.constant 0.000000e+00 : f32
    %376 = vector.broadcast %cst_126 : f32 to vector<2x16x32xf32>
    %377 = arith.maximumf %375, %376 : vector<2x16x32xf32>
    %378 = tpu.concatenate %8, %377, %9 in 1 : vector<2x6x32xf32>, vector<2x16x32xf32>, vector<2x10x32xf32> -> vector<2x32x32xf32>
    %379 = vector.shape_cast %378 : vector<2x32x32xf32> to vector<64x32xf32>
    %380 = vector.shape_cast %379 : vector<64x32xf32> to vector<2x32x32xf32>
    %381 = vector.extract_strided_slice %380 {offsets = [0, 0, 0], sizes = [2, 16, 32], strides = [1, 1, 1]} : vector<2x32x32xf32> to vector<2x16x32xf32>
    %c63_i32_127 = arith.constant 63 : i32
    %382 = tpu.dynamic_rotate %379 by %c63_i32_127 dim 0 : vector<64x32xf32>, i32 -> vector<64x32xf32>
    %383 = vector.shape_cast %382 : vector<64x32xf32> to vector<2x32x32xf32>
    %384 = vector.extract_strided_slice %383 {offsets = [0, 0, 0], sizes = [2, 16, 32], strides = [1, 1, 1]} : vector<2x32x32xf32> to vector<2x16x32xf32>
    %c62_i32_128 = arith.constant 62 : i32
    %385 = tpu.dynamic_rotate %379 by %c62_i32_128 dim 0 : vector<64x32xf32>, i32 -> vector<64x32xf32>
    %386 = vector.shape_cast %385 : vector<64x32xf32> to vector<2x32x32xf32>
    %387 = vector.extract_strided_slice %386 {offsets = [0, 0, 0], sizes = [2, 16, 32], strides = [1, 1, 1]} : vector<2x32x32xf32> to vector<2x16x32xf32>
    %c61_i32_129 = arith.constant 61 : i32
    %388 = tpu.dynamic_rotate %379 by %c61_i32_129 dim 0 : vector<64x32xf32>, i32 -> vector<64x32xf32>
    %389 = vector.shape_cast %388 : vector<64x32xf32> to vector<2x32x32xf32>
    %390 = vector.extract_strided_slice %389 {offsets = [0, 0, 0], sizes = [2, 16, 32], strides = [1, 1, 1]} : vector<2x32x32xf32> to vector<2x16x32xf32>
    %c60_i32_130 = arith.constant 60 : i32
    %391 = tpu.dynamic_rotate %379 by %c60_i32_130 dim 0 : vector<64x32xf32>, i32 -> vector<64x32xf32>
    %392 = vector.shape_cast %391 : vector<64x32xf32> to vector<2x32x32xf32>
    %393 = vector.extract_strided_slice %392 {offsets = [0, 0, 0], sizes = [2, 16, 32], strides = [1, 1, 1]} : vector<2x32x32xf32> to vector<2x16x32xf32>
    %c59_i32_131 = arith.constant 59 : i32
    %394 = tpu.dynamic_rotate %379 by %c59_i32_131 dim 0 : vector<64x32xf32>, i32 -> vector<64x32xf32>
    %395 = vector.shape_cast %394 : vector<64x32xf32> to vector<2x32x32xf32>
    %396 = vector.extract_strided_slice %395 {offsets = [0, 0, 0], sizes = [2, 16, 32], strides = [1, 1, 1]} : vector<2x32x32xf32> to vector<2x16x32xf32>
    %c58_i32_132 = arith.constant 58 : i32
    %397 = tpu.dynamic_rotate %379 by %c58_i32_132 dim 0 : vector<64x32xf32>, i32 -> vector<64x32xf32>
    %398 = vector.shape_cast %397 : vector<64x32xf32> to vector<2x32x32xf32>
    %399 = vector.extract_strided_slice %398 {offsets = [0, 0, 0], sizes = [2, 16, 32], strides = [1, 1, 1]} : vector<2x32x32xf32> to vector<2x16x32xf32>
    %c57_i32_133 = arith.constant 57 : i32
    %400 = tpu.dynamic_rotate %379 by %c57_i32_133 dim 0 : vector<64x32xf32>, i32 -> vector<64x32xf32>
    %401 = vector.shape_cast %400 : vector<64x32xf32> to vector<2x32x32xf32>
    %402 = vector.extract_strided_slice %401 {offsets = [0, 0, 0], sizes = [2, 16, 32], strides = [1, 1, 1]} : vector<2x32x32xf32> to vector<2x16x32xf32>
    %c56_i32_134 = arith.constant 56 : i32
    %403 = tpu.dynamic_rotate %379 by %c56_i32_134 dim 0 : vector<64x32xf32>, i32 -> vector<64x32xf32>
    %404 = vector.shape_cast %403 : vector<64x32xf32> to vector<2x32x32xf32>
    %405 = vector.extract_strided_slice %404 {offsets = [0, 0, 0], sizes = [2, 16, 32], strides = [1, 1, 1]} : vector<2x32x32xf32> to vector<2x16x32xf32>
    %c55_i32_135 = arith.constant 55 : i32
    %406 = tpu.dynamic_rotate %379 by %c55_i32_135 dim 0 : vector<64x32xf32>, i32 -> vector<64x32xf32>
    %407 = vector.shape_cast %406 : vector<64x32xf32> to vector<2x32x32xf32>
    %408 = vector.extract_strided_slice %407 {offsets = [0, 0, 0], sizes = [2, 16, 32], strides = [1, 1, 1]} : vector<2x32x32xf32> to vector<2x16x32xf32>
    %c54_i32_136 = arith.constant 54 : i32
    %409 = tpu.dynamic_rotate %379 by %c54_i32_136 dim 0 : vector<64x32xf32>, i32 -> vector<64x32xf32>
    %410 = vector.shape_cast %409 : vector<64x32xf32> to vector<2x32x32xf32>
    %411 = vector.extract_strided_slice %410 {offsets = [0, 0, 0], sizes = [2, 16, 32], strides = [1, 1, 1]} : vector<2x32x32xf32> to vector<2x16x32xf32>
    %c53_i32_137 = arith.constant 53 : i32
    %412 = tpu.dynamic_rotate %379 by %c53_i32_137 dim 0 : vector<64x32xf32>, i32 -> vector<64x32xf32>
    %413 = vector.shape_cast %412 : vector<64x32xf32> to vector<2x32x32xf32>
    %414 = vector.extract_strided_slice %413 {offsets = [0, 0, 0], sizes = [2, 16, 32], strides = [1, 1, 1]} : vector<2x32x32xf32> to vector<2x16x32xf32>
    %c52_i32_138 = arith.constant 52 : i32
    %415 = tpu.dynamic_rotate %379 by %c52_i32_138 dim 0 : vector<64x32xf32>, i32 -> vector<64x32xf32>
    %416 = vector.shape_cast %415 : vector<64x32xf32> to vector<2x32x32xf32>
    %417 = vector.extract_strided_slice %416 {offsets = [0, 0, 0], sizes = [2, 16, 32], strides = [1, 1, 1]} : vector<2x32x32xf32> to vector<2x16x32xf32>
    %418 = tpu.concatenate %381, %384, %387, %390, %393, %396, %399, %402, %405, %408, %411, %414, %417 in 2 : vector<2x16x32xf32>, vector<2x16x32xf32>, vector<2x16x32xf32>, vector<2x16x32xf32>, vector<2x16x32xf32>, vector<2x16x32xf32>, vector<2x16x32xf32>, vector<2x16x32xf32>, vector<2x16x32xf32>, vector<2x16x32xf32>, vector<2x16x32xf32>, vector<2x16x32xf32>, vector<2x16x32xf32> -> vector<2x16x416xf32>
    %419 = vector.shape_cast %418 : vector<2x16x416xf32> to vector<32x416xf32>
    %c7 = arith.constant 7 : index
    %c0_139 = arith.constant 0 : index
    %c0_140 = arith.constant 0 : index
    %420 = vector.load %arg4[%c7, %c0_139, %c0_140] : memref<10x416x32xf32, #tpu.memory_space<vmem>>, vector<1x416x32xf32>
    %421 = vector.shape_cast %420 : vector<1x416x32xf32> to vector<416x32xf32>
    %cst_141 = arith.constant dense<0.000000e+00> : vector<32x32xf32>
    %422 = tpu.matmul %419, %421, %cst_141 {dimension_numbers = #tpu.dot_dimension_numbers<[1], [0], [0], [1], [0, 0, 1, 1], [], []>} : vector<32x416xf32>, vector<416x32xf32>, vector<32x32xf32> -> vector<32x32xf32>
    %c7_142 = arith.constant 7 : index
    %c0_143 = arith.constant 0 : index
    %423 = vector.load %arg5[%c7_142, %c0_143] : memref<10x32xf32, #tpu.memory_space<vmem>>, vector<1x32xf32>
    %424 = vector.broadcast %423 : vector<1x32xf32> to vector<32x32xf32>
    %425 = arith.addf %422, %424 : vector<32x32xf32>
    %426 = vector.shape_cast %425 : vector<32x32xf32> to vector<2x16x32xf32>
    %cst_144 = arith.constant 3.000000e-01 : f32
    %427 = vector.broadcast %cst_144 : f32 to vector<2x16x32xf32>
    %428 = arith.mulf %427, %426 : vector<2x16x32xf32>
    %429 = arith.addf %324, %428 : vector<2x16x32xf32>
    %cst_145 = arith.constant 0.000000e+00 : f32
    %430 = vector.broadcast %cst_145 : f32 to vector<2x16x32xf32>
    %431 = arith.maximumf %429, %430 : vector<2x16x32xf32>
    %432 = tpu.concatenate %8, %431, %9 in 1 : vector<2x6x32xf32>, vector<2x16x32xf32>, vector<2x10x32xf32> -> vector<2x32x32xf32>
    %433 = vector.shape_cast %432 : vector<2x32x32xf32> to vector<64x32xf32>
    %434 = vector.shape_cast %433 : vector<64x32xf32> to vector<2x32x32xf32>
    %435 = vector.extract_strided_slice %434 {offsets = [0, 0, 0], sizes = [2, 16, 32], strides = [1, 1, 1]} : vector<2x32x32xf32> to vector<2x16x32xf32>
    %c63_i32_146 = arith.constant 63 : i32
    %436 = tpu.dynamic_rotate %433 by %c63_i32_146 dim 0 : vector<64x32xf32>, i32 -> vector<64x32xf32>
    %437 = vector.shape_cast %436 : vector<64x32xf32> to vector<2x32x32xf32>
    %438 = vector.extract_strided_slice %437 {offsets = [0, 0, 0], sizes = [2, 16, 32], strides = [1, 1, 1]} : vector<2x32x32xf32> to vector<2x16x32xf32>
    %c62_i32_147 = arith.constant 62 : i32
    %439 = tpu.dynamic_rotate %433 by %c62_i32_147 dim 0 : vector<64x32xf32>, i32 -> vector<64x32xf32>
    %440 = vector.shape_cast %439 : vector<64x32xf32> to vector<2x32x32xf32>
    %441 = vector.extract_strided_slice %440 {offsets = [0, 0, 0], sizes = [2, 16, 32], strides = [1, 1, 1]} : vector<2x32x32xf32> to vector<2x16x32xf32>
    %c61_i32_148 = arith.constant 61 : i32
    %442 = tpu.dynamic_rotate %433 by %c61_i32_148 dim 0 : vector<64x32xf32>, i32 -> vector<64x32xf32>
    %443 = vector.shape_cast %442 : vector<64x32xf32> to vector<2x32x32xf32>
    %444 = vector.extract_strided_slice %443 {offsets = [0, 0, 0], sizes = [2, 16, 32], strides = [1, 1, 1]} : vector<2x32x32xf32> to vector<2x16x32xf32>
    %c60_i32_149 = arith.constant 60 : i32
    %445 = tpu.dynamic_rotate %433 by %c60_i32_149 dim 0 : vector<64x32xf32>, i32 -> vector<64x32xf32>
    %446 = vector.shape_cast %445 : vector<64x32xf32> to vector<2x32x32xf32>
    %447 = vector.extract_strided_slice %446 {offsets = [0, 0, 0], sizes = [2, 16, 32], strides = [1, 1, 1]} : vector<2x32x32xf32> to vector<2x16x32xf32>
    %c59_i32_150 = arith.constant 59 : i32
    %448 = tpu.dynamic_rotate %433 by %c59_i32_150 dim 0 : vector<64x32xf32>, i32 -> vector<64x32xf32>
    %449 = vector.shape_cast %448 : vector<64x32xf32> to vector<2x32x32xf32>
    %450 = vector.extract_strided_slice %449 {offsets = [0, 0, 0], sizes = [2, 16, 32], strides = [1, 1, 1]} : vector<2x32x32xf32> to vector<2x16x32xf32>
    %c58_i32_151 = arith.constant 58 : i32
    %451 = tpu.dynamic_rotate %433 by %c58_i32_151 dim 0 : vector<64x32xf32>, i32 -> vector<64x32xf32>
    %452 = vector.shape_cast %451 : vector<64x32xf32> to vector<2x32x32xf32>
    %453 = vector.extract_strided_slice %452 {offsets = [0, 0, 0], sizes = [2, 16, 32], strides = [1, 1, 1]} : vector<2x32x32xf32> to vector<2x16x32xf32>
    %c57_i32_152 = arith.constant 57 : i32
    %454 = tpu.dynamic_rotate %433 by %c57_i32_152 dim 0 : vector<64x32xf32>, i32 -> vector<64x32xf32>
    %455 = vector.shape_cast %454 : vector<64x32xf32> to vector<2x32x32xf32>
    %456 = vector.extract_strided_slice %455 {offsets = [0, 0, 0], sizes = [2, 16, 32], strides = [1, 1, 1]} : vector<2x32x32xf32> to vector<2x16x32xf32>
    %c56_i32_153 = arith.constant 56 : i32
    %457 = tpu.dynamic_rotate %433 by %c56_i32_153 dim 0 : vector<64x32xf32>, i32 -> vector<64x32xf32>
    %458 = vector.shape_cast %457 : vector<64x32xf32> to vector<2x32x32xf32>
    %459 = vector.extract_strided_slice %458 {offsets = [0, 0, 0], sizes = [2, 16, 32], strides = [1, 1, 1]} : vector<2x32x32xf32> to vector<2x16x32xf32>
    %c55_i32_154 = arith.constant 55 : i32
    %460 = tpu.dynamic_rotate %433 by %c55_i32_154 dim 0 : vector<64x32xf32>, i32 -> vector<64x32xf32>
    %461 = vector.shape_cast %460 : vector<64x32xf32> to vector<2x32x32xf32>
    %462 = vector.extract_strided_slice %461 {offsets = [0, 0, 0], sizes = [2, 16, 32], strides = [1, 1, 1]} : vector<2x32x32xf32> to vector<2x16x32xf32>
    %c54_i32_155 = arith.constant 54 : i32
    %463 = tpu.dynamic_rotate %433 by %c54_i32_155 dim 0 : vector<64x32xf32>, i32 -> vector<64x32xf32>
    %464 = vector.shape_cast %463 : vector<64x32xf32> to vector<2x32x32xf32>
    %465 = vector.extract_strided_slice %464 {offsets = [0, 0, 0], sizes = [2, 16, 32], strides = [1, 1, 1]} : vector<2x32x32xf32> to vector<2x16x32xf32>
    %c53_i32_156 = arith.constant 53 : i32
    %466 = tpu.dynamic_rotate %433 by %c53_i32_156 dim 0 : vector<64x32xf32>, i32 -> vector<64x32xf32>
    %467 = vector.shape_cast %466 : vector<64x32xf32> to vector<2x32x32xf32>
    %468 = vector.extract_strided_slice %467 {offsets = [0, 0, 0], sizes = [2, 16, 32], strides = [1, 1, 1]} : vector<2x32x32xf32> to vector<2x16x32xf32>
    %c52_i32_157 = arith.constant 52 : i32
    %469 = tpu.dynamic_rotate %433 by %c52_i32_157 dim 0 : vector<64x32xf32>, i32 -> vector<64x32xf32>
    %470 = vector.shape_cast %469 : vector<64x32xf32> to vector<2x32x32xf32>
    %471 = vector.extract_strided_slice %470 {offsets = [0, 0, 0], sizes = [2, 16, 32], strides = [1, 1, 1]} : vector<2x32x32xf32> to vector<2x16x32xf32>
    %472 = tpu.concatenate %435, %438, %441, %444, %447, %450, %453, %456, %459, %462, %465, %468, %471 in 2 : vector<2x16x32xf32>, vector<2x16x32xf32>, vector<2x16x32xf32>, vector<2x16x32xf32>, vector<2x16x32xf32>, vector<2x16x32xf32>, vector<2x16x32xf32>, vector<2x16x32xf32>, vector<2x16x32xf32>, vector<2x16x32xf32>, vector<2x16x32xf32>, vector<2x16x32xf32>, vector<2x16x32xf32> -> vector<2x16x416xf32>
    %473 = vector.shape_cast %472 : vector<2x16x416xf32> to vector<32x416xf32>
    %c8 = arith.constant 8 : index
    %c0_158 = arith.constant 0 : index
    %c0_159 = arith.constant 0 : index
    %474 = vector.load %arg4[%c8, %c0_158, %c0_159] : memref<10x416x32xf32, #tpu.memory_space<vmem>>, vector<1x416x32xf32>
    %475 = vector.shape_cast %474 : vector<1x416x32xf32> to vector<416x32xf32>
    %cst_160 = arith.constant dense<0.000000e+00> : vector<32x32xf32>
    %476 = tpu.matmul %473, %475, %cst_160 {dimension_numbers = #tpu.dot_dimension_numbers<[1], [0], [0], [1], [0, 0, 1, 1], [], []>} : vector<32x416xf32>, vector<416x32xf32>, vector<32x32xf32> -> vector<32x32xf32>
    %c8_161 = arith.constant 8 : index
    %c0_162 = arith.constant 0 : index
    %477 = vector.load %arg5[%c8_161, %c0_162] : memref<10x32xf32, #tpu.memory_space<vmem>>, vector<1x32xf32>
    %478 = vector.broadcast %477 : vector<1x32xf32> to vector<32x32xf32>
    %479 = arith.addf %476, %478 : vector<32x32xf32>
    %480 = vector.shape_cast %479 : vector<32x32xf32> to vector<2x16x32xf32>
    %cst_163 = arith.constant 0.000000e+00 : f32
    %481 = vector.broadcast %cst_163 : f32 to vector<2x16x32xf32>
    %482 = arith.maximumf %480, %481 : vector<2x16x32xf32>
    %483 = tpu.concatenate %8, %482, %9 in 1 : vector<2x6x32xf32>, vector<2x16x32xf32>, vector<2x10x32xf32> -> vector<2x32x32xf32>
    %484 = vector.shape_cast %483 : vector<2x32x32xf32> to vector<64x32xf32>
    %485 = vector.shape_cast %484 : vector<64x32xf32> to vector<2x32x32xf32>
    %486 = vector.extract_strided_slice %485 {offsets = [0, 0, 0], sizes = [2, 16, 32], strides = [1, 1, 1]} : vector<2x32x32xf32> to vector<2x16x32xf32>
    %c63_i32_164 = arith.constant 63 : i32
    %487 = tpu.dynamic_rotate %484 by %c63_i32_164 dim 0 : vector<64x32xf32>, i32 -> vector<64x32xf32>
    %488 = vector.shape_cast %487 : vector<64x32xf32> to vector<2x32x32xf32>
    %489 = vector.extract_strided_slice %488 {offsets = [0, 0, 0], sizes = [2, 16, 32], strides = [1, 1, 1]} : vector<2x32x32xf32> to vector<2x16x32xf32>
    %c62_i32_165 = arith.constant 62 : i32
    %490 = tpu.dynamic_rotate %484 by %c62_i32_165 dim 0 : vector<64x32xf32>, i32 -> vector<64x32xf32>
    %491 = vector.shape_cast %490 : vector<64x32xf32> to vector<2x32x32xf32>
    %492 = vector.extract_strided_slice %491 {offsets = [0, 0, 0], sizes = [2, 16, 32], strides = [1, 1, 1]} : vector<2x32x32xf32> to vector<2x16x32xf32>
    %c61_i32_166 = arith.constant 61 : i32
    %493 = tpu.dynamic_rotate %484 by %c61_i32_166 dim 0 : vector<64x32xf32>, i32 -> vector<64x32xf32>
    %494 = vector.shape_cast %493 : vector<64x32xf32> to vector<2x32x32xf32>
    %495 = vector.extract_strided_slice %494 {offsets = [0, 0, 0], sizes = [2, 16, 32], strides = [1, 1, 1]} : vector<2x32x32xf32> to vector<2x16x32xf32>
    %c60_i32_167 = arith.constant 60 : i32
    %496 = tpu.dynamic_rotate %484 by %c60_i32_167 dim 0 : vector<64x32xf32>, i32 -> vector<64x32xf32>
    %497 = vector.shape_cast %496 : vector<64x32xf32> to vector<2x32x32xf32>
    %498 = vector.extract_strided_slice %497 {offsets = [0, 0, 0], sizes = [2, 16, 32], strides = [1, 1, 1]} : vector<2x32x32xf32> to vector<2x16x32xf32>
    %c59_i32_168 = arith.constant 59 : i32
    %499 = tpu.dynamic_rotate %484 by %c59_i32_168 dim 0 : vector<64x32xf32>, i32 -> vector<64x32xf32>
    %500 = vector.shape_cast %499 : vector<64x32xf32> to vector<2x32x32xf32>
    %501 = vector.extract_strided_slice %500 {offsets = [0, 0, 0], sizes = [2, 16, 32], strides = [1, 1, 1]} : vector<2x32x32xf32> to vector<2x16x32xf32>
    %c58_i32_169 = arith.constant 58 : i32
    %502 = tpu.dynamic_rotate %484 by %c58_i32_169 dim 0 : vector<64x32xf32>, i32 -> vector<64x32xf32>
    %503 = vector.shape_cast %502 : vector<64x32xf32> to vector<2x32x32xf32>
    %504 = vector.extract_strided_slice %503 {offsets = [0, 0, 0], sizes = [2, 16, 32], strides = [1, 1, 1]} : vector<2x32x32xf32> to vector<2x16x32xf32>
    %c57_i32_170 = arith.constant 57 : i32
    %505 = tpu.dynamic_rotate %484 by %c57_i32_170 dim 0 : vector<64x32xf32>, i32 -> vector<64x32xf32>
    %506 = vector.shape_cast %505 : vector<64x32xf32> to vector<2x32x32xf32>
    %507 = vector.extract_strided_slice %506 {offsets = [0, 0, 0], sizes = [2, 16, 32], strides = [1, 1, 1]} : vector<2x32x32xf32> to vector<2x16x32xf32>
    %c56_i32_171 = arith.constant 56 : i32
    %508 = tpu.dynamic_rotate %484 by %c56_i32_171 dim 0 : vector<64x32xf32>, i32 -> vector<64x32xf32>
    %509 = vector.shape_cast %508 : vector<64x32xf32> to vector<2x32x32xf32>
    %510 = vector.extract_strided_slice %509 {offsets = [0, 0, 0], sizes = [2, 16, 32], strides = [1, 1, 1]} : vector<2x32x32xf32> to vector<2x16x32xf32>
    %c55_i32_172 = arith.constant 55 : i32
    %511 = tpu.dynamic_rotate %484 by %c55_i32_172 dim 0 : vector<64x32xf32>, i32 -> vector<64x32xf32>
    %512 = vector.shape_cast %511 : vector<64x32xf32> to vector<2x32x32xf32>
    %513 = vector.extract_strided_slice %512 {offsets = [0, 0, 0], sizes = [2, 16, 32], strides = [1, 1, 1]} : vector<2x32x32xf32> to vector<2x16x32xf32>
    %c54_i32_173 = arith.constant 54 : i32
    %514 = tpu.dynamic_rotate %484 by %c54_i32_173 dim 0 : vector<64x32xf32>, i32 -> vector<64x32xf32>
    %515 = vector.shape_cast %514 : vector<64x32xf32> to vector<2x32x32xf32>
    %516 = vector.extract_strided_slice %515 {offsets = [0, 0, 0], sizes = [2, 16, 32], strides = [1, 1, 1]} : vector<2x32x32xf32> to vector<2x16x32xf32>
    %c53_i32_174 = arith.constant 53 : i32
    %517 = tpu.dynamic_rotate %484 by %c53_i32_174 dim 0 : vector<64x32xf32>, i32 -> vector<64x32xf32>
    %518 = vector.shape_cast %517 : vector<64x32xf32> to vector<2x32x32xf32>
    %519 = vector.extract_strided_slice %518 {offsets = [0, 0, 0], sizes = [2, 16, 32], strides = [1, 1, 1]} : vector<2x32x32xf32> to vector<2x16x32xf32>
    %c52_i32_175 = arith.constant 52 : i32
    %520 = tpu.dynamic_rotate %484 by %c52_i32_175 dim 0 : vector<64x32xf32>, i32 -> vector<64x32xf32>
    %521 = vector.shape_cast %520 : vector<64x32xf32> to vector<2x32x32xf32>
    %522 = vector.extract_strided_slice %521 {offsets = [0, 0, 0], sizes = [2, 16, 32], strides = [1, 1, 1]} : vector<2x32x32xf32> to vector<2x16x32xf32>
    %523 = tpu.concatenate %486, %489, %492, %495, %498, %501, %504, %507, %510, %513, %516, %519, %522 in 2 : vector<2x16x32xf32>, vector<2x16x32xf32>, vector<2x16x32xf32>, vector<2x16x32xf32>, vector<2x16x32xf32>, vector<2x16x32xf32>, vector<2x16x32xf32>, vector<2x16x32xf32>, vector<2x16x32xf32>, vector<2x16x32xf32>, vector<2x16x32xf32>, vector<2x16x32xf32>, vector<2x16x32xf32> -> vector<2x16x416xf32>
    %524 = vector.shape_cast %523 : vector<2x16x416xf32> to vector<32x416xf32>
    %c9 = arith.constant 9 : index
    %c0_176 = arith.constant 0 : index
    %c0_177 = arith.constant 0 : index
    %525 = vector.load %arg4[%c9, %c0_176, %c0_177] : memref<10x416x32xf32, #tpu.memory_space<vmem>>, vector<1x416x32xf32>
    %526 = vector.shape_cast %525 : vector<1x416x32xf32> to vector<416x32xf32>
    %cst_178 = arith.constant dense<0.000000e+00> : vector<32x32xf32>
    %527 = tpu.matmul %524, %526, %cst_178 {dimension_numbers = #tpu.dot_dimension_numbers<[1], [0], [0], [1], [0, 0, 1, 1], [], []>} : vector<32x416xf32>, vector<416x32xf32>, vector<32x32xf32> -> vector<32x32xf32>
    %c9_179 = arith.constant 9 : index
    %c0_180 = arith.constant 0 : index
    %528 = vector.load %arg5[%c9_179, %c0_180] : memref<10x32xf32, #tpu.memory_space<vmem>>, vector<1x32xf32>
    %529 = vector.broadcast %528 : vector<1x32xf32> to vector<32x32xf32>
    %530 = arith.addf %527, %529 : vector<32x32xf32>
    %531 = vector.shape_cast %530 : vector<32x32xf32> to vector<2x16x32xf32>
    %cst_181 = arith.constant 3.000000e-01 : f32
    %532 = vector.broadcast %cst_181 : f32 to vector<2x16x32xf32>
    %533 = arith.mulf %532, %531 : vector<2x16x32xf32>
    %534 = arith.addf %429, %533 : vector<2x16x32xf32>
    %c0_182 = arith.constant 0 : index
    %c0_183 = arith.constant 0 : index
    %535 = vector.load %arg6[%c0_182, %c0_183] : memref<16x32xf32, #tpu.memory_space<vmem>>, vector<16x32xf32>
    %536 = vector.shape_cast %535 : vector<16x32xf32> to vector<1x16x32xf32>
    %537 = vector.broadcast %536 : vector<1x16x32xf32> to vector<2x16x32xf32>
    %538 = arith.mulf %534, %537 : vector<2x16x32xf32>
    %cst_184 = arith.constant dense<0.000000e+00> : vector<2x16xf32>
    %539 = vector.multi_reduction <add>, %538, %cst_184 [2] : vector<2x16x32xf32> to vector<2x16xf32>
    %540 = vector.shape_cast %539 : vector<2x16xf32> to vector<2x16x1xf32>
    %cst_185 = arith.constant dense<0.000000e+00> : vector<2x1xf32>
    %541 = vector.multi_reduction <add>, %540, %cst_185 [1] : vector<2x16x1xf32> to vector<2x1xf32>
    %542 = tpu.iota {dimensions = array<i32: 0>} : vector<2x2xi32>
    %543 = tpu.iota {dimensions = array<i32: 1>} : vector<2x2xi32>
    %544 = arith.cmpi eq, %542, %543 : vector<2x2xi32>
    %545 = arith.extui %544 : vector<2x2xi1> to vector<2x2xi32>
    %546 = arith.sitofp %545 : vector<2x2xi32> to vector<2x2xf32>
    %547 = vector.broadcast %541 : vector<2x1xf32> to vector<2x2xf32>
    %548 = arith.mulf %547, %546 : vector<2x2xf32>
    %cst_186 = arith.constant dense<0.000000e+00> : vector<2xf32>
    %549 = vector.multi_reduction <add>, %548, %cst_186 [0] : vector<2x2xf32> to vector<2xf32>
    %550 = vector.shape_cast %549 : vector<2xf32> to vector<1x2xf32>
    %c0_187 = arith.constant 0 : index
    %551 = memref.load %arg7[%c0_187] : memref<1xf32, #tpu.memory_space<smem>>
    %552 = vector.broadcast %551 : f32 to vector<1x2xf32>
    %553 = arith.addf %550, %552 : vector<1x2xf32>
    %c0_188 = arith.constant 0 : index
    %c0_189 = arith.constant 0 : index
    %554 = vector.load %arg8[%c0_188, %c0_189] : memref<1x2xf32, #tpu.memory_space<vmem>>, vector<1x2xf32>
    tpu.vector_store %arg8[%c0_188, %c0_189], %553 {strides = array<i32>} : memref<1x2xf32, #tpu.memory_space<vmem>>, vector<1x2xf32>,
    return
  }
  func.func @transform_0(%arg0: i32) -> (i32, i32, i32) {
    %c0_i32 = arith.constant 0 : i32
    %c0_i32_0 = arith.constant 0 : i32
    %c0_i32_1 = arith.constant 0 : i32
    return %arg0, %c0_i32, %c0_i32_0 : i32, i32, i32
  }
  func.func @transform_1(%arg0: i32) -> (i32, i32) {
    %c0_i32 = arith.constant 0 : i32
    %c0_i32_0 = arith.constant 0 : i32
    %c0_i32_1 = arith.constant 0 : i32
    return %c0_i32, %c0_i32_0 : i32, i32
  }
  func.func @transform_2(%arg0: i32) -> (i32, i32) {
    %c0_i32 = arith.constant 0 : i32
    %c0_i32_0 = arith.constant 0 : i32
    %c0_i32_1 = arith.constant 0 : i32
    return %c0_i32, %c0_i32_0 : i32, i32
  }
  func.func @transform_3(%arg0: i32) -> (i32, i32, i32) {
    %c0_i32 = arith.constant 0 : i32
    %c0_i32_0 = arith.constant 0 : i32
    %c0_i32_1 = arith.constant 0 : i32
    %c0_i32_2 = arith.constant 0 : i32
    return %c0_i32, %c0_i32_0, %c0_i32_1 : i32, i32, i32
  }
  func.func @transform_4(%arg0: i32) -> (i32, i32) {
    %c0_i32 = arith.constant 0 : i32
    %c0_i32_0 = arith.constant 0 : i32
    %c0_i32_1 = arith.constant 0 : i32
    return %c0_i32, %c0_i32_0 : i32, i32
  }
  func.func @transform_5(%arg0: i32) -> (i32, i32) {
    %c0_i32 = arith.constant 0 : i32
    %c0_i32_0 = arith.constant 0 : i32
    %c0_i32_1 = arith.constant 0 : i32
    return %c0_i32, %c0_i32_0 : i32, i32
  }
  func.func @transform_6(%arg0: i32) -> i32 {
    %c0_i32 = arith.constant 0 : i32
    %c0_i32_0 = arith.constant 0 : i32
    return %c0_i32 : i32
  }
  func.func @transform_7(%arg0: i32) -> (i32, i32) {
    %c0_i32 = arith.constant 0 : i32
    %c0_i32_0 = arith.constant 0 : i32
    return %c0_i32, %arg0 : i32, i32
  }
}

</mosaic_0001>

<llo_original>
// kernel: tpu_custom_call.1
$region0: #{tpu_custom_call.1}
  #allocation0 [shape = 'u32[]', space=smem, size = 0x4, offset = 0x4, fixed_abs, tag = 'smem constant byte address 0x4 - core index']
  #allocation1 [shape = 'u32[144,128]{1,0:T(1,128)}', space=vmem, size = 0x12000, scoped, tag = 'internal scratch']
  #allocation2 [shape = 'f32[1]{0:T(128)S(6)}', space=smem, size = 0x200, scoped, tag = 'scoped memory for tpu_custom_call.1']
  %s0 = inlined_call_operand.vmem [shape: f32[2,16,4], index: 0, kind: input, shape index: {}]
  %s1 = inlined_call_operand.vmem [shape: f32[4,32], index: 1, kind: input, shape index: {}]
  %s2 = inlined_call_operand.vmem [shape: f32[1,32], index: 2, kind: input, shape index: {}]
  %s3 = inlined_call_operand.vmem [shape: f32[10,416,32], index: 3, kind: input, shape index: {}]
  %s4 = inlined_call_operand.vmem [shape: f32[10,32], index: 4, kind: input, shape index: {}]
  %s5 = inlined_call_operand.vmem [shape: f32[16,32], index: 5, kind: input, shape index: {}]
  %s6 = inlined_call_operand.<no memory space> [shape: f32[1], index: 6, kind: input, shape index: {}]
  %s7 = inlined_call_operand.hbm [shape: f32[1,2], index: 7, kind: output, shape index: {}]
  %s8 = sld [smem:[#allocation0]]
  $region38: #{tpu_custom_call.1} parent=0
    _
  %s10 = ssub.s32 1, %s8
  %s11 = scalar_select 0, %s10, %s8
  %12 = sst [smem:[#allocation2]] %s6
  $region1: #{tpu_custom_call.1} parent=0
    #allocation3 [shape = 'u8[512]{0}', space=vmem, size = 0x400, scoped, tag = 'output window, operand 0, single buffered']
    #allocation4 [shape = 's32[1]{0}', space=sflag, size = 0x4, scoped, tag = 'scoped memory for tpu_custom_call.1']
    %13 = vsyncpa [#allocation4], 0
    // Predicated region
    $region2: #{tpu_custom_call.1} parent=1 // pred_check
      _
    $region3: #{tpu_custom_call.1} parent=1 // pred_check_branch
      %15 = sbr.rel (0) target = $region5
    $region4: #{tpu_custom_call.1} parent=1 // pred_region
      _
    $region5: #{tpu_custom_call.1} parent=1 // pred_fallthru
      _
    // Predicated region
    $region6: #{tpu_custom_call.1} parent=1 // pred_check
      _
    $region7: #{tpu_custom_call.1} parent=1 // pred_check_branch
      %17 = sbr.rel (0) target = $region9
    $region8: #{tpu_custom_call.1} parent=1 // pred_region
      _
    $region9: #{tpu_custom_call.1} parent=1 // pred_fallthru
      _
    // Predicated region
    $region10: #{tpu_custom_call.1} parent=1 // pred_check
      _
    $region11: #{tpu_custom_call.1} parent=1 // pred_check_branch
      %19 = sbr.rel (0) target = $region13
    $region12: #{tpu_custom_call.1} parent=1 // pred_region
      _
    $region13: #{tpu_custom_call.1} parent=1 // pred_fallthru
      _
    // Predicated region
    $region14: #{tpu_custom_call.1} parent=1 // pred_check
      _
    $region15: #{tpu_custom_call.1} parent=1 // pred_check_branch
      %21 = sbr.rel (0) target = $region17
    $region16: #{tpu_custom_call.1} parent=1 // pred_region
      _
    $region17: #{tpu_custom_call.1} parent=1 // pred_fallthru
      _
    // Predicated region
    $region18: #{tpu_custom_call.1} parent=1 // pred_check
      _
    $region19: #{tpu_custom_call.1} parent=1 // pred_check_branch
      %23 = sbr.rel (0) target = $region21
    $region20: #{tpu_custom_call.1} parent=1 // pred_region
      _
    $region21: #{tpu_custom_call.1} parent=1 // pred_fallthru
      _
    // Predicated region
    $region22: #{tpu_custom_call.1} parent=1 // pred_check
      _
    $region23: #{tpu_custom_call.1} parent=1 // pred_check_branch
      %25 = sbr.rel (0) target = $region25
    $region24: #{tpu_custom_call.1} parent=1 // pred_region
      _
    $region25: #{tpu_custom_call.1} parent=1 // pred_fallthru
      _
    // Predicated region
    $region26: #{tpu_custom_call.1} parent=1 // pred_check
      _
    $region27: #{tpu_custom_call.1} parent=1 // pred_check_branch
      %27 = sbr.rel (0) target = $region29
    $region28: #{tpu_custom_call.1} parent=1 // pred_region
      _
    $region29: #{tpu_custom_call.1} parent=1 // pred_fallthru
      _
    %v28 = vld [vmem:[%s0] sm:$0xff]
    %v29 = vld [vmem:[%s0 + $0x8] sm:$0xff]
    %v30 = vld [vmem:[%s0 + $0x10] sm:$0xff]
    %v31 = vld [vmem:[%s0 + $0x18] sm:$0xff]
    %v32 = vld [vmem:[%s1] sm:$0xf]
    %v33 = vld [vmem:[%s2] sm:$0x1]
    %v35 = vlaneseq
    %v36 = vshrl.u32 %v35, 7
    %v37 = vsub.s32 0, %v36
    %v38 = vrot.slane %v33, %v37
    %vm40 = vcmask 31744
    %v42 = vsel %vm40, %v28, 0
    %v45 = vsel %vm40, %v29, 0
    %v48 = vsel %vm40, %v30, 0
    %v51 = vsel %vm40, %v31, 0
    %vm53 = vcmask 1043456
    %v55 = vsel %vm53, %v32, 0
    %57 = vmatprep.subr.mxu0 0.0
    %58 = vmatpush1.msra.mxu0 0.0
    %59 = vmatprep.subr.mxu0 0.0
    %60 = vmatpush1.msra.mxu0 0.0
    %61 = vmatprep.subr.mxu0 0.0
    %62 = vmatpush1.msra.mxu0 0.0
    %63 = vmatprep.subr.mxu0 0.0
    %64 = vmatpush1.msra.mxu0 0.0
    %65 = vmatprep.subr.mxu0 0.0
    %66 = vmatpush1.msra.mxu0 0.0
    %67 = vmatprep.subr.mxu0 0.0
    %68 = vmatpush1.msra.mxu0 0.0
    %69 = vmatprep.subr.mxu0 0.0
    %70 = vmatpush1.msra.mxu0 0.0
    %71 = vmatprep.subr.mxu0 0.0
    %72 = vmatpush1.msra.mxu0 0.0
    %73 = vmatprep.subr.mxu0 0.0
    %74 = vmatpush1.msra.mxu0 0.0
    %75 = vmatprep.subr.mxu0 0.0
    %76 = vmatpush1.msra.mxu0 0.0
    %77 = vmatprep.subr.mxu0 0.0
    %78 = vmatpush1.msra.mxu0 0.0
    %79 = vmatprep.subr.mxu0 0.0
    %80 = vmatpush1.msra.mxu0 0.0
    %81 = vmatprep.subr.mxu0 0.0
    %82 = vmatpush1.msra.mxu0 0.0
    %83 = vmatprep.subr.mxu0 0.0
    %84 = vmatpush1.msra.mxu0 0.0
    %85 = vmatprep.subr.mxu0 0.0
    %86 = vmatpush1.msra.mxu0 0.0
    %87 = vmatprep.subr.mxu0 0.0
    %88 = vmatpush1.msra.mxu0 %v55
    %89 = vmatprep.subr.mxu0 0.0
    %90 = vmatpush2.msra.mxu0 0.0
    %91 = vmatprep.subr.mxu0 0.0
    %92 = vmatpush2.msra.mxu0 0.0
    %93 = vmatprep.subr.mxu0 0.0
    %94 = vmatpush2.msra.mxu0 0.0
    %95 = vmatprep.subr.mxu0 0.0
    %96 = vmatpush2.msra.mxu0 0.0
    %97 = vmatprep.subr.mxu0 0.0
    %98 = vmatpush2.msra.mxu0 0.0
    %99 = vmatprep.subr.mxu0 0.0
    %100 = vmatpush2.msra.mxu0 0.0
    %101 = vmatprep.subr.mxu0 0.0
    %102 = vmatpush2.msra.mxu0 0.0
    %103 = vmatprep.subr.mxu0 0.0
    %104 = vmatpush2.msra.mxu0 0.0
    %105 = vmatprep.subr.mxu0 0.0
    %106 = vmatpush2.msra.mxu0 0.0
    %107 = vmatprep.subr.mxu0 0.0
    %108 = vmatpush2.msra.mxu0 0.0
    %109 = vmatprep.subr.mxu0 0.0
    %110 = vmatpush2.msra.mxu0 0.0
    %111 = vmatprep.subr.mxu0 0.0
    %112 = vmatpush2.msra.mxu0 0.0
    %113 = vmatprep.subr.mxu0 0.0
    %114 = vmatpush2.msra.mxu0 0.0
    %115 = vmatprep.subr.mxu0 0.0
    %116 = vmatpush2.msra.mxu0 0.0
    %117 = vmatprep.subr.mxu0 0.0
    %118 = vmatpush2.msra.mxu0 0.0
    %119 = vmatprep.subr.mxu0 0.0
    %120 = vmatpush2.msra.mxu0 0.0
    %121 = vmatprep.mubr.f32.mxu0 0.0
    %122 = vmatmul.mubr.f32.gmra.mxu0 %v42
    %v123 = vpop.f32.mrf.mxu0
    %v124 = vadd.f32 %v38, %v123
    %v125 = vpop.f32.mrf.mxu0
    %126 = vmatprep.mubr.f32.mxu0 0.0
    %127 = vmatmul.mubr.f32.gmra.mxu0 %v45
    %v128 = vpop.f32.mrf.mxu0
    %v129 = vadd.f32 %v38, %v128
    %v130 = vpop.f32.mrf.mxu0
    %131 = vmatprep.mubr.f32.mxu0 0.0
    %132 = vmatmul.mubr.f32.gmra.mxu0 %v48
    %v133 = vpop.f32.mrf.mxu0
    %v134 = vadd.f32 %v38, %v133
    %v135 = vpop.f32.mrf.mxu0
    %136 = vmatprep.mubr.f32.mxu0 0.0
    %137 = vmatmul.mubr.f32.gmra.mxu0 %v51
    %v138 = vpop.f32.mrf.mxu0
    %v139 = vadd.f32 %v38, %v138
    %v140 = vpop.f32.mrf.mxu0
    %141 = vdwg.mxu0
    %v142 = vmax.f32 %v124, 0.0
    %v143 = vmax.f32 %v129, 0.0
    %v144 = vmax.f32 %v134, 0.0
    %v145 = vmax.f32 %v139, 0.0
    %vm150 = vcmask 1045504
    %v151 = vrot.slane %v142, 2
    %v152 = vrot.slane %v143, 2
    %v153 = vsel %vm150, %v151, %v152
    %v154 = vrot.slane %v144, 2
    %v155 = vrot.slane %v145, 2
    %v156 = vsel %vm150, %v154, %v155
    %v163 = vsel %vm150, 0.0, %v151
    %v164 = vsel %vm150, 0.0, %v154
    %v165 = vsel %vm150, %v152, 0.0
    %v166 = vsel %vm150, %v155, 0.0
    %v167 = vrot.slane %v163, 1
    %v168 = vrot.slane %v153, 1
    %v169 = vrot.slane %v165, 1
    %v170 = vrot.slane %v164, 1
    %v171 = vrot.slane %v156, 1
    %v172 = vrot.slane %v166, 1
    %v173 = vlaneseq
    %v174 = vshrl.u32 %v173, 7
    %vm175 = vcmp.lt.s32.totalorder %v174, 7
    %v176 = vsel %vm175, %v171, %v172
    %v177 = vsel %vm175, %v170, %v171
    %v178 = vsel %vm175, %v168, %v169
    %v179 = vsel %vm175, %v167, %v168
    %v180 = vrot.slane %v163, 2
    %v181 = vrot.slane %v153, 2
    %v182 = vrot.slane %v165, 2
    %v183 = vrot.slane %v164, 2
    %v184 = vrot.slane %v156, 2
    %v185 = vrot.slane %v166, 2
    %vm186 = vcmp.lt.s32.totalorder %v174, 6
    %v187 = vsel %vm186, %v184, %v185
    %v188 = vsel %vm186, %v183, %v184
    %v189 = vsel %vm186, %v181, %v182
    %v190 = vsel %vm186, %v180, %v181
    %v191 = vrot.slane %v163, 3
    %v192 = vrot.slane %v153, 3
    %v193 = vrot.slane %v165, 3
    %v194 = vrot.slane %v164, 3
    %v195 = vrot.slane %v156, 3
    %v196 = vrot.slane %v166, 3
    %vm197 = vcmp.lt.s32.totalorder %v174, 5
    %v198 = vsel %vm197, %v195, %v196
    %v199 = vsel %vm197, %v194, %v195
    %v200 = vsel %vm197, %v192, %v193
    %v201 = vsel %vm197, %v191, %v192
    %v202 = vrot.slane %v163, 4
    %v203 = vrot.slane %v153, 4
    %v204 = vrot.slane %v165, 4
    %v205 = vrot.slane %v164, 4
    %v206 = vrot.slane %v156, 4
    %v207 = vrot.slane %v166, 4
    %vm208 = vcmp.lt.s32.totalorder %v174, 4
    %v209 = vsel %vm208, %v206, %v207
    %v210 = vsel %vm208, %v205, %v206
    %v211 = vsel %vm208, %v203, %v204
    %v212 = vsel %vm208, %v202, %v203
    %v213 = vrot.slane %v163, 5
    %v214 = vrot.slane %v153, 5
    %v215 = vrot.slane %v165, 5
    %v216 = vrot.slane %v164, 5
    %v217 = vrot.slane %v156, 5
    %v218 = vrot.slane %v166, 5
    %vm219 = vcmp.lt.s32.totalorder %v174, 3
    %v220 = vsel %vm219, %v217, %v218
    %v221 = vsel %vm219, %v216, %v217
    %v222 = vsel %vm219, %v214, %v215
    %v223 = vsel %vm219, %v213, %v214
    %v224 = vrot.slane %v163, 6
    %v225 = vrot.slane %v153, 6
    %v226 = vrot.slane %v165, 6
    %v227 = vrot.slane %v164, 6
    %v228 = vrot.slane %v156, 6
    %v229 = vrot.slane %v166, 6
    %vm230 = vcmp.lt.s32.totalorder %v174, 2
    %v231 = vsel %vm230, %v228, %v229
    %v232 = vsel %vm230, %v227, %v228
    %v233 = vsel %vm230, %v225, %v226
    %v234 = vsel %vm230, %v224, %v225
    %v235 = vrot.slane %v163, 7
    %v236 = vrot.slane %v153, 7
    %v237 = vrot.slane %v165, 7
    %v238 = vrot.slane %v164, 7
    %v239 = vrot.slane %v156, 7
    %v240 = vrot.slane %v166, 7
    %vm241 = vcmp.lt.s32.totalorder %v174, 1
    %v242 = vsel %vm241, %v239, %v240
    %v243 = vsel %vm241, %v238, %v239
    %v244 = vsel %vm241, %v236, %v237
    %v245 = vsel %vm241, %v235, %v236
    %v246 = vsel %vm175, %v172, 0.0
    %v247 = vsel %vm175, %v169, 0.0
    %v248 = vsel %vm186, %v185, 0.0
    %v249 = vsel %vm186, %v182, 0.0
    %v250 = vsel %vm197, %v196, 0.0
    %v251 = vsel %vm197, %v193, 0.0
    %v252 = vsel %vm208, %v207, 0.0
    %v253 = vsel %vm208, %v204, 0.0
    %258 = vrot.lane.b32.xlu0 %v179, 32
    %v259 = vpop.permute.xlu0 %258
    %260 = vrot.lane.b32.xlu0 %v178, 32
    %v261 = vpop.permute.xlu0 %260
    %262 = vrot.lane.b32.xlu0 %v177, 32
    %v263 = vpop.permute.xlu0 %262
    %264 = vrot.lane.b32.xlu0 %v176, 32
    %v265 = vpop.permute.xlu0 %264
    %274 = vrot.lane.b32.xlu0 %v190, 64
    %v275 = vpop.permute.xlu0 %274
    %276 = vrot.lane.b32.xlu0 %v189, 64
    %v277 = vpop.permute.xlu0 %276
    %278 = vrot.lane.b32.xlu0 %v188, 64
    %v279 = vpop.permute.xlu0 %278
    %280 = vrot.lane.b32.xlu0 %v187, 64
    %v281 = vpop.permute.xlu0 %280
    %290 = vrot.lane.b32.xlu0 %v201, 96
    %v291 = vpop.permute.xlu0 %290
    %292 = vrot.lane.b32.xlu0 %v200, 96
    %v293 = vpop.permute.xlu0 %292
    %294 = vrot.lane.b32.xlu0 %v199, 96
    %v295 = vpop.permute.xlu0 %294
    %296 = vrot.lane.b32.xlu0 %v198, 96
    %v297 = vpop.permute.xlu0 %296
    %306 = vrot.lane.b32.xlu0 %v223, 32
    %v307 = vpop.permute.xlu0 %306
    %308 = vrot.lane.b32.xlu0 %v222, 32
    %v309 = vpop.permute.xlu0 %308
    %310 = vrot.lane.b32.xlu0 %v221, 32
    %v311 = vpop.permute.xlu0 %310
    %312 = vrot.lane.b32.xlu0 %v220, 32
    %v313 = vpop.permute.xlu0 %312
    %322 = vrot.lane.b32.xlu0 %v234, 64
    %v323 = vpop.permute.xlu0 %322
    %324 = vrot.lane.b32.xlu0 %v233, 64
    %v325 = vpop.permute.xlu0 %324
    %326 = vrot.lane.b32.xlu0 %v232, 64
    %v327 = vpop.permute.xlu0 %326
    %328 = vrot.lane.b32.xlu0 %v231, 64
    %v329 = vpop.permute.xlu0 %328
    %338 = vrot.lane.b32.xlu0 %v245, 96
    %v339 = vpop.permute.xlu0 %338
    %340 = vrot.lane.b32.xlu0 %v244, 96
    %v341 = vpop.permute.xlu0 %340
    %342 = vrot.lane.b32.xlu0 %v243, 96
    %v343 = vpop.permute.xlu0 %342
    %344 = vrot.lane.b32.xlu0 %v242, 96
    %v345 = vpop.permute.xlu0 %344
    %352 = vrot.lane.b32.xlu0 %v247, 32
    %v353 = vpop.permute.xlu0 %352
    %354 = vrot.lane.b32.xlu0 %v246, 32
    %v355 = vpop.permute.xlu0 %354
    %360 = vrot.lane.b32.xlu0 %v249, 64
    %v361 = vpop.permute.xlu0 %360
    %362 = vrot.lane.b32.xlu0 %v248, 64
    %v363 = vpop.permute.xlu0 %362
    %368 = vrot.lane.b32.xlu0 %v251, 96
    %v369 = vpop.permute.xlu0 %368
    %370 = vrot.lane.b32.xlu0 %v250, 96
    %v371 = vpop.permute.xlu0 %370
    %vm374 = vcmask 261120
    %v375 = vsel %vm374, %v163, %v259
    %v376 = vsel %vm374, %v153, %v261
    %v377 = vsel %vm374, %v164, %v263
    %v378 = vsel %vm374, %v156, %v265
    %vm379 = vcmask 523264
    %v380 = vsel %vm379, %v375, %v275
    %v381 = vsel %vm379, %v376, %v277
    %v382 = vsel %vm379, %v377, %v279
    %v383 = vsel %vm379, %v378, %v281
    %vm384 = vcmask 785408
    %v385 = vsel %vm384, %v380, %v291
    %v386 = vsel %vm384, %v381, %v293
    %v387 = vsel %vm384, %v382, %v295
    %v388 = vsel %vm384, %v383, %v297
    %v389 = vsel %vm374, %v212, %v307
    %v390 = vsel %vm374, %v211, %v309
    %v391 = vsel %vm374, %v210, %v311
    %v392 = vsel %vm374, %v209, %v313
    %v393 = vsel %vm379, %v389, %v323
    %v394 = vsel %vm379, %v390, %v325
    %v395 = vsel %vm379, %v391, %v327
    %v396 = vsel %vm379, %v392, %v329
    %v397 = vsel %vm384, %v393, %v339
    %v398 = vsel %vm384, %v394, %v341
    %v399 = vsel %vm384, %v395, %v343
    %v400 = vsel %vm384, %v396, %v345
    %v401 = vsel %vm374, %v165, %v353
    %v402 = vsel %vm374, %v166, %v355
    %v403 = vsel %vm379, %v401, %v361
    %v404 = vsel %vm379, %v402, %v363
    %v405 = vsel %vm384, %v403, %v369
    %v406 = vsel %vm384, %v404, %v371
    %v407 = vld [vmem:[%s3] sm:$0xff]
    %v408 = vld [vmem:[%s3 + $0x8] sm:$0xff]
    %v409 = vld [vmem:[%s3 + $0x10] sm:$0xff]
    %v410 = vld [vmem:[%s3 + $0x18] sm:$0xff]
    %v411 = vld [vmem:[%s3 + $0x20] sm:$0xff]
    %v412 = vld [vmem:[%s3 + $0x28] sm:$0xff]
    %v413 = vld [vmem:[%s3 + $0x30] sm:$0xff]
    %v414 = vld [vmem:[%s3 + $0x38] sm:$0xff]
    %v415 = vld [vmem:[%s3 + $0x40] sm:$0xff]
    %v416 = vld [vmem:[%s3 + $0x48] sm:$0xff]
    %v417 = vld [vmem:[%s3 + $0x50] sm:$0xff]
    %v418 = vld [vmem:[%s3 + $0x58] sm:$0xff]
    %v419 = vld [vmem:[%s3 + $0x60] sm:$0xff]
    %v420 = vld [vmem:[%s3 + $0x68] sm:$0xff]
    %v421 = vld [vmem:[%s3 + $0x70] sm:$0xff]
    %v422 = vld [vmem:[%s3 + $0x78] sm:$0xff]
    %v423 = vld [vmem:[%s3 + $0x80] sm:$0xff]
    %v424 = vld [vmem:[%s3 + $0x88] sm:$0xff]
    %v425 = vld [vmem:[%s3 + $0x90] sm:$0xff]
    %v426 = vld [vmem:[%s3 + $0x98] sm:$0xff]
    %v427 = vld [vmem:[%s3 + $0xa0] sm:$0xff]
    %v428 = vld [vmem:[%s3 + $0xa8] sm:$0xff]
    %v429 = vld [vmem:[%s3 + $0xb0] sm:$0xff]
    %v430 = vld [vmem:[%s3 + $0xb8] sm:$0xff]
    %v431 = vld [vmem:[%s3 + $0xc0] sm:$0xff]
    %v432 = vld [vmem:[%s3 + $0xc8] sm:$0xff]
    %v433 = vld [vmem:[%s3 + $0xd0] sm:$0xff]
    %v434 = vld [vmem:[%s3 + $0xd8] sm:$0xff]
    %v435 = vld [vmem:[%s3 + $0xe0] sm:$0xff]
    %v436 = vld [vmem:[%s3 + $0xe8] sm:$0xff]
    %v437 = vld [vmem:[%s3 + $0xf0] sm:$0xff]
    %v438 = vld [vmem:[%s3 + $0xf8] sm:$0xff]
    %v439 = vld [vmem:[%s3 + $0x100] sm:$0xff]
    %v440 = vld [vmem:[%s3 + $0x108] sm:$0xff]
    %v441 = vld [vmem:[%s3 + $0x110] sm:$0xff]
    %v442 = vld [vmem:[%s3 + $0x118] sm:$0xff]
    %v443 = vld [vmem:[%s3 + $0x120] sm:$0xff]
    %v444 = vld [vmem:[%s3 + $0x128] sm:$0xff]
    %v445 = vld [vmem:[%s3 + $0x130] sm:$0xff]
    %v446 = vld [vmem:[%s3 + $0x138] sm:$0xff]
    %v447 = vld [vmem:[%s3 + $0x140] sm:$0xff]
    %v448 = vld [vmem:[%s3 + $0x148] sm:$0xff]
    %v449 = vld [vmem:[%s3 + $0x150] sm:$0xff]
    %v450 = vld [vmem:[%s3 + $0x158] sm:$0xff]
    %v451 = vld [vmem:[%s3 + $0x160] sm:$0xff]
    %v452 = vld [vmem:[%s3 + $0x168] sm:$0xff]
    %v453 = vld [vmem:[%s3 + $0x170] sm:$0xff]
    %v454 = vld [vmem:[%s3 + $0x178] sm:$0xff]
    %v455 = vld [vmem:[%s3 + $0x180] sm:$0xff]
    %v456 = vld [vmem:[%s3 + $0x188] sm:$0xff]
    %v457 = vld [vmem:[%s3 + $0x190] sm:$0xff]
    %v458 = vld [vmem:[%s3 + $0x198] sm:$0xff]
    %v459 = vld [vmem:[%s4] sm:$0x1]
    %v460 = vlaneseq
    %v461 = vshrl.u32 %v460, 7
    %v462 = vsub.s32 0, %v461
    %v463 = vrot.slane %v459, %v462
    %v465 = vsel %vm374, %v211, 0
    %v468 = vsel %vm374, %v253, 0
    %v471 = vsel %vm374, %v209, 0
    %v474 = vsel %vm374, %v252, 0
    %476 = vmatprep.subr.mxu0 0.0
    %477 = vmatpush1.msra.mxu0 %v422
    %478 = vmatprep.subr.mxu0 0.0
    %479 = vmatpush1.msra.mxu0 %v421
    %480 = vmatprep.subr.mxu0 0.0
    %481 = vmatpush1.msra.mxu0 %v420
    %482 = vmatprep.subr.mxu0 0.0
    %483 = vmatpush1.msra.mxu0 %v419
    %484 = vmatprep.subr.mxu0 0.0
    %485 = vmatpush1.msra.mxu0 %v418
    %486 = vmatprep.subr.mxu0 0.0
    %487 = vmatpush1.msra.mxu0 %v417
    %488 = vmatprep.subr.mxu0 0.0
    %489 = vmatpush1.msra.mxu0 %v416
    %490 = vmatprep.subr.mxu0 0.0
    %491 = vmatpush1.msra.mxu0 %v415
    %492 = vmatprep.subr.mxu0 0.0
    %493 = vmatpush1.msra.mxu0 %v414
    %494 = vmatprep.subr.mxu0 0.0
    %495 = vmatpush1.msra.mxu0 %v413
    %496 = vmatprep.subr.mxu0 0.0
    %497 = vmatpush1.msra.mxu0 %v412
    %498 = vmatprep.subr.mxu0 0.0
    %499 = vmatpush1.msra.mxu0 %v411
    %500 = vmatprep.subr.mxu0 0.0
    %501 = vmatpush1.msra.mxu0 %v410
    %502 = vmatprep.subr.mxu0 0.0
    %503 = vmatpush1.msra.mxu0 %v409
    %504 = vmatprep.subr.mxu0 0.0
    %505 = vmatpush1.msra.mxu0 %v408
    %506 = vmatprep.subr.mxu0 0.0
    %507 = vmatpush1.msra.mxu0 %v407
    %508 = vmatprep.subr.mxu0 0.0
    %509 = vmatpush2.msra.mxu0 %v438
    %510 = vmatprep.subr.mxu0 0.0
    %511 = vmatpush2.msra.mxu0 %v437
    %512 = vmatprep.subr.mxu0 0.0
    %513 = vmatpush2.msra.mxu0 %v436
    %514 = vmatprep.subr.mxu0 0.0
    %515 = vmatpush2.msra.mxu0 %v435
    %516 = vmatprep.subr.mxu0 0.0
    %517 = vmatpush2.msra.mxu0 %v434
    %518 = vmatprep.subr.mxu0 0.0
    %519 = vmatpush2.msra.mxu0 %v433
    %520 = vmatprep.subr.mxu0 0.0
    %521 = vmatpush2.msra.mxu0 %v432
    %522 = vmatprep.subr.mxu0 0.0
    %523 = vmatpush2.msra.mxu0 %v431
    %524 = vmatprep.subr.mxu0 0.0
    %525 = vmatpush2.msra.mxu0 %v430
    %526 = vmatprep.subr.mxu0 0.0
    %527 = vmatpush2.msra.mxu0 %v429
    %528 = vmatprep.subr.mxu0 0.0
    %529 = vmatpush2.msra.mxu0 %v428
    %530 = vmatprep.subr.mxu0 0.0
    %531 = vmatpush2.msra.mxu0 %v427
    %532 = vmatprep.subr.mxu0 0.0
    %533 = vmatpush2.msra.mxu0 %v426
    %534 = vmatprep.subr.mxu0 0.0
    %535 = vmatpush2.msra.mxu0 %v425
    %536 = vmatprep.subr.mxu0 0.0
    %537 = vmatpush2.msra.mxu0 %v424
    %538 = vmatprep.subr.mxu0 0.0
    %539 = vmatpush2.msra.mxu0 %v423
    %540 = vmatprep.mubr.f32.mxu0 %v397
    %541 = vmatmul.mubr.f32.gmra.mxu0 %v385
    %v542 = vpop.f32.mrf.mxu0
    %v543 = vadd.f32 %v463, %v542
    %v544 = vpop.f32.mrf.mxu0
    %545 = vmatprep.mubr.f32.mxu0 %v398
    %546 = vmatmul.mubr.f32.gmra.mxu0 %v386
    %v547 = vpop.f32.mrf.mxu0
    %v548 = vadd.f32 %v463, %v547
    %v549 = vpop.f32.mrf.mxu0
    %550 = vmatprep.mubr.f32.mxu0 %v399
    %551 = vmatmul.mubr.f32.gmra.mxu0 %v387
    %v552 = vpop.f32.mrf.mxu0
    %v553 = vadd.f32 %v463, %v552
    %v554 = vpop.f32.mrf.mxu0
    %555 = vmatprep.mubr.f32.mxu0 %v400
    %556 = vmatmul.mubr.f32.gmra.mxu0 %v388
    %v557 = vpop.f32.mrf.mxu0
    %v558 = vadd.f32 %v463, %v557
    %v559 = vpop.f32.mrf.mxu0
    %560 = vdwg.mxu0
    %561 = vmatprep.subr.mxu0 0.0
    %562 = vmatpush1.msra.mxu0 %v454
    %563 = vmatprep.subr.mxu0 0.0
    %564 = vmatpush1.msra.mxu0 %v453
    %565 = vmatprep.subr.mxu0 0.0
    %566 = vmatpush1.msra.mxu0 %v452
    %567 = vmatprep.subr.mxu0 0.0
    %568 = vmatpush1.msra.mxu0 %v451
    %569 = vmatprep.subr.mxu0 0.0
    %570 = vmatpush1.msra.mxu0 %v450
    %571 = vmatprep.subr.mxu0 0.0
    %572 = vmatpush1.msra.mxu0 %v449
    %573 = vmatprep.subr.mxu0 0.0
    %574 = vmatpush1.msra.mxu0 %v448
    %575 = vmatprep.subr.mxu0 0.0
    %576 = vmatpush1.msra.mxu0 %v447
    %577 = vmatprep.subr.mxu0 0.0
    %578 = vmatpush1.msra.mxu0 %v446
    %579 = vmatprep.subr.mxu0 0.0
    %580 = vmatpush1.msra.mxu0 %v445
    %581 = vmatprep.subr.mxu0 0.0
    %582 = vmatpush1.msra.mxu0 %v444
    %583 = vmatprep.subr.mxu0 0.0
    %584 = vmatpush1.msra.mxu0 %v443
    %585 = vmatprep.subr.mxu0 0.0
    %586 = vmatpush1.msra.mxu0 %v442
    %587 = vmatprep.subr.mxu0 0.0
    %588 = vmatpush1.msra.mxu0 %v441
    %589 = vmatprep.subr.mxu0 0.0
    %590 = vmatpush1.msra.mxu0 %v440
    %591 = vmatprep.subr.mxu0 0.0
    %592 = vmatpush1.msra.mxu0 %v439
    %593 = vmatprep.subr.mxu0 0.0
    %594 = vmatpush2.msra.mxu0 0.0
    %595 = vmatprep.subr.mxu0 0.0
    %596 = vmatpush2.msra.mxu0 0.0
    %597 = vmatprep.subr.mxu0 0.0
    %598 = vmatpush2.msra.mxu0 0.0
    %599 = vmatprep.subr.mxu0 0.0
    %600 = vmatpush2.msra.mxu0 0.0
    %601 = vmatprep.subr.mxu0 0.0
    %602 = vmatpush2.msra.mxu0 0.0
    %603 = vmatprep.subr.mxu0 0.0
    %604 = vmatpush2.msra.mxu0 0.0
    %605 = vmatprep.subr.mxu0 0.0
    %606 = vmatpush2.msra.mxu0 0.0
    %607 = vmatprep.subr.mxu0 0.0
    %608 = vmatpush2.msra.mxu0 0.0
    %609 = vmatprep.subr.mxu0 0.0
    %610 = vmatpush2.msra.mxu0 0.0
    %611 = vmatprep.subr.mxu0 0.0
    %612 = vmatpush2.msra.mxu0 0.0
    %613 = vmatprep.subr.mxu0 0.0
    %614 = vmatpush2.msra.mxu0 0.0
    %615 = vmatprep.subr.mxu0 0.0
    %616 = vmatpush2.msra.mxu0 0.0
    %617 = vmatprep.subr.mxu0 0.0
    %618 = vmatpush2.msra.mxu0 %v458
    %619 = vmatprep.subr.mxu0 0.0
    %620 = vmatpush2.msra.mxu0 %v457
    %621 = vmatprep.subr.mxu0 0.0
    %622 = vmatpush2.msra.mxu0 %v456
    %623 = vmatprep.subr.mxu0 0.0
    %624 = vmatpush2.msra.mxu0 %v455
    %625 = vmatprep.mubr.f32.mxu0 %v465
    %626 = vmatmul.mubr.f32.gmra.mxu0 %v386
    %v627 = vpop.f32.mrf.mxu0
    %v628 = vadd.f32 %v543, %v627
    %v629 = vpop.f32.mrf.mxu0
    %630 = vmatprep.mubr.f32.mxu0 %v468
    %631 = vmatmul.mubr.f32.gmra.mxu0 %v405
    %v632 = vpop.f32.mrf.mxu0
    %v633 = vadd.f32 %v548, %v632
    %v634 = vpop.f32.mrf.mxu0
    %635 = vmatprep.mubr.f32.mxu0 %v471
    %636 = vmatmul.mubr.f32.gmra.mxu0 %v388
    %v637 = vpop.f32.mrf.mxu0
    %v638 = vadd.f32 %v553, %v637
    %v639 = vpop.f32.mrf.mxu0
    %640 = vmatprep.mubr.f32.mxu0 %v474
    %641 = vmatmul.mubr.f32.gmra.mxu0 %v406
    %v642 = vpop.f32.mrf.mxu0
    %v643 = vadd.f32 %v558, %v642
    %v644 = vpop.f32.mrf.mxu0
    %645 = vdwg.mxu0
    %v646 = vmax.f32 %v628, 0.0
    %v647 = vmax.f32 %v633, 0.0
    %v648 = vmax.f32 %v638, 0.0
    %v649 = vmax.f32 %v643, 0.0
    %v654 = vrot.slane %v646, 2
    %v655 = vrot.slane %v647, 2
    %v656 = vsel %vm150, %v654, %v655
    %v657 = vrot.slane %v648, 2
    %v658 = vrot.slane %v649, 2
    %v659 = vsel %vm150, %v657, %v658
    %v666 = vsel %vm150, 0.0, %v654
    %v667 = vsel %vm150, 0.0, %v657
    %v668 = vsel %vm150, %v655, 0.0
    %v669 = vsel %vm150, %v658, 0.0
    %v670 = vrot.slane %v666, 1
    %v671 = vrot.slane %v656, 1
    %v672 = vrot.slane %v668, 1
    %v673 = vrot.slane %v667, 1
    %v674 = vrot.slane %v659, 1
    %v675 = vrot.slane %v669, 1
    %v676 = vsel %vm175, %v674, %v675
    %v677 = vsel %vm175, %v673, %v674
    %v678 = vsel %vm175, %v671, %v672
    %v679 = vsel %vm175, %v670, %v671
    %v680 = vrot.slane %v666, 2
    %v681 = vrot.slane %v656, 2
    %v682 = vrot.slane %v668, 2
    %v683 = vrot.slane %v667, 2
    %v684 = vrot.slane %v659, 2
    %v685 = vrot.slane %v669, 2
    %v686 = vsel %vm186, %v684, %v685
    %v687 = vsel %vm186, %v683, %v684
    %v688 = vsel %vm186, %v681, %v682
    %v689 = vsel %vm186, %v680, %v681
    %v690 = vrot.slane %v666, 3
    %v691 = vrot.slane %v656, 3
    %v692 = vrot.slane %v668, 3
    %v693 = vrot.slane %v667, 3
    %v694 = vrot.slane %v659, 3
    %v695 = vrot.slane %v669, 3
    %v696 = vsel %vm197, %v694, %v695
    %v697 = vsel %vm197, %v693, %v694
    %v698 = vsel %vm197, %v691, %v692
    %v699 = vsel %vm197, %v690, %v691
    %v700 = vrot.slane %v666, 4
    %v701 = vrot.slane %v656, 4
    %v702 = vrot.slane %v668, 4
    %v703 = vrot.slane %v667, 4
    %v704 = vrot.slane %v659, 4
    %v705 = vrot.slane %v669, 4
    %v706 = vsel %vm208, %v704, %v705
    %v707 = vsel %vm208, %v703, %v704
    %v708 = vsel %vm208, %v701, %v702
    %v709 = vsel %vm208, %v700, %v701
    %v710 = vrot.slane %v666, 5
    %v711 = vrot.slane %v656, 5
    %v712 = vrot.slane %v668, 5
    %v713 = vrot.slane %v667, 5
    %v714 = vrot.slane %v659, 5
    %v715 = vrot.slane %v669, 5
    %v716 = vsel %vm219, %v714, %v715
    %v717 = vsel %vm219, %v713, %v714
    %v718 = vsel %vm219, %v711, %v712
    %v719 = vsel %vm219, %v710, %v711
    %v720 = vrot.slane %v666, 6
    %v721 = vrot.slane %v656, 6
    %v722 = vrot.slane %v668, 6
    %v723 = vrot.slane %v667, 6
    %v724 = vrot.slane %v659, 6
    %v725 = vrot.slane %v669, 6
    %v726 = vsel %vm230, %v724, %v725
    %v727 = vsel %vm230, %v723, %v724
    %v728 = vsel %vm230, %v721, %v722
    %v729 = vsel %vm230, %v720, %v721
    %v730 = vrot.slane %v666, 7
    %v731 = vrot.slane %v656, 7
    %v732 = vrot.slane %v668, 7
    %v733 = vrot.slane %v667, 7
    %v734 = vrot.slane %v659, 7
    %v735 = vrot.slane %v669, 7
    %v736 = vsel %vm241, %v734, %v735
    %v737 = vsel %vm241, %v733, %v734
    %v738 = vsel %vm241, %v731, %v732
    %v739 = vsel %vm241, %v730, %v731
    %v740 = vsel %vm175, %v675, 0.0
    %v741 = vsel %vm175, %v672, 0.0
    %v742 = vsel %vm186, %v685, 0.0
    %v743 = vsel %vm186, %v682, 0.0
    %v744 = vsel %vm197, %v695, 0.0
    %v745 = vsel %vm197, %v692, 0.0
    %v746 = vsel %vm208, %v705, 0.0
    %v747 = vsel %vm208, %v702, 0.0
    %752 = vrot.lane.b32.xlu0 %v679, 32
    %v753 = vpop.permute.xlu0 %752
    %754 = vrot.lane.b32.xlu0 %v678, 32
    %v755 = vpop.permute.xlu0 %754
    %756 = vrot.lane.b32.xlu0 %v677, 32
    %v757 = vpop.permute.xlu0 %756
    %758 = vrot.lane.b32.xlu0 %v676, 32
    %v759 = vpop.permute.xlu0 %758
    %768 = vrot.lane.b32.xlu0 %v689, 64
    %v769 = vpop.permute.xlu0 %768
    %770 = vrot.lane.b32.xlu0 %v688, 64
    %v771 = vpop.permute.xlu0 %770
    %772 = vrot.lane.b32.xlu0 %v687, 64
    %v773 = vpop.permute.xlu0 %772
    %774 = vrot.lane.b32.xlu0 %v686, 64
    %v775 = vpop.permute.xlu0 %774
    %784 = vrot.lane.b32.xlu0 %v699, 96
    %v785 = vpop.permute.xlu0 %784
    %786 = vrot.lane.b32.xlu0 %v698, 96
    %v787 = vpop.permute.xlu0 %786
    %788 = vrot.lane.b32.xlu0 %v697, 96
    %v789 = vpop.permute.xlu0 %788
    %790 = vrot.lane.b32.xlu0 %v696, 96
    %v791 = vpop.permute.xlu0 %790
    %800 = vrot.lane.b32.xlu0 %v719, 32
    %v801 = vpop.permute.xlu0 %800
    %802 = vrot.lane.b32.xlu0 %v718, 32
    %v803 = vpop.permute.xlu0 %802
    %804 = vrot.lane.b32.xlu0 %v717, 32
    %v805 = vpop.permute.xlu0 %804
    %806 = vrot.lane.b32.xlu0 %v716, 32
    %v807 = vpop.permute.xlu0 %806
    %816 = vrot.lane.b32.xlu0 %v729, 64
    %v817 = vpop.permute.xlu0 %816
    %818 = vrot.lane.b32.xlu0 %v728, 64
    %v819 = vpop.permute.xlu0 %818
    %820 = vrot.lane.b32.xlu0 %v727, 64
    %v821 = vpop.permute.xlu0 %820
    %822 = vrot.lane.b32.xlu0 %v726, 64
    %v823 = vpop.permute.xlu0 %822
    %832 = vrot.lane.b32.xlu0 %v739, 96
    %v833 = vpop.permute.xlu0 %832
    %834 = vrot.lane.b32.xlu0 %v738, 96
    %v835 = vpop.permute.xlu0 %834
    %836 = vrot.lane.b32.xlu0 %v737, 96
    %v837 = vpop.permute.xlu0 %836
    %838 = vrot.lane.b32.xlu0 %v736, 96
    %v839 = vpop.permute.xlu0 %838
    %846 = vrot.lane.b32.xlu0 %v741, 32
    %v847 = vpop.permute.xlu0 %846
    %848 = vrot.lane.b32.xlu0 %v740, 32
    %v849 = vpop.permute.xlu0 %848
    %854 = vrot.lane.b32.xlu0 %v743, 64
    %v855 = vpop.permute.xlu0 %854
    %856 = vrot.lane.b32.xlu0 %v742, 64
    %v857 = vpop.permute.xlu0 %856
    %862 = vrot.lane.b32.xlu0 %v745, 96
    %v863 = vpop.permute.xlu0 %862
    %864 = vrot.lane.b32.xlu0 %v744, 96
    %v865 = vpop.permute.xlu0 %864
    %v868 = vsel %vm374, %v666, %v753
    %v869 = vsel %vm374, %v656, %v755
    %v870 = vsel %vm374, %v667, %v757
    %v871 = vsel %vm374, %v659, %v759
    %v872 = vsel %vm379, %v868, %v769
    %v873 = vsel %vm379, %v869, %v771
    %v874 = vsel %vm379, %v870, %v773
    %v875 = vsel %vm379, %v871, %v775
    %v876 = vsel %vm384, %v872, %v785
    %v877 = vsel %vm384, %v873, %v787
    %v878 = vsel %vm384, %v874, %v789
    %v879 = vsel %vm384, %v875, %v791
    %v880 = vsel %vm374, %v709, %v801
    %v881 = vsel %vm374, %v708, %v803
    %v882 = vsel %vm374, %v707, %v805
    %v883 = vsel %vm374, %v706, %v807
    %v884 = vsel %vm379, %v880, %v817
    %v885 = vsel %vm379, %v881, %v819
    %v886 = vsel %vm379, %v882, %v821
    %v887 = vsel %vm379, %v883, %v823
    %v888 = vsel %vm384, %v884, %v833
    %v889 = vsel %vm384, %v885, %v835
    %v890 = vsel %vm384, %v886, %v837
    %v891 = vsel %vm384, %v887, %v839
    %v892 = vsel %vm374, %v668, %v847
    %v893 = vsel %vm374, %v669, %v849
    %v894 = vsel %vm379, %v892, %v855
    %v895 = vsel %vm379, %v893, %v857
    %v896 = vsel %vm384, %v894, %v863
    %v897 = vsel %vm384, %v895, %v865
    %s898 = scalar_lea.vmem %s3, 416
    %v899 = vld [vmem:[%s898] sm:$0xff]
    %v900 = vld [vmem:[%s898 + $0x8] sm:$0xff]
    %v901 = vld [vmem:[%s898 + $0x10] sm:$0xff]
    %v902 = vld [vmem:[%s898 + $0x18] sm:$0xff]
    %v903 = vld [vmem:[%s898 + $0x20] sm:$0xff]
    %v904 = vld [vmem:[%s898 + $0x28] sm:$0xff]
    %v905 = vld [vmem:[%s898 + $0x30] sm:$0xff]
    %v906 = vld [vmem:[%s898 + $0x38] sm:$0xff]
    %v907 = vld [vmem:[%s898 + $0x40] sm:$0xff]
    %v908 = vld [vmem:[%s898 + $0x48] sm:$0xff]
    %v909 = vld [vmem:[%s898 + $0x50] sm:$0xff]
    %v910 = vld [vmem:[%s898 + $0x58] sm:$0xff]
    %v911 = vld [vmem:[%s898 + $0x60] sm:$0xff]
    %v912 = vld [vmem:[%s898 + $0x68] sm:$0xff]
    %v913 = vld [vmem:[%s898 + $0x70] sm:$0xff]
    %v914 = vld [vmem:[%s898 + $0x78] sm:$0xff]
    %v915 = vld [vmem:[%s898 + $0x80] sm:$0xff]
    %v916 = vld [vmem:[%s898 + $0x88] sm:$0xff]
    %v917 = vld [vmem:[%s898 + $0x90] sm:$0xff]
    %v918 = vld [vmem:[%s898 + $0x98] sm:$0xff]
    %v919 = vld [vmem:[%s898 + $0xa0] sm:$0xff]
    %v920 = vld [vmem:[%s898 + $0xa8] sm:$0xff]
    %v921 = vld [vmem:[%s898 + $0xb0] sm:$0xff]
    %v922 = vld [vmem:[%s898 + $0xb8] sm:$0xff]
    %v923 = vld [vmem:[%s898 + $0xc0] sm:$0xff]
    %v924 = vld [vmem:[%s898 + $0xc8] sm:$0xff]
    %v925 = vld [vmem:[%s898 + $0xd0] sm:$0xff]
    %v926 = vld [vmem:[%s898 + $0xd8] sm:$0xff]
    %v927 = vld [vmem:[%s898 + $0xe0] sm:$0xff]
    %v928 = vld [vmem:[%s898 + $0xe8] sm:$0xff]
    %v929 = vld [vmem:[%s898 + $0xf0] sm:$0xff]
    %v930 = vld [vmem:[%s898 + $0xf8] sm:$0xff]
    %v931 = vld [vmem:[%s898 + $0x100] sm:$0xff]
    %v932 = vld [vmem:[%s898 + $0x108] sm:$0xff]
    %v933 = vld [vmem:[%s898 + $0x110] sm:$0xff]
    %v934 = vld [vmem:[%s898 + $0x118] sm:$0xff]
    %v935 = vld [vmem:[%s898 + $0x120] sm:$0xff]
    %v936 = vld [vmem:[%s898 + $0x128] sm:$0xff]
    %v937 = vld [vmem:[%s898 + $0x130] sm:$0xff]
    %v938 = vld [vmem:[%s898 + $0x138] sm:$0xff]
    %v939 = vld [vmem:[%s898 + $0x140] sm:$0xff]
    %v940 = vld [vmem:[%s898 + $0x148] sm:$0xff]
    %v941 = vld [vmem:[%s898 + $0x150] sm:$0xff]
    %v942 = vld [vmem:[%s898 + $0x158] sm:$0xff]
    %v943 = vld [vmem:[%s898 + $0x160] sm:$0xff]
    %v944 = vld [vmem:[%s898 + $0x168] sm:$0xff]
    %v945 = vld [vmem:[%s898 + $0x170] sm:$0xff]
    %v946 = vld [vmem:[%s898 + $0x178] sm:$0xff]
    %v947 = vld [vmem:[%s898 + $0x180] sm:$0xff]
    %v948 = vld [vmem:[%s898 + $0x188] sm:$0xff]
    %v949 = vld [vmem:[%s898 + $0x190] sm:$0xff]
    %v950 = vld [vmem:[%s898 + $0x198] sm:$0xff]
    %v951 = vld [vmem:[%s4 + $0x1] sm:$0x1]
    %v952 = vlaneseq
    %v953 = vshrl.u32 %v952, 7
    %v954 = vsub.s32 0, %v953
    %v955 = vrot.slane %v951, %v954
    %v957 = vsel %vm374, %v708, 0
    %v960 = vsel %vm374, %v747, 0
    %v963 = vsel %vm374, %v706, 0
    %v966 = vsel %vm374, %v746, 0
    %968 = vmatprep.subr.mxu0 0.0
    %969 = vmatpush1.msra.mxu0 %v914
    %970 = vmatprep.subr.mxu0 0.0
    %971 = vmatpush1.msra.mxu0 %v913
    %972 = vmatprep.subr.mxu0 0.0
    %973 = vmatpush1.msra.mxu0 %v912
    %974 = vmatprep.subr.mxu0 0.0
    %975 = vmatpush1.msra.mxu0 %v911
    %976 = vmatprep.subr.mxu0 0.0
    %977 = vmatpush1.msra.mxu0 %v910
    %978 = vmatprep.subr.mxu0 0.0
    %979 = vmatpush1.msra.mxu0 %v909
    %980 = vmatprep.subr.mxu0 0.0
    %981 = vmatpush1.msra.mxu0 %v908
    %982 = vmatprep.subr.mxu0 0.0
    %983 = vmatpush1.msra.mxu0 %v907
    %984 = vmatprep.subr.mxu0 0.0
    %985 = vmatpush1.msra.mxu0 %v906
    %986 = vmatprep.subr.mxu0 0.0
    %987 = vmatpush1.msra.mxu0 %v905
    %988 = vmatprep.subr.mxu0 0.0
    %989 = vmatpush1.msra.mxu0 %v904
    %990 = vmatprep.subr.mxu0 0.0
    %991 = vmatpush1.msra.mxu0 %v903
    %992 = vmatprep.subr.mxu0 0.0
    %993 = vmatpush1.msra.mxu0 %v902
    %994 = vmatprep.subr.mxu0 0.0
    %995 = vmatpush1.msra.mxu0 %v901
    %996 = vmatprep.subr.mxu0 0.0
    %997 = vmatpush1.msra.mxu0 %v900
    %998 = vmatprep.subr.mxu0 0.0
    %999 = vmatpush1.msra.mxu0 %v899
    %1000 = vmatprep.subr.mxu0 0.0
    %1001 = vmatpush2.msra.mxu0 %v930
    %1002 = vmatprep.subr.mxu0 0.0
    %1003 = vmatpush2.msra.mxu0 %v929
    %1004 = vmatprep.subr.mxu0 0.0
    %1005 = vmatpush2.msra.mxu0 %v928
    %1006 = vmatprep.subr.mxu0 0.0
    %1007 = vmatpush2.msra.mxu0 %v927
    %1008 = vmatprep.subr.mxu0 0.0
    %1009 = vmatpush2.msra.mxu0 %v926
    %1010 = vmatprep.subr.mxu0 0.0
    %1011 = vmatpush2.msra.mxu0 %v925
    %1012 = vmatprep.subr.mxu0 0.0
    %1013 = vmatpush2.msra.mxu0 %v924
    %1014 = vmatprep.subr.mxu0 0.0
    %1015 = vmatpush2.msra.mxu0 %v923
    %1016 = vmatprep.subr.mxu0 0.0
    %1017 = vmatpush2.msra.mxu0 %v922
    %1018 = vmatprep.subr.mxu0 0.0
    %1019 = vmatpush2.msra.mxu0 %v921
    %1020 = vmatprep.subr.mxu0 0.0
    %1021 = vmatpush2.msra.mxu0 %v920
    %1022 = vmatprep.subr.mxu0 0.0
    %1023 = vmatpush2.msra.mxu0 %v919
    %1024 = vmatprep.subr.mxu0 0.0
    %1025 = vmatpush2.msra.mxu0 %v918
    %1026 = vmatprep.subr.mxu0 0.0
    %1027 = vmatpush2.msra.mxu0 %v917
    %1028 = vmatprep.subr.mxu0 0.0
    %1029 = vmatpush2.msra.mxu0 %v916
    %1030 = vmatprep.subr.mxu0 0.0
    %1031 = vmatpush2.msra.mxu0 %v915
    %1032 = vmatprep.mubr.f32.mxu0 %v888
    %1033 = vmatmul.mubr.f32.gmra.mxu0 %v876
    %v1034 = vpop.f32.mrf.mxu0
    %v1035 = vadd.f32 %v955, %v1034
    %v1036 = vpop.f32.mrf.mxu0
    %1037 = vmatprep.mubr.f32.mxu0 %v889
    %1038 = vmatmul.mubr.f32.gmra.mxu0 %v877
    %v1039 = vpop.f32.mrf.mxu0
    %v1040 = vadd.f32 %v955, %v1039
    %v1041 = vpop.f32.mrf.mxu0
    %1042 = vmatprep.mubr.f32.mxu0 %v890
    %1043 = vmatmul.mubr.f32.gmra.mxu0 %v878
    %v1044 = vpop.f32.mrf.mxu0
    %v1045 = vadd.f32 %v955, %v1044
    %v1046 = vpop.f32.mrf.mxu0
    %1047 = vmatprep.mubr.f32.mxu0 %v891
    %1048 = vmatmul.mubr.f32.gmra.mxu0 %v879
    %v1049 = vpop.f32.mrf.mxu0
    %v1050 = vadd.f32 %v955, %v1049
    %v1051 = vpop.f32.mrf.mxu0
    %1052 = vdwg.mxu0
    %1053 = vmatprep.subr.mxu0 0.0
    %1054 = vmatpush1.msra.mxu0 %v946
    %1055 = vmatprep.subr.mxu0 0.0
    %1056 = vmatpush1.msra.mxu0 %v945
    %1057 = vmatprep.subr.mxu0 0.0
    %1058 = vmatpush1.msra.mxu0 %v944
    %1059 = vmatprep.subr.mxu0 0.0
    %1060 = vmatpush1.msra.mxu0 %v943
    %1061 = vmatprep.subr.mxu0 0.0
    %1062 = vmatpush1.msra.mxu0 %v942
    %1063 = vmatprep.subr.mxu0 0.0
    %1064 = vmatpush1.msra.mxu0 %v941
    %1065 = vmatprep.subr.mxu0 0.0
    %1066 = vmatpush1.msra.mxu0 %v940
    %1067 = vmatprep.subr.mxu0 0.0
    %1068 = vmatpush1.msra.mxu0 %v939
    %1069 = vmatprep.subr.mxu0 0.0
    %1070 = vmatpush1.msra.mxu0 %v938
    %1071 = vmatprep.subr.mxu0 0.0
    %1072 = vmatpush1.msra.mxu0 %v937
    %1073 = vmatprep.subr.mxu0 0.0
    %1074 = vmatpush1.msra.mxu0 %v936
    %1075 = vmatprep.subr.mxu0 0.0
    %1076 = vmatpush1.msra.mxu0 %v935
    %1077 = vmatprep.subr.mxu0 0.0
    %1078 = vmatpush1.msra.mxu0 %v934
    %1079 = vmatprep.subr.mxu0 0.0
    %1080 = vmatpush1.msra.mxu0 %v933
    %1081 = vmatprep.subr.mxu0 0.0
    %1082 = vmatpush1.msra.mxu0 %v932
    %1083 = vmatprep.subr.mxu0 0.0
    %1084 = vmatpush1.msra.mxu0 %v931
    %1085 = vmatprep.subr.mxu0 0.0
    %1086 = vmatpush2.msra.mxu0 0.0
    %1087 = vmatprep.subr.mxu0 0.0
    %1088 = vmatpush2.msra.mxu0 0.0
    %1089 = vmatprep.subr.mxu0 0.0
    %1090 = vmatpush2.msra.mxu0 0.0
    %1091 = vmatprep.subr.mxu0 0.0
    %1092 = vmatpush2.msra.mxu0 0.0
    %1093 = vmatprep.subr.mxu0 0.0
    %1094 = vmatpush2.msra.mxu0 0.0
    %1095 = vmatprep.subr.mxu0 0.0
    %1096 = vmatpush2.msra.mxu0 0.0
    %1097 = vmatprep.subr.mxu0 0.0
    %1098 = vmatpush2.msra.mxu0 0.0
    %1099 = vmatprep.subr.mxu0 0.0
    %1100 = vmatpush2.msra.mxu0 0.0
    %1101 = vmatprep.subr.mxu0 0.0
    %1102 = vmatpush2.msra.mxu0 0.0
    %1103 = vmatprep.subr.mxu0 0.0
    %1104 = vmatpush2.msra.mxu0 0.0
    %1105 = vmatprep.subr.mxu0 0.0
    %1106 = vmatpush2.msra.mxu0 0.0
    %1107 = vmatprep.subr.mxu0 0.0
    %1108 = vmatpush2.msra.mxu0 0.0
    %1109 = vmatprep.subr.mxu0 0.0
    %1110 = vmatpush2.msra.mxu0 %v950
    %1111 = vmatprep.subr.mxu0 0.0
    %1112 = vmatpush2.msra.mxu0 %v949
    %1113 = vmatprep.subr.mxu0 0.0
    %1114 = vmatpush2.msra.mxu0 %v948
    %1115 = vmatprep.subr.mxu0 0.0
    %1116 = vmatpush2.msra.mxu0 %v947
    %1117 = vmatprep.mubr.f32.mxu0 %v957
    %1118 = vmatmul.mubr.f32.gmra.mxu0 %v877
    %v1119 = vpop.f32.mrf.mxu0
    %v1120 = vadd.f32 %v1035, %v1119
    %v1121 = vpop.f32.mrf.mxu0
    %1122 = vmatprep.mubr.f32.mxu0 %v960
    %1123 = vmatmul.mubr.f32.gmra.mxu0 %v896
    %v1124 = vpop.f32.mrf.mxu0
    %v1125 = vadd.f32 %v1040, %v1124
    %v1126 = vpop.f32.mrf.mxu0
    %1127 = vmatprep.mubr.f32.mxu0 %v963
    %1128 = vmatmul.mubr.f32.gmra.mxu0 %v879
    %v1129 = vpop.f32.mrf.mxu0
    %v1130 = vadd.f32 %v1045, %v1129
    %v1131 = vpop.f32.mrf.mxu0
    %1132 = vmatprep.mubr.f32.mxu0 %v966
    %1133 = vmatmul.mubr.f32.gmra.mxu0 %v897
    %v1134 = vpop.f32.mrf.mxu0
    %v1135 = vadd.f32 %v1050, %v1134
    %v1136 = vpop.f32.mrf.mxu0
    %1137 = vdwg.mxu0
    %v1138 = vmul.f32 %v1120, 0.3
    %v1139 = vmul.f32 %v1125, 0.3
    %v1140 = vmul.f32 %v1130, 0.3
    %v1141 = vmul.f32 %v1135, 0.3
    %v1142 = vadd.f32 %v124, %v1138
    %v1143 = vadd.f32 %v129, %v1139
    %v1144 = vadd.f32 %v134, %v1140
    %v1145 = vadd.f32 %v139, %v1141
    %v1146 = vmax.f32 %v1142, 0.0
    %v1147 = vmax.f32 %v1143, 0.0
    %v1148 = vmax.f32 %v1144, 0.0
    %v1149 = vmax.f32 %v1145, 0.0
    %v1154 = vrot.slane %v1146, 2
    %v1155 = vrot.slane %v1147, 2
    %v1156 = vsel %vm150, %v1154, %v1155
    %v1157 = vrot.slane %v1148, 2
    %v1158 = vrot.slane %v1149, 2
    %v1159 = vsel %vm150, %v1157, %v1158
    %v1166 = vsel %vm150, 0.0, %v1154
    %v1167 = vsel %vm150, 0.0, %v1157
    %v1168 = vsel %vm150, %v1155, 0.0
    %v1169 = vsel %vm150, %v1158, 0.0
    %v1170 = vrot.slane %v1166, 1
    %v1171 = vrot.slane %v1156, 1
    %v1172 = vrot.slane %v1168, 1
    %v1173 = vrot.slane %v1167, 1
    %v1174 = vrot.slane %v1159, 1
    %v1175 = vrot.slane %v1169, 1
    %v1176 = vsel %vm175, %v1174, %v1175
    %v1177 = vsel %vm175, %v1173, %v1174
    %v1178 = vsel %vm175, %v1171, %v1172
    %v1179 = vsel %vm175, %v1170, %v1171
    %v1180 = vrot.slane %v1166, 2
    %v1181 = vrot.slane %v1156, 2
    %v1182 = vrot.slane %v1168, 2
    %v1183 = vrot.slane %v1167, 2
    %v1184 = vrot.slane %v1159, 2
    %v1185 = vrot.slane %v1169, 2
    %v1186 = vsel %vm186, %v1184, %v1185
    %v1187 = vsel %vm186, %v1183, %v1184
    %v1188 = vsel %vm186, %v1181, %v1182
    %v1189 = vsel %vm186, %v1180, %v1181
    %v1190 = vrot.slane %v1166, 3
    %v1191 = vrot.slane %v1156, 3
    %v1192 = vrot.slane %v1168, 3
    %v1193 = vrot.slane %v1167, 3
    %v1194 = vrot.slane %v1159, 3
    %v1195 = vrot.slane %v1169, 3
    %v1196 = vsel %vm197, %v1194, %v1195
    %v1197 = vsel %vm197, %v1193, %v1194
    %v1198 = vsel %vm197, %v1191, %v1192
    %v1199 = vsel %vm197, %v1190, %v1191
    %v1200 = vrot.slane %v1166, 4
    %v1201 = vrot.slane %v1156, 4
    %v1202 = vrot.slane %v1168, 4
    %v1203 = vrot.slane %v1167, 4
    %v1204 = vrot.slane %v1159, 4
    %v1205 = vrot.slane %v1169, 4
    %v1206 = vsel %vm208, %v1204, %v1205
    %v1207 = vsel %vm208, %v1203, %v1204
    %v1208 = vsel %vm208, %v1201, %v1202
    %v1209 = vsel %vm208, %v1200, %v1201
    %v1210 = vrot.slane %v1166, 5
    %v1211 = vrot.slane %v1156, 5
    %v1212 = vrot.slane %v1168, 5
    %v1213 = vrot.slane %v1167, 5
    %v1214 = vrot.slane %v1159, 5
    %v1215 = vrot.slane %v1169, 5
    %v1216 = vsel %vm219, %v1214, %v1215
    %v1217 = vsel %vm219, %v1213, %v1214
    %v1218 = vsel %vm219, %v1211, %v1212
    %v1219 = vsel %vm219, %v1210, %v1211
    %v1220 = vrot.slane %v1166, 6
    %v1221 = vrot.slane %v1156, 6
    %v1222 = vrot.slane %v1168, 6
    %v1223 = vrot.slane %v1167, 6
    %v1224 = vrot.slane %v1159, 6
    %v1225 = vrot.slane %v1169, 6
    %v1226 = vsel %vm230, %v1224, %v1225
    %v1227 = vsel %vm230, %v1223, %v1224
    %v1228 = vsel %vm230, %v1221, %v1222
    %v1229 = vsel %vm230, %v1220, %v1221
    %v1230 = vrot.slane %v1166, 7
    %v1231 = vrot.slane %v1156, 7
    %v1232 = vrot.slane %v1168, 7
    %v1233 = vrot.slane %v1167, 7
    %v1234 = vrot.slane %v1159, 7
    %v1235 = vrot.slane %v1169, 7
    %v1236 = vsel %vm241, %v1234, %v1235
    %v1237 = vsel %vm241, %v1233, %v1234
    %v1238 = vsel %vm241, %v1231, %v1232
    %v1239 = vsel %vm241, %v1230, %v1231
    %v1240 = vsel %vm175, %v1175, 0.0
    %v1241 = vsel %vm175, %v1172, 0.0
    %v1242 = vsel %vm186, %v1185, 0.0
    %v1243 = vsel %vm186, %v1182, 0.0
    %v1244 = vsel %vm197, %v1195, 0.0
    %v1245 = vsel %vm197, %v1192, 0.0
    %v1246 = vsel %vm208, %v1205, 0.0
    %v1247 = vsel %vm208, %v1202, 0.0
    %1252 = vrot.lane.b32.xlu0 %v1179, 32
    %v1253 = vpop.permute.xlu0 %1252
    %1254 = vrot.lane.b32.xlu0 %v1178, 32
    %v1255 = vpop.permute.xlu0 %1254
    %1256 = vrot.lane.b32.xlu0 %v1177, 32
    %v1257 = vpop.permute.xlu0 %1256
    %1258 = vrot.lane.b32.xlu0 %v1176, 32
    %v1259 = vpop.permute.xlu0 %1258
    %1268 = vrot.lane.b32.xlu0 %v1189, 64
    %v1269 = vpop.permute.xlu0 %1268
    %1270 = vrot.lane.b32.xlu0 %v1188, 64
    %v1271 = vpop.permute.xlu0 %1270
    %1272 = vrot.lane.b32.xlu0 %v1187, 64
    %v1273 = vpop.permute.xlu0 %1272
    %1274 = vrot.lane.b32.xlu0 %v1186, 64
    %v1275 = vpop.permute.xlu0 %1274
    %1284 = vrot.lane.b32.xlu0 %v1199, 96
    %v1285 = vpop.permute.xlu0 %1284
    %1286 = vrot.lane.b32.xlu0 %v1198, 96
    %v1287 = vpop.permute.xlu0 %1286
    %1288 = vrot.lane.b32.xlu0 %v1197, 96
    %v1289 = vpop.permute.xlu0 %1288
    %1290 = vrot.lane.b32.xlu0 %v1196, 96
    %v1291 = vpop.permute.xlu0 %1290
    %1300 = vrot.lane.b32.xlu0 %v1219, 32
    %v1301 = vpop.permute.xlu0 %1300
    %1302 = vrot.lane.b32.xlu0 %v1218, 32
    %v1303 = vpop.permute.xlu0 %1302
    %1304 = vrot.lane.b32.xlu0 %v1217, 32
    %v1305 = vpop.permute.xlu0 %1304
    %1306 = vrot.lane.b32.xlu0 %v1216, 32
    %v1307 = vpop.permute.xlu0 %1306
    %1316 = vrot.lane.b32.xlu0 %v1229, 64
    %v1317 = vpop.permute.xlu0 %1316
    %1318 = vrot.lane.b32.xlu0 %v1228, 64
    %v1319 = vpop.permute.xlu0 %1318
    %1320 = vrot.lane.b32.xlu0 %v1227, 64
    %v1321 = vpop.permute.xlu0 %1320
    %1322 = vrot.lane.b32.xlu0 %v1226, 64
    %v1323 = vpop.permute.xlu0 %1322
    %1332 = vrot.lane.b32.xlu0 %v1239, 96
    %v1333 = vpop.permute.xlu0 %1332
    %1334 = vrot.lane.b32.xlu0 %v1238, 96
    %v1335 = vpop.permute.xlu0 %1334
    %1336 = vrot.lane.b32.xlu0 %v1237, 96
    %v1337 = vpop.permute.xlu0 %1336
    %1338 = vrot.lane.b32.xlu0 %v1236, 96
    %v1339 = vpop.permute.xlu0 %1338
    %1346 = vrot.lane.b32.xlu0 %v1241, 32
    %v1347 = vpop.permute.xlu0 %1346
    %1348 = vrot.lane.b32.xlu0 %v1240, 32
    %v1349 = vpop.permute.xlu0 %1348
    %1354 = vrot.lane.b32.xlu0 %v1243, 64
    %v1355 = vpop.permute.xlu0 %1354
    %1356 = vrot.lane.b32.xlu0 %v1242, 64
    %v1357 = vpop.permute.xlu0 %1356
    %1362 = vrot.lane.b32.xlu0 %v1245, 96
    %v1363 = vpop.permute.xlu0 %1362
    %1364 = vrot.lane.b32.xlu0 %v1244, 96
    %v1365 = vpop.permute.xlu0 %1364
    %v1368 = vsel %vm374, %v1166, %v1253
    %v1369 = vsel %vm374, %v1156, %v1255
    %v1370 = vsel %vm374, %v1167, %v1257
    %v1371 = vsel %vm374, %v1159, %v1259
    %v1372 = vsel %vm379, %v1368, %v1269
    %v1373 = vsel %vm379, %v1369, %v1271
    %v1374 = vsel %vm379, %v1370, %v1273
    %v1375 = vsel %vm379, %v1371, %v1275
    %v1376 = vsel %vm384, %v1372, %v1285
    %v1377 = vsel %vm384, %v1373, %v1287
    %v1378 = vsel %vm384, %v1374, %v1289
    %v1379 = vsel %vm384, %v1375, %v1291
    %v1380 = vsel %vm374, %v1209, %v1301
    %v1381 = vsel %vm374, %v1208, %v1303
    %v1382 = vsel %vm374, %v1207, %v1305
    %v1383 = vsel %vm374, %v1206, %v1307
    %v1384 = vsel %vm379, %v1380, %v1317
    %v1385 = vsel %vm379, %v1381, %v1319
    %v1386 = vsel %vm379, %v1382, %v1321
    %v1387 = vsel %vm379, %v1383, %v1323
    %v1388 = vsel %vm384, %v1384, %v1333
    %v1389 = vsel %vm384, %v1385, %v1335
    %v1390 = vsel %vm384, %v1386, %v1337
    %v1391 = vsel %vm384, %v1387, %v1339
    %v1392 = vsel %vm374, %v1168, %v1347
    %v1393 = vsel %vm374, %v1169, %v1349
    %v1394 = vsel %vm379, %v1392, %v1355
    %v1395 = vsel %vm379, %v1393, %v1357
    %v1396 = vsel %vm384, %v1394, %v1363
    %v1397 = vsel %vm384, %v1395, %v1365
    %s1398 = scalar_lea.vmem %s3, 832
    %v1399 = vld [vmem:[%s1398] sm:$0xff]
    %v1400 = vld [vmem:[%s1398 + $0x8] sm:$0xff]
    %v1401 = vld [vmem:[%s1398 + $0x10] sm:$0xff]
    %v1402 = vld [vmem:[%s1398 + $0x18] sm:$0xff]
    %v1403 = vld [vmem:[%s1398 + $0x20] sm:$0xff]
    %v1404 = vld [vmem:[%s1398 + $0x28] sm:$0xff]
    %v1405 = vld [vmem:[%s1398 + $0x30] sm:$0xff]
    %v1406 = vld [vmem:[%s1398 + $0x38] sm:$0xff]
    %v1407 = vld [vmem:[%s1398 + $0x40] sm:$0xff]
    %v1408 = vld [vmem:[%s1398 + $0x48] sm:$0xff]
    %v1409 = vld [vmem:[%s1398 + $0x50] sm:$0xff]
    %v1410 = vld [vmem:[%s1398 + $0x58] sm:$0xff]
    %v1411 = vld [vmem:[%s1398 + $0x60] sm:$0xff]
    %v1412 = vld [vmem:[%s1398 + $0x68] sm:$0xff]
    %v1413 = vld [vmem:[%s1398 + $0x70] sm:$0xff]
    %v1414 = vld [vmem:[%s1398 + $0x78] sm:$0xff]
    %v1415 = vld [vmem:[%s1398 + $0x80] sm:$0xff]
    %v1416 = vld [vmem:[%s1398 + $0x88] sm:$0xff]
    %v1417 = vld [vmem:[%s1398 + $0x90] sm:$0xff]
    %v1418 = vld [vmem:[%s1398 + $0x98] sm:$0xff]
    %v1419 = vld [vmem:[%s1398 + $0xa0] sm:$0xff]
    %v1420 = vld [vmem:[%s1398 + $0xa8] sm:$0xff]
    %v1421 = vld [vmem:[%s1398 + $0xb0] sm:$0xff]
    %v1422 = vld [vmem:[%s1398 + $0xb8] sm:$0xff]
    %v1423 = vld [vmem:[%s1398 + $0xc0] sm:$0xff]
    %v1424 = vld [vmem:[%s1398 + $0xc8] sm:$0xff]
    %v1425 = vld [vmem:[%s1398 + $0xd0] sm:$0xff]
    %v1426 = vld [vmem:[%s1398 + $0xd8] sm:$0xff]
    %v1427 = vld [vmem:[%s1398 + $0xe0] sm:$0xff]
    %v1428 = vld [vmem:[%s1398 + $0xe8] sm:$0xff]
    %v1429 = vld [vmem:[%s1398 + $0xf0] sm:$0xff]
    %v1430 = vld [vmem:[%s1398 + $0xf8] sm:$0xff]
    %v1431 = vld [vmem:[%s1398 + $0x100] sm:$0xff]
    %v1432 = vld [vmem:[%s1398 + $0x108] sm:$0xff]
    %v1433 = vld [vmem:[%s1398 + $0x110] sm:$0xff]
    %v1434 = vld [vmem:[%s1398 + $0x118] sm:$0xff]
    %v1435 = vld [vmem:[%s1398 + $0x120] sm:$0xff]
    %v1436 = vld [vmem:[%s1398 + $0x128] sm:$0xff]
    %v1437 = vld [vmem:[%s1398 + $0x130] sm:$0xff]
    %v1438 = vld [vmem:[%s1398 + $0x138] sm:$0xff]
    %v1439 = vld [vmem:[%s1398 + $0x140] sm:$0xff]
    %v1440 = vld [vmem:[%s1398 + $0x148] sm:$0xff]
    %v1441 = vld [vmem:[%s1398 + $0x150] sm:$0xff]
    %v1442 = vld [vmem:[%s1398 + $0x158] sm:$0xff]
    %v1443 = vld [vmem:[%s1398 + $0x160] sm:$0xff]
    %v1444 = vld [vmem:[%s1398 + $0x168] sm:$0xff]
    %v1445 = vld [vmem:[%s1398 + $0x170] sm:$0xff]
    %v1446 = vld [vmem:[%s1398 + $0x178] sm:$0xff]
    %v1447 = vld [vmem:[%s1398 + $0x180] sm:$0xff]
    %v1448 = vld [vmem:[%s1398 + $0x188] sm:$0xff]
    %v1449 = vld [vmem:[%s1398 + $0x190] sm:$0xff]
    %v1450 = vld [vmem:[%s1398 + $0x198] sm:$0xff]
    %v1451 = vld [vmem:[%s4 + $0x2] sm:$0x1]
    %v1452 = vlaneseq
    %v1453 = vshrl.u32 %v1452, 7
    %v1454 = vsub.s32 0, %v1453
    %v1455 = vrot.slane %v1451, %v1454
    %v1457 = vsel %vm374, %v1208, 0
    %v1460 = vsel %vm374, %v1247, 0
    %v1463 = vsel %vm374, %v1206, 0
    %v1466 = vsel %vm374, %v1246, 0
    %1468 = vmatprep.subr.mxu0 0.0
    %1469 = vmatpush1.msra.mxu0 %v1414
    %1470 = vmatprep.subr.mxu0 0.0
    %1471 = vmatpush1.msra.mxu0 %v1413
    %1472 = vmatprep.subr.mxu0 0.0
    %1473 = vmatpush1.msra.mxu0 %v1412
    %1474 = vmatprep.subr.mxu0 0.0
    %1475 = vmatpush1.msra.mxu0 %v1411
    %1476 = vmatprep.subr.mxu0 0.0
    %1477 = vmatpush1.msra.mxu0 %v1410
    %1478 = vmatprep.subr.mxu0 0.0
    %1479 = vmatpush1.msra.mxu0 %v1409
    %1480 = vmatprep.subr.mxu0 0.0
    %1481 = vmatpush1.msra.mxu0 %v1408
    %1482 = vmatprep.subr.mxu0 0.0
    %1483 = vmatpush1.msra.mxu0 %v1407
    %1484 = vmatprep.subr.mxu0 0.0
    %1485 = vmatpush1.msra.mxu0 %v1406
    %1486 = vmatprep.subr.mxu0 0.0
    %1487 = vmatpush1.msra.mxu0 %v1405
    %1488 = vmatprep.subr.mxu0 0.0
    %1489 = vmatpush1.msra.mxu0 %v1404
    %1490 = vmatprep.subr.mxu0 0.0
    %1491 = vmatpush1.msra.mxu0 %v1403
    %1492 = vmatprep.subr.mxu0 0.0
    %1493 = vmatpush1.msra.mxu0 %v1402
    %1494 = vmatprep.subr.mxu0 0.0
    %1495 = vmatpush1.msra.mxu0 %v1401
    %1496 = vmatprep.subr.mxu0 0.0
    %1497 = vmatpush1.msra.mxu0 %v1400
    %1498 = vmatprep.subr.mxu0 0.0
    %1499 = vmatpush1.msra.mxu0 %v1399
    %1500 = vmatprep.subr.mxu0 0.0
    %1501 = vmatpush2.msra.mxu0 %v1430
    %1502 = vmatprep.subr.mxu0 0.0
    %1503 = vmatpush2.msra.mxu0 %v1429
    %1504 = vmatprep.subr.mxu0 0.0
    %1505 = vmatpush2.msra.mxu0 %v1428
    %1506 = vmatprep.subr.mxu0 0.0
    %1507 = vmatpush2.msra.mxu0 %v1427
    %1508 = vmatprep.subr.mxu0 0.0
    %1509 = vmatpush2.msra.mxu0 %v1426
    %1510 = vmatprep.subr.mxu0 0.0
    %1511 = vmatpush2.msra.mxu0 %v1425
    %1512 = vmatprep.subr.mxu0 0.0
    %1513 = vmatpush2.msra.mxu0 %v1424
    %1514 = vmatprep.subr.mxu0 0.0
    %1515 = vmatpush2.msra.mxu0 %v1423
    %1516 = vmatprep.subr.mxu0 0.0
    %1517 = vmatpush2.msra.mxu0 %v1422
    %1518 = vmatprep.subr.mxu0 0.0
    %1519 = vmatpush2.msra.mxu0 %v1421
    %1520 = vmatprep.subr.mxu0 0.0
    %1521 = vmatpush2.msra.mxu0 %v1420
    %1522 = vmatprep.subr.mxu0 0.0
    %1523 = vmatpush2.msra.mxu0 %v1419
    %1524 = vmatprep.subr.mxu0 0.0
    %1525 = vmatpush2.msra.mxu0 %v1418
    %1526 = vmatprep.subr.mxu0 0.0
    %1527 = vmatpush2.msra.mxu0 %v1417
    %1528 = vmatprep.subr.mxu0 0.0
    %1529 = vmatpush2.msra.mxu0 %v1416
    %1530 = vmatprep.subr.mxu0 0.0
    %1531 = vmatpush2.msra.mxu0 %v1415
    %1532 = vmatprep.mubr.f32.mxu0 %v1388
    %1533 = vmatmul.mubr.f32.gmra.mxu0 %v1376
    %v1534 = vpop.f32.mrf.mxu0
    %v1535 = vadd.f32 %v1455, %v1534
    %v1536 = vpop.f32.mrf.mxu0
    %1537 = vmatprep.mubr.f32.mxu0 %v1389
    %1538 = vmatmul.mubr.f32.gmra.mxu0 %v1377
    %v1539 = vpop.f32.mrf.mxu0
    %v1540 = vadd.f32 %v1455, %v1539
    %v1541 = vpop.f32.mrf.mxu0
    %1542 = vmatprep.mubr.f32.mxu0 %v1390
    %1543 = vmatmul.mubr.f32.gmra.mxu0 %v1378
    %v1544 = vpop.f32.mrf.mxu0
    %v1545 = vadd.f32 %v1455, %v1544
    %v1546 = vpop.f32.mrf.mxu0
    %1547 = vmatprep.mubr.f32.mxu0 %v1391
    %1548 = vmatmul.mubr.f32.gmra.mxu0 %v1379
    %v1549 = vpop.f32.mrf.mxu0
    %v1550 = vadd.f32 %v1455, %v1549
    %v1551 = vpop.f32.mrf.mxu0
    %1552 = vdwg.mxu0
    %1553 = vmatprep.subr.mxu0 0.0
    %1554 = vmatpush1.msra.mxu0 %v1446
    %1555 = vmatprep.subr.mxu0 0.0
    %1556 = vmatpush1.msra.mxu0 %v1445
    %1557 = vmatprep.subr.mxu0 0.0
    %1558 = vmatpush1.msra.mxu0 %v1444
    %1559 = vmatprep.subr.mxu0 0.0
    %1560 = vmatpush1.msra.mxu0 %v1443
    %1561 = vmatprep.subr.mxu0 0.0
    %1562 = vmatpush1.msra.mxu0 %v1442
    %1563 = vmatprep.subr.mxu0 0.0
    %1564 = vmatpush1.msra.mxu0 %v1441
    %1565 = vmatprep.subr.mxu0 0.0
    %1566 = vmatpush1.msra.mxu0 %v1440
    %1567 = vmatprep.subr.mxu0 0.0
    %1568 = vmatpush1.msra.mxu0 %v1439
    %1569 = vmatprep.subr.mxu0 0.0
    %1570 = vmatpush1.msra.mxu0 %v1438
    %1571 = vmatprep.subr.mxu0 0.0
    %1572 = vmatpush1.msra.mxu0 %v1437
    %1573 = vmatprep.subr.mxu0 0.0
    %1574 = vmatpush1.msra.mxu0 %v1436
    %1575 = vmatprep.subr.mxu0 0.0
    %1576 = vmatpush1.msra.mxu0 %v1435
    %1577 = vmatprep.subr.mxu0 0.0
    %1578 = vmatpush1.msra.mxu0 %v1434
    %1579 = vmatprep.subr.mxu0 0.0
    %1580 = vmatpush1.msra.mxu0 %v1433
    %1581 = vmatprep.subr.mxu0 0.0
    %1582 = vmatpush1.msra.mxu0 %v1432
    %1583 = vmatprep.subr.mxu0 0.0
    %1584 = vmatpush1.msra.mxu0 %v1431
    %1585 = vmatprep.subr.mxu0 0.0
    %1586 = vmatpush2.msra.mxu0 0.0
    %1587 = vmatprep.subr.mxu0 0.0
    %1588 = vmatpush2.msra.mxu0 0.0
    %1589 = vmatprep.subr.mxu0 0.0
    %1590 = vmatpush2.msra.mxu0 0.0
    %1591 = vmatprep.subr.mxu0 0.0
    %1592 = vmatpush2.msra.mxu0 0.0
    %1593 = vmatprep.subr.mxu0 0.0
    %1594 = vmatpush2.msra.mxu0 0.0
    %1595 = vmatprep.subr.mxu0 0.0
    %1596 = vmatpush2.msra.mxu0 0.0
    %1597 = vmatprep.subr.mxu0 0.0
    %1598 = vmatpush2.msra.mxu0 0.0
    %1599 = vmatprep.subr.mxu0 0.0
    %1600 = vmatpush2.msra.mxu0 0.0
    %1601 = vmatprep.subr.mxu0 0.0
    %1602 = vmatpush2.msra.mxu0 0.0
    %1603 = vmatprep.subr.mxu0 0.0
    %1604 = vmatpush2.msra.mxu0 0.0
    %1605 = vmatprep.subr.mxu0 0.0
    %1606 = vmatpush2.msra.mxu0 0.0
    %1607 = vmatprep.subr.mxu0 0.0
    %1608 = vmatpush2.msra.mxu0 0.0
    %1609 = vmatprep.subr.mxu0 0.0
    %1610 = vmatpush2.msra.mxu0 %v1450
    %1611 = vmatprep.subr.mxu0 0.0
    %1612 = vmatpush2.msra.mxu0 %v1449
    %1613 = vmatprep.subr.mxu0 0.0
    %1614 = vmatpush2.msra.mxu0 %v1448
    %1615 = vmatprep.subr.mxu0 0.0
    %1616 = vmatpush2.msra.mxu0 %v1447
    %1617 = vmatprep.mubr.f32.mxu0 %v1457
    %1618 = vmatmul.mubr.f32.gmra.mxu0 %v1377
    %v1619 = vpop.f32.mrf.mxu0
    %v1620 = vadd.f32 %v1535, %v1619
    %v1621 = vpop.f32.mrf.mxu0
    %1622 = vmatprep.mubr.f32.mxu0 %v1460
    %1623 = vmatmul.mubr.f32.gmra.mxu0 %v1396
    %v1624 = vpop.f32.mrf.mxu0
    %v1625 = vadd.f32 %v1540, %v1624
    %v1626 = vpop.f32.mrf.mxu0
    %1627 = vmatprep.mubr.f32.mxu0 %v1463
    %1628 = vmatmul.mubr.f32.gmra.mxu0 %v1379
    %v1629 = vpop.f32.mrf.mxu0
    %v1630 = vadd.f32 %v1545, %v1629
    %v1631 = vpop.f32.mrf.mxu0
    %1632 = vmatprep.mubr.f32.mxu0 %v1466
    %1633 = vmatmul.mubr.f32.gmra.mxu0 %v1397
    %v1634 = vpop.f32.mrf.mxu0
    %v1635 = vadd.f32 %v1550, %v1634
    %v1636 = vpop.f32.mrf.mxu0
    %1637 = vdwg.mxu0
    %v1638 = vmax.f32 %v1620, 0.0
    %v1639 = vmax.f32 %v1625, 0.0
    %v1640 = vmax.f32 %v1630, 0.0
    %v1641 = vmax.f32 %v1635, 0.0
    %v1646 = vrot.slane %v1638, 2
    %v1647 = vrot.slane %v1639, 2
    %v1648 = vsel %vm150, %v1646, %v1647
    %v1649 = vrot.slane %v1640, 2
    %v1650 = vrot.slane %v1641, 2
    %v1651 = vsel %vm150, %v1649, %v1650
    %v1658 = vsel %vm150, 0.0, %v1646
    %v1659 = vsel %vm150, 0.0, %v1649
    %v1660 = vsel %vm150, %v1647, 0.0
    %v1661 = vsel %vm150, %v1650, 0.0
    %v1662 = vrot.slane %v1658, 1
    %v1663 = vrot.slane %v1648, 1
    %v1664 = vrot.slane %v1660, 1
    %v1665 = vrot.slane %v1659, 1
    %v1666 = vrot.slane %v1651, 1
    %v1667 = vrot.slane %v1661, 1
    %v1668 = vsel %vm175, %v1666, %v1667
    %v1669 = vsel %vm175, %v1665, %v1666
    %v1670 = vsel %vm175, %v1663, %v1664
    %v1671 = vsel %vm175, %v1662, %v1663
    %v1672 = vrot.slane %v1658, 2
    %v1673 = vrot.slane %v1648, 2
    %v1674 = vrot.slane %v1660, 2
    %v1675 = vrot.slane %v1659, 2
    %v1676 = vrot.slane %v1651, 2
    %v1677 = vrot.slane %v1661, 2
    %v1678 = vsel %vm186, %v1676, %v1677
    %v1679 = vsel %vm186, %v1675, %v1676
    %v1680 = vsel %vm186, %v1673, %v1674
    %v1681 = vsel %vm186, %v1672, %v1673
    %v1682 = vrot.slane %v1658, 3
    %v1683 = vrot.slane %v1648, 3
    %v1684 = vrot.slane %v1660, 3
    %v1685 = vrot.slane %v1659, 3
    %v1686 = vrot.slane %v1651, 3
    %v1687 = vrot.slane %v1661, 3
    %v1688 = vsel %vm197, %v1686, %v1687
    %v1689 = vsel %vm197, %v1685, %v1686
    %v1690 = vsel %vm197, %v1683, %v1684
    %v1691 = vsel %vm197, %v1682, %v1683
    %v1692 = vrot.slane %v1658, 4
    %v1693 = vrot.slane %v1648, 4
    %v1694 = vrot.slane %v1660, 4
    %v1695 = vrot.slane %v1659, 4
    %v1696 = vrot.slane %v1651, 4
    %v1697 = vrot.slane %v1661, 4
    %v1698 = vsel %vm208, %v1696, %v1697
    %v1699 = vsel %vm208, %v1695, %v1696
    %v1700 = vsel %vm208, %v1693, %v1694
    %v1701 = vsel %vm208, %v1692, %v1693
    %v1702 = vrot.slane %v1658, 5
    %v1703 = vrot.slane %v1648, 5
    %v1704 = vrot.slane %v1660, 5
    %v1705 = vrot.slane %v1659, 5
    %v1706 = vrot.slane %v1651, 5
    %v1707 = vrot.slane %v1661, 5
    %v1708 = vsel %vm219, %v1706, %v1707
    %v1709 = vsel %vm219, %v1705, %v1706
    %v1710 = vsel %vm219, %v1703, %v1704
    %v1711 = vsel %vm219, %v1702, %v1703
    %v1712 = vrot.slane %v1658, 6
    %v1713 = vrot.slane %v1648, 6
    %v1714 = vrot.slane %v1660, 6
    %v1715 = vrot.slane %v1659, 6
    %v1716 = vrot.slane %v1651, 6
    %v1717 = vrot.slane %v1661, 6
    %v1718 = vsel %vm230, %v1716, %v1717
    %v1719 = vsel %vm230, %v1715, %v1716
    %v1720 = vsel %vm230, %v1713, %v1714
    %v1721 = vsel %vm230, %v1712, %v1713
    %v1722 = vrot.slane %v1658, 7
    %v1723 = vrot.slane %v1648, 7
    %v1724 = vrot.slane %v1660, 7
    %v1725 = vrot.slane %v1659, 7
    %v1726 = vrot.slane %v1651, 7
    %v1727 = vrot.slane %v1661, 7
    %v1728 = vsel %vm241, %v1726, %v1727
    %v1729 = vsel %vm241, %v1725, %v1726
    %v1730 = vsel %vm241, %v1723, %v1724
    %v1731 = vsel %vm241, %v1722, %v1723
    %v1732 = vsel %vm175, %v1667, 0.0
    %v1733 = vsel %vm175, %v1664, 0.0
    %v1734 = vsel %vm186, %v1677, 0.0
    %v1735 = vsel %vm186, %v1674, 0.0
    %v1736 = vsel %vm197, %v1687, 0.0
    %v1737 = vsel %vm197, %v1684, 0.0
    %v1738 = vsel %vm208, %v1697, 0.0
    %v1739 = vsel %vm208, %v1694, 0.0
    %1744 = vrot.lane.b32.xlu0 %v1671, 32
    %v1745 = vpop.permute.xlu0 %1744
    %1746 = vrot.lane.b32.xlu0 %v1670, 32
    %v1747 = vpop.permute.xlu0 %1746
    %1748 = vrot.lane.b32.xlu0 %v1669, 32
    %v1749 = vpop.permute.xlu0 %1748
    %1750 = vrot.lane.b32.xlu0 %v1668, 32
    %v1751 = vpop.permute.xlu0 %1750
    %1760 = vrot.lane.b32.xlu0 %v1681, 64
    %v1761 = vpop.permute.xlu0 %1760
    %1762 = vrot.lane.b32.xlu0 %v1680, 64
    %v1763 = vpop.permute.xlu0 %1762
    %1764 = vrot.lane.b32.xlu0 %v1679, 64
    %v1765 = vpop.permute.xlu0 %1764
    %1766 = vrot.lane.b32.xlu0 %v1678, 64
    %v1767 = vpop.permute.xlu0 %1766
    %1776 = vrot.lane.b32.xlu0 %v1691, 96
    %v1777 = vpop.permute.xlu0 %1776
    %1778 = vrot.lane.b32.xlu0 %v1690, 96
    %v1779 = vpop.permute.xlu0 %1778
    %1780 = vrot.lane.b32.xlu0 %v1689, 96
    %v1781 = vpop.permute.xlu0 %1780
    %1782 = vrot.lane.b32.xlu0 %v1688, 96
    %v1783 = vpop.permute.xlu0 %1782
    %1792 = vrot.lane.b32.xlu0 %v1711, 32
    %v1793 = vpop.permute.xlu0 %1792
    %1794 = vrot.lane.b32.xlu0 %v1710, 32
    %v1795 = vpop.permute.xlu0 %1794
    %1796 = vrot.lane.b32.xlu0 %v1709, 32
    %v1797 = vpop.permute.xlu0 %1796
    %1798 = vrot.lane.b32.xlu0 %v1708, 32
    %v1799 = vpop.permute.xlu0 %1798
    %1808 = vrot.lane.b32.xlu0 %v1721, 64
    %v1809 = vpop.permute.xlu0 %1808
    %1810 = vrot.lane.b32.xlu0 %v1720, 64
    %v1811 = vpop.permute.xlu0 %1810
    %1812 = vrot.lane.b32.xlu0 %v1719, 64
    %v1813 = vpop.permute.xlu0 %1812
    %1814 = vrot.lane.b32.xlu0 %v1718, 64
    %v1815 = vpop.permute.xlu0 %1814
    %1824 = vrot.lane.b32.xlu0 %v1731, 96
    %v1825 = vpop.permute.xlu0 %1824
    %1826 = vrot.lane.b32.xlu0 %v1730, 96
    %v1827 = vpop.permute.xlu0 %1826
    %1828 = vrot.lane.b32.xlu0 %v1729, 96
    %v1829 = vpop.permute.xlu0 %1828
    %1830 = vrot.lane.b32.xlu0 %v1728, 96
    %v1831 = vpop.permute.xlu0 %1830
    %1838 = vrot.lane.b32.xlu0 %v1733, 32
    %v1839 = vpop.permute.xlu0 %1838
    %1840 = vrot.lane.b32.xlu0 %v1732, 32
    %v1841 = vpop.permute.xlu0 %1840
    %1846 = vrot.lane.b32.xlu0 %v1735, 64
    %v1847 = vpop.permute.xlu0 %1846
    %1848 = vrot.lane.b32.xlu0 %v1734, 64
    %v1849 = vpop.permute.xlu0 %1848
    %1854 = vrot.lane.b32.xlu0 %v1737, 96
    %v1855 = vpop.permute.xlu0 %1854
    %1856 = vrot.lane.b32.xlu0 %v1736, 96
    %v1857 = vpop.permute.xlu0 %1856
    %v1860 = vsel %vm374, %v1658, %v1745
    %v1861 = vsel %vm374, %v1648, %v1747
    %v1862 = vsel %vm374, %v1659, %v1749
    %v1863 = vsel %vm374, %v1651, %v1751
    %v1864 = vsel %vm379, %v1860, %v1761
    %v1865 = vsel %vm379, %v1861, %v1763
    %v1866 = vsel %vm379, %v1862, %v1765
    %v1867 = vsel %vm379, %v1863, %v1767
    %v1868 = vsel %vm384, %v1864, %v1777
    %v1869 = vsel %vm384, %v1865, %v1779
    %v1870 = vsel %vm384, %v1866, %v1781
    %v1871 = vsel %vm384, %v1867, %v1783
    %v1872 = vsel %vm374, %v1701, %v1793
    %v1873 = vsel %vm374, %v1700, %v1795
    %v1874 = vsel %vm374, %v1699, %v1797
    %v1875 = vsel %vm374, %v1698, %v1799
    %v1876 = vsel %vm379, %v1872, %v1809
    %v1877 = vsel %vm379, %v1873, %v1811
    %v1878 = vsel %vm379, %v1874, %v1813
    %v1879 = vsel %vm379, %v1875, %v1815
    %v1880 = vsel %vm384, %v1876, %v1825
    %v1881 = vsel %vm384, %v1877, %v1827
    %v1882 = vsel %vm384, %v1878, %v1829
    %v1883 = vsel %vm384, %v1879, %v1831
    %v1884 = vsel %vm374, %v1660, %v1839
    %v1885 = vsel %vm374, %v1661, %v1841
    %v1886 = vsel %vm379, %v1884, %v1847
    %v1887 = vsel %vm379, %v1885, %v1849
    %v1888 = vsel %vm384, %v1886, %v1855
    %v1889 = vsel %vm384, %v1887, %v1857
    %s1890 = scalar_lea.vmem %s3, 1248
    %v1891 = vld [vmem:[%s1890] sm:$0xff]
    %v1892 = vld [vmem:[%s1890 + $0x8] sm:$0xff]
    %v1893 = vld [vmem:[%s1890 + $0x10] sm:$0xff]
    %v1894 = vld [vmem:[%s1890 + $0x18] sm:$0xff]
    %v1895 = vld [vmem:[%s1890 + $0x20] sm:$0xff]
    %v1896 = vld [vmem:[%s1890 + $0x28] sm:$0xff]
    %v1897 = vld [vmem:[%s1890 + $0x30] sm:$0xff]
    %v1898 = vld [vmem:[%s1890 + $0x38] sm:$0xff]
    %v1899 = vld [vmem:[%s1890 + $0x40] sm:$0xff]
    %v1900 = vld [vmem:[%s1890 + $0x48] sm:$0xff]
    %v1901 = vld [vmem:[%s1890 + $0x50] sm:$0xff]
    %v1902 = vld [vmem:[%s1890 + $0x58] sm:$0xff]
    %v1903 = vld [vmem:[%s1890 + $0x60] sm:$0xff]
    %v1904 = vld [vmem:[%s1890 + $0x68] sm:$0xff]
    %v1905 = vld [vmem:[%s1890 + $0x70] sm:$0xff]
    %v1906 = vld [vmem:[%s1890 + $0x78] sm:$0xff]
    %v1907 = vld [vmem:[%s1890 + $0x80] sm:$0xff]
    %v1908 = vld [vmem:[%s1890 + $0x88] sm:$0xff]
    %v1909 = vld [vmem:[%s1890 + $0x90] sm:$0xff]
    %v1910 = vld [vmem:[%s1890 + $0x98] sm:$0xff]
    %v1911 = vld [vmem:[%s1890 + $0xa0] sm:$0xff]
    %v1912 = vld [vmem:[%s1890 + $0xa8] sm:$0xff]
    %v1913 = vld [vmem:[%s1890 + $0xb0] sm:$0xff]
    %v1914 = vld [vmem:[%s1890 + $0xb8] sm:$0xff]
    %v1915 = vld [vmem:[%s1890 + $0xc0] sm:$0xff]
    %v1916 = vld [vmem:[%s1890 + $0xc8] sm:$0xff]
    %v1917 = vld [vmem:[%s1890 + $0xd0] sm:$0xff]
    %v1918 = vld [vmem:[%s1890 + $0xd8] sm:$0xff]
    %v1919 = vld [vmem:[%s1890 + $0xe0] sm:$0xff]
    %v1920 = vld [vmem:[%s1890 + $0xe8] sm:$0xff]
    %v1921 = vld [vmem:[%s1890 + $0xf0] sm:$0xff]
    %v1922 = vld [vmem:[%s1890 + $0xf8] sm:$0xff]
    %v1923 = vld [vmem:[%s1890 + $0x100] sm:$0xff]
    %v1924 = vld [vmem:[%s1890 + $0x108] sm:$0xff]
    %v1925 = vld [vmem:[%s1890 + $0x110] sm:$0xff]
    %v1926 = vld [vmem:[%s1890 + $0x118] sm:$0xff]
    %v1927 = vld [vmem:[%s1890 + $0x120] sm:$0xff]
    %v1928 = vld [vmem:[%s1890 + $0x128] sm:$0xff]
    %v1929 = vld [vmem:[%s1890 + $0x130] sm:$0xff]
    %v1930 = vld [vmem:[%s1890 + $0x138] sm:$0xff]
    %v1931 = vld [vmem:[%s1890 + $0x140] sm:$0xff]
    %v1932 = vld [vmem:[%s1890 + $0x148] sm:$0xff]
    %v1933 = vld [vmem:[%s1890 + $0x150] sm:$0xff]
    %v1934 = vld [vmem:[%s1890 + $0x158] sm:$0xff]
    %v1935 = vld [vmem:[%s1890 + $0x160] sm:$0xff]
    %v1936 = vld [vmem:[%s1890 + $0x168] sm:$0xff]
    %v1937 = vld [vmem:[%s1890 + $0x170] sm:$0xff]
    %v1938 = vld [vmem:[%s1890 + $0x178] sm:$0xff]
    %v1939 = vld [vmem:[%s1890 + $0x180] sm:$0xff]
    %v1940 = vld [vmem:[%s1890 + $0x188] sm:$0xff]
    %v1941 = vld [vmem:[%s1890 + $0x190] sm:$0xff]
    %v1942 = vld [vmem:[%s1890 + $0x198] sm:$0xff]
    %v1943 = vld [vmem:[%s4 + $0x3] sm:$0x1]
    %v1944 = vlaneseq
    %v1945 = vshrl.u32 %v1944, 7
    %v1946 = vsub.s32 0, %v1945
    %v1947 = vrot.slane %v1943, %v1946
    %v1949 = vsel %vm374, %v1700, 0
    %v1952 = vsel %vm374, %v1739, 0
    %v1955 = vsel %vm374, %v1698, 0
    %v1958 = vsel %vm374, %v1738, 0
    %1960 = vmatprep.subr.mxu0 0.0
    %1961 = vmatpush1.msra.mxu0 %v1906
    %1962 = vmatprep.subr.mxu0 0.0
    %1963 = vmatpush1.msra.mxu0 %v1905
    %1964 = vmatprep.subr.mxu0 0.0
    %1965 = vmatpush1.msra.mxu0 %v1904
    %1966 = vmatprep.subr.mxu0 0.0
    %1967 = vmatpush1.msra.mxu0 %v1903
    %1968 = vmatprep.subr.mxu0 0.0
    %1969 = vmatpush1.msra.mxu0 %v1902
    %1970 = vmatprep.subr.mxu0 0.0
    %1971 = vmatpush1.msra.mxu0 %v1901
    %1972 = vmatprep.subr.mxu0 0.0
    %1973 = vmatpush1.msra.mxu0 %v1900
    %1974 = vmatprep.subr.mxu0 0.0
    %1975 = vmatpush1.msra.mxu0 %v1899
    %1976 = vmatprep.subr.mxu0 0.0
    %1977 = vmatpush1.msra.mxu0 %v1898
    %1978 = vmatprep.subr.mxu0 0.0
    %1979 = vmatpush1.msra.mxu0 %v1897
    %1980 = vmatprep.subr.mxu0 0.0
    %1981 = vmatpush1.msra.mxu0 %v1896
    %1982 = vmatprep.subr.mxu0 0.0
    %1983 = vmatpush1.msra.mxu0 %v1895
    %1984 = vmatprep.subr.mxu0 0.0
    %1985 = vmatpush1.msra.mxu0 %v1894
    %1986 = vmatprep.subr.mxu0 0.0
    %1987 = vmatpush1.msra.mxu0 %v1893
    %1988 = vmatprep.subr.mxu0 0.0
    %1989 = vmatpush1.msra.mxu0 %v1892
    %1990 = vmatprep.subr.mxu0 0.0
    %1991 = vmatpush1.msra.mxu0 %v1891
    %1992 = vmatprep.subr.mxu0 0.0
    %1993 = vmatpush2.msra.mxu0 %v1922
    %1994 = vmatprep.subr.mxu0 0.0
    %1995 = vmatpush2.msra.mxu0 %v1921
    %1996 = vmatprep.subr.mxu0 0.0
    %1997 = vmatpush2.msra.mxu0 %v1920
    %1998 = vmatprep.subr.mxu0 0.0
    %1999 = vmatpush2.msra.mxu0 %v1919
    %2000 = vmatprep.subr.mxu0 0.0
    %2001 = vmatpush2.msra.mxu0 %v1918
    %2002 = vmatprep.subr.mxu0 0.0
    %2003 = vmatpush2.msra.mxu0 %v1917
    %2004 = vmatprep.subr.mxu0 0.0
    %2005 = vmatpush2.msra.mxu0 %v1916
    %2006 = vmatprep.subr.mxu0 0.0
    %2007 = vmatpush2.msra.mxu0 %v1915
    %2008 = vmatprep.subr.mxu0 0.0
    %2009 = vmatpush2.msra.mxu0 %v1914
    %2010 = vmatprep.subr.mxu0 0.0
    %2011 = vmatpush2.msra.mxu0 %v1913
    %2012 = vmatprep.subr.mxu0 0.0
    %2013 = vmatpush2.msra.mxu0 %v1912
    %2014 = vmatprep.subr.mxu0 0.0
    %2015 = vmatpush2.msra.mxu0 %v1911
    %2016 = vmatprep.subr.mxu0 0.0
    %2017 = vmatpush2.msra.mxu0 %v1910
    %2018 = vmatprep.subr.mxu0 0.0
    %2019 = vmatpush2.msra.mxu0 %v1909
    %2020 = vmatprep.subr.mxu0 0.0
    %2021 = vmatpush2.msra.mxu0 %v1908
    %2022 = vmatprep.subr.mxu0 0.0
    %2023 = vmatpush2.msra.mxu0 %v1907
    %2024 = vmatprep.mubr.f32.mxu0 %v1880
    %2025 = vmatmul.mubr.f32.gmra.mxu0 %v1868
    %v2026 = vpop.f32.mrf.mxu0
    %v2027 = vadd.f32 %v1947, %v2026
    %v2028 = vpop.f32.mrf.mxu0
    %2029 = vmatprep.mubr.f32.mxu0 %v1881
    %2030 = vmatmul.mubr.f32.gmra.mxu0 %v1869
    %v2031 = vpop.f32.mrf.mxu0
    %v2032 = vadd.f32 %v1947, %v2031
    %v2033 = vpop.f32.mrf.mxu0
    %2034 = vmatprep.mubr.f32.mxu0 %v1882
    %2035 = vmatmul.mubr.f32.gmra.mxu0 %v1870
    %v2036 = vpop.f32.mrf.mxu0
    %v2037 = vadd.f32 %v1947, %v2036
    %v2038 = vpop.f32.mrf.mxu0
    %2039 = vmatprep.mubr.f32.mxu0 %v1883
    %2040 = vmatmul.mubr.f32.gmra.mxu0 %v1871
    %v2041 = vpop.f32.mrf.mxu0
    %v2042 = vadd.f32 %v1947, %v2041
    %v2043 = vpop.f32.mrf.mxu0
    %2044 = vdwg.mxu0
    %2045 = vmatprep.subr.mxu0 0.0
    %2046 = vmatpush1.msra.mxu0 %v1938
    %2047 = vmatprep.subr.mxu0 0.0
    %2048 = vmatpush1.msra.mxu0 %v1937
    %2049 = vmatprep.subr.mxu0 0.0
    %2050 = vmatpush1.msra.mxu0 %v1936
    %2051 = vmatprep.subr.mxu0 0.0
    %2052 = vmatpush1.msra.mxu0 %v1935
    %2053 = vmatprep.subr.mxu0 0.0
    %2054 = vmatpush1.msra.mxu0 %v1934
    %2055 = vmatprep.subr.mxu0 0.0
    %2056 = vmatpush1.msra.mxu0 %v1933
    %2057 = vmatprep.subr.mxu0 0.0
    %2058 = vmatpush1.msra.mxu0 %v1932
    %2059 = vmatprep.subr.mxu0 0.0
    %2060 = vmatpush1.msra.mxu0 %v1931
    %2061 = vmatprep.subr.mxu0 0.0
    %2062 = vmatpush1.msra.mxu0 %v1930
    %2063 = vmatprep.subr.mxu0 0.0
    %2064 = vmatpush1.msra.mxu0 %v1929
    %2065 = vmatprep.subr.mxu0 0.0
    %2066 = vmatpush1.msra.mxu0 %v1928
    %2067 = vmatprep.subr.mxu0 0.0
    %2068 = vmatpush1.msra.mxu0 %v1927
    %2069 = vmatprep.subr.mxu0 0.0
    %2070 = vmatpush1.msra.mxu0 %v1926
    %2071 = vmatprep.subr.mxu0 0.0
    %2072 = vmatpush1.msra.mxu0 %v1925
    %2073 = vmatprep.subr.mxu0 0.0
    %2074 = vmatpush1.msra.mxu0 %v1924
    %2075 = vmatprep.subr.mxu0 0.0
    %2076 = vmatpush1.msra.mxu0 %v1923
    %2077 = vmatprep.subr.mxu0 0.0
    %2078 = vmatpush2.msra.mxu0 0.0
    %2079 = vmatprep.subr.mxu0 0.0
    %2080 = vmatpush2.msra.mxu0 0.0
    %2081 = vmatprep.subr.mxu0 0.0
    %2082 = vmatpush2.msra.mxu0 0.0
    %2083 = vmatprep.subr.mxu0 0.0
    %2084 = vmatpush2.msra.mxu0 0.0
    %2085 = vmatprep.subr.mxu0 0.0
    %2086 = vmatpush2.msra.mxu0 0.0
    %2087 = vmatprep.subr.mxu0 0.0
    %2088 = vmatpush2.msra.mxu0 0.0
    %2089 = vmatprep.subr.mxu0 0.0
    %2090 = vmatpush2.msra.mxu0 0.0
    %2091 = vmatprep.subr.mxu0 0.0
    %2092 = vmatpush2.msra.mxu0 0.0
    %2093 = vmatprep.subr.mxu0 0.0
    %2094 = vmatpush2.msra.mxu0 0.0
    %2095 = vmatprep.subr.mxu0 0.0
    %2096 = vmatpush2.msra.mxu0 0.0
    %2097 = vmatprep.subr.mxu0 0.0
    %2098 = vmatpush2.msra.mxu0 0.0
    %2099 = vmatprep.subr.mxu0 0.0
    %2100 = vmatpush2.msra.mxu0 0.0
    %2101 = vmatprep.subr.mxu0 0.0
    %2102 = vmatpush2.msra.mxu0 %v1942
    %2103 = vmatprep.subr.mxu0 0.0
    %2104 = vmatpush2.msra.mxu0 %v1941
    %2105 = vmatprep.subr.mxu0 0.0
    %2106 = vmatpush2.msra.mxu0 %v1940
    %2107 = vmatprep.subr.mxu0 0.0
    %2108 = vmatpush2.msra.mxu0 %v1939
    %2109 = vmatprep.mubr.f32.mxu0 %v1949
    %2110 = vmatmul.mubr.f32.gmra.mxu0 %v1869
    %v2111 = vpop.f32.mrf.mxu0
    %v2112 = vadd.f32 %v2027, %v2111
    %v2113 = vpop.f32.mrf.mxu0
    %2114 = vmatprep.mubr.f32.mxu0 %v1952
    %2115 = vmatmul.mubr.f32.gmra.mxu0 %v1888
    %v2116 = vpop.f32.mrf.mxu0
    %v2117 = vadd.f32 %v2032, %v2116
    %v2118 = vpop.f32.mrf.mxu0
    %2119 = vmatprep.mubr.f32.mxu0 %v1955
    %2120 = vmatmul.mubr.f32.gmra.mxu0 %v1871
    %v2121 = vpop.f32.mrf.mxu0
    %v2122 = vadd.f32 %v2037, %v2121
    %v2123 = vpop.f32.mrf.mxu0
    %2124 = vmatprep.mubr.f32.mxu0 %v1958
    %2125 = vmatmul.mubr.f32.gmra.mxu0 %v1889
    %v2126 = vpop.f32.mrf.mxu0
    %v2127 = vadd.f32 %v2042, %v2126
    %v2128 = vpop.f32.mrf.mxu0
    %2129 = vdwg.mxu0
    %v2130 = vmul.f32 %v2112, 0.3
    %v2131 = vmul.f32 %v2117, 0.3
    %v2132 = vmul.f32 %v2122, 0.3
    %v2133 = vmul.f32 %v2127, 0.3
    %v2134 = vadd.f32 %v1142, %v2130
    %v2135 = vadd.f32 %v1143, %v2131
    %v2136 = vadd.f32 %v1144, %v2132
    %v2137 = vadd.f32 %v1145, %v2133
    %v2138 = vmax.f32 %v2134, 0.0
    %v2139 = vmax.f32 %v2135, 0.0
    %v2140 = vmax.f32 %v2136, 0.0
    %v2141 = vmax.f32 %v2137, 0.0
    %v2146 = vrot.slane %v2138, 2
    %v2147 = vrot.slane %v2139, 2
    %v2148 = vsel %vm150, %v2146, %v2147
    %v2149 = vrot.slane %v2140, 2
    %v2150 = vrot.slane %v2141, 2
    %v2151 = vsel %vm150, %v2149, %v2150
    %v2158 = vsel %vm150, 0.0, %v2146
    %v2159 = vsel %vm150, 0.0, %v2149
    %v2160 = vsel %vm150, %v2147, 0.0
    %v2161 = vsel %vm150, %v2150, 0.0
    %v2162 = vrot.slane %v2158, 1
    %v2163 = vrot.slane %v2148, 1
    %v2164 = vrot.slane %v2160, 1
    %v2165 = vrot.slane %v2159, 1
    %v2166 = vrot.slane %v2151, 1
    %v2167 = vrot.slane %v2161, 1
    %v2168 = vsel %vm175, %v2166, %v2167
    %v2169 = vsel %vm175, %v2165, %v2166
    %v2170 = vsel %vm175, %v2163, %v2164
    %v2171 = vsel %vm175, %v2162, %v2163
    %v2172 = vrot.slane %v2158, 2
    %v2173 = vrot.slane %v2148, 2
    %v2174 = vrot.slane %v2160, 2
    %v2175 = vrot.slane %v2159, 2
    %v2176 = vrot.slane %v2151, 2
    %v2177 = vrot.slane %v2161, 2
    %v2178 = vsel %vm186, %v2176, %v2177
    %v2179 = vsel %vm186, %v2175, %v2176
    %v2180 = vsel %vm186, %v2173, %v2174
    %v2181 = vsel %vm186, %v2172, %v2173
    %v2182 = vrot.slane %v2158, 3
    %v2183 = vrot.slane %v2148, 3
    %v2184 = vrot.slane %v2160, 3
    %v2185 = vrot.slane %v2159, 3
    %v2186 = vrot.slane %v2151, 3
    %v2187 = vrot.slane %v2161, 3
    %v2188 = vsel %vm197, %v2186, %v2187
    %v2189 = vsel %vm197, %v2185, %v2186
    %v2190 = vsel %vm197, %v2183, %v2184
    %v2191 = vsel %vm197, %v2182, %v2183
    %v2192 = vrot.slane %v2158, 4
    %v2193 = vrot.slane %v2148, 4
    %v2194 = vrot.slane %v2160, 4
    %v2195 = vrot.slane %v2159, 4
    %v2196 = vrot.slane %v2151, 4
    %v2197 = vrot.slane %v2161, 4
    %v2198 = vsel %vm208, %v2196, %v2197
    %v2199 = vsel %vm208, %v2195, %v2196
    %v2200 = vsel %vm208, %v2193, %v2194
    %v2201 = vsel %vm208, %v2192, %v2193
    %v2202 = vrot.slane %v2158, 5
    %v2203 = vrot.slane %v2148, 5
    %v2204 = vrot.slane %v2160, 5
    %v2205 = vrot.slane %v2159, 5
    %v2206 = vrot.slane %v2151, 5
    %v2207 = vrot.slane %v2161, 5
    %v2208 = vsel %vm219, %v2206, %v2207
    %v2209 = vsel %vm219, %v2205, %v2206
    %v2210 = vsel %vm219, %v2203, %v2204
    %v2211 = vsel %vm219, %v2202, %v2203
    %v2212 = vrot.slane %v2158, 6
    %v2213 = vrot.slane %v2148, 6
    %v2214 = vrot.slane %v2160, 6
    %v2215 = vrot.slane %v2159, 6
    %v2216 = vrot.slane %v2151, 6
    %v2217 = vrot.slane %v2161, 6
    %v2218 = vsel %vm230, %v2216, %v2217
    %v2219 = vsel %vm230, %v2215, %v2216
    %v2220 = vsel %vm230, %v2213, %v2214
    %v2221 = vsel %vm230, %v2212, %v2213
    %v2222 = vrot.slane %v2158, 7
    %v2223 = vrot.slane %v2148, 7
    %v2224 = vrot.slane %v2160, 7
    %v2225 = vrot.slane %v2159, 7
    %v2226 = vrot.slane %v2151, 7
    %v2227 = vrot.slane %v2161, 7
    %v2228 = vsel %vm241, %v2226, %v2227
    %v2229 = vsel %vm241, %v2225, %v2226
    %v2230 = vsel %vm241, %v2223, %v2224
    %v2231 = vsel %vm241, %v2222, %v2223
    %v2232 = vsel %vm175, %v2167, 0.0
    %v2233 = vsel %vm175, %v2164, 0.0
    %v2234 = vsel %vm186, %v2177, 0.0
    %v2235 = vsel %vm186, %v2174, 0.0
    %v2236 = vsel %vm197, %v2187, 0.0
    %v2237 = vsel %vm197, %v2184, 0.0
    %v2238 = vsel %vm208, %v2197, 0.0
    %v2239 = vsel %vm208, %v2194, 0.0
    %2244 = vrot.lane.b32.xlu0 %v2171, 32
    %v2245 = vpop.permute.xlu0 %2244
    %2246 = vrot.lane.b32.xlu0 %v2170, 32
    %v2247 = vpop.permute.xlu0 %2246
    %2248 = vrot.lane.b32.xlu0 %v2169, 32
    %v2249 = vpop.permute.xlu0 %2248
    %2250 = vrot.lane.b32.xlu0 %v2168, 32
    %v2251 = vpop.permute.xlu0 %2250
    %2260 = vrot.lane.b32.xlu0 %v2181, 64
    %v2261 = vpop.permute.xlu0 %2260
    %2262 = vrot.lane.b32.xlu0 %v2180, 64
    %v2263 = vpop.permute.xlu0 %2262
    %2264 = vrot.lane.b32.xlu0 %v2179, 64
    %v2265 = vpop.permute.xlu0 %2264
    %2266 = vrot.lane.b32.xlu0 %v2178, 64
    %v2267 = vpop.permute.xlu0 %2266
    %2276 = vrot.lane.b32.xlu0 %v2191, 96
    %v2277 = vpop.permute.xlu0 %2276
    %2278 = vrot.lane.b32.xlu0 %v2190, 96
    %v2279 = vpop.permute.xlu0 %2278
    %2280 = vrot.lane.b32.xlu0 %v2189, 96
    %v2281 = vpop.permute.xlu0 %2280
    %2282 = vrot.lane.b32.xlu0 %v2188, 96
    %v2283 = vpop.permute.xlu0 %2282
    %2292 = vrot.lane.b32.xlu0 %v2211, 32
    %v2293 = vpop.permute.xlu0 %2292
    %2294 = vrot.lane.b32.xlu0 %v2210, 32
    %v2295 = vpop.permute.xlu0 %2294
    %2296 = vrot.lane.b32.xlu0 %v2209, 32
    %v2297 = vpop.permute.xlu0 %2296
    %2298 = vrot.lane.b32.xlu0 %v2208, 32
    %v2299 = vpop.permute.xlu0 %2298
    %2308 = vrot.lane.b32.xlu0 %v2221, 64
    %v2309 = vpop.permute.xlu0 %2308
    %2310 = vrot.lane.b32.xlu0 %v2220, 64
    %v2311 = vpop.permute.xlu0 %2310
    %2312 = vrot.lane.b32.xlu0 %v2219, 64
    %v2313 = vpop.permute.xlu0 %2312
    %2314 = vrot.lane.b32.xlu0 %v2218, 64
    %v2315 = vpop.permute.xlu0 %2314
    %2324 = vrot.lane.b32.xlu0 %v2231, 96
    %v2325 = vpop.permute.xlu0 %2324
    %2326 = vrot.lane.b32.xlu0 %v2230, 96
    %v2327 = vpop.permute.xlu0 %2326
    %2328 = vrot.lane.b32.xlu0 %v2229, 96
    %v2329 = vpop.permute.xlu0 %2328
    %2330 = vrot.lane.b32.xlu0 %v2228, 96
    %v2331 = vpop.permute.xlu0 %2330
    %2338 = vrot.lane.b32.xlu0 %v2233, 32
    %v2339 = vpop.permute.xlu0 %2338
    %2340 = vrot.lane.b32.xlu0 %v2232, 32
    %v2341 = vpop.permute.xlu0 %2340
    %2346 = vrot.lane.b32.xlu0 %v2235, 64
    %v2347 = vpop.permute.xlu0 %2346
    %2348 = vrot.lane.b32.xlu0 %v2234, 64
    %v2349 = vpop.permute.xlu0 %2348
    %2354 = vrot.lane.b32.xlu0 %v2237, 96
    %v2355 = vpop.permute.xlu0 %2354
    %2356 = vrot.lane.b32.xlu0 %v2236, 96
    %v2357 = vpop.permute.xlu0 %2356
    %v2360 = vsel %vm374, %v2158, %v2245
    %v2361 = vsel %vm374, %v2148, %v2247
    %v2362 = vsel %vm374, %v2159, %v2249
    %v2363 = vsel %vm374, %v2151, %v2251
    %v2364 = vsel %vm379, %v2360, %v2261
    %v2365 = vsel %vm379, %v2361, %v2263
    %v2366 = vsel %vm379, %v2362, %v2265
    %v2367 = vsel %vm379, %v2363, %v2267
    %v2368 = vsel %vm384, %v2364, %v2277
    %v2369 = vsel %vm384, %v2365, %v2279
    %v2370 = vsel %vm384, %v2366, %v2281
    %v2371 = vsel %vm384, %v2367, %v2283
    %v2372 = vsel %vm374, %v2201, %v2293
    %v2373 = vsel %vm374, %v2200, %v2295
    %v2374 = vsel %vm374, %v2199, %v2297
    %v2375 = vsel %vm374, %v2198, %v2299
    %v2376 = vsel %vm379, %v2372, %v2309
    %v2377 = vsel %vm379, %v2373, %v2311
    %v2378 = vsel %vm379, %v2374, %v2313
    %v2379 = vsel %vm379, %v2375, %v2315
    %v2380 = vsel %vm384, %v2376, %v2325
    %v2381 = vsel %vm384, %v2377, %v2327
    %v2382 = vsel %vm384, %v2378, %v2329
    %v2383 = vsel %vm384, %v2379, %v2331
    %v2384 = vsel %vm374, %v2160, %v2339
    %v2385 = vsel %vm374, %v2161, %v2341
    %v2386 = vsel %vm379, %v2384, %v2347
    %v2387 = vsel %vm379, %v2385, %v2349
    %v2388 = vsel %vm384, %v2386, %v2355
    %v2389 = vsel %vm384, %v2387, %v2357
    %s2390 = scalar_lea.vmem %s3, 1664
    %v2391 = vld [vmem:[%s2390] sm:$0xff]
    %v2392 = vld [vmem:[%s2390 + $0x8] sm:$0xff]
    %v2393 = vld [vmem:[%s2390 + $0x10] sm:$0xff]
    %v2394 = vld [vmem:[%s2390 + $0x18] sm:$0xff]
    %v2395 = vld [vmem:[%s2390 + $0x20] sm:$0xff]
    %v2396 = vld [vmem:[%s2390 + $0x28] sm:$0xff]
    %v2397 = vld [vmem:[%s2390 + $0x30] sm:$0xff]
    %v2398 = vld [vmem:[%s2390 + $0x38] sm:$0xff]
    %v2399 = vld [vmem:[%s2390 + $0x40] sm:$0xff]
    %v2400 = vld [vmem:[%s2390 + $0x48] sm:$0xff]
    %v2401 = vld [vmem:[%s2390 + $0x50] sm:$0xff]
    %v2402 = vld [vmem:[%s2390 + $0x58] sm:$0xff]
    %v2403 = vld [vmem:[%s2390 + $0x60] sm:$0xff]
    %v2404 = vld [vmem:[%s2390 + $0x68] sm:$0xff]
    %v2405 = vld [vmem:[%s2390 + $0x70] sm:$0xff]
    %v2406 = vld [vmem:[%s2390 + $0x78] sm:$0xff]
    %v2407 = vld [vmem:[%s2390 + $0x80] sm:$0xff]
    %v2408 = vld [vmem:[%s2390 + $0x88] sm:$0xff]
    %v2409 = vld [vmem:[%s2390 + $0x90] sm:$0xff]
    %v2410 = vld [vmem:[%s2390 + $0x98] sm:$0xff]
    %v2411 = vld [vmem:[%s2390 + $0xa0] sm:$0xff]
    %v2412 = vld [vmem:[%s2390 + $0xa8] sm:$0xff]
    %v2413 = vld [vmem:[%s2390 + $0xb0] sm:$0xff]
    %v2414 = vld [vmem:[%s2390 + $0xb8] sm:$0xff]
    %v2415 = vld [vmem:[%s2390 + $0xc0] sm:$0xff]
    %v2416 = vld [vmem:[%s2390 + $0xc8] sm:$0xff]
    %v2417 = vld [vmem:[%s2390 + $0xd0] sm:$0xff]
    %v2418 = vld [vmem:[%s2390 + $0xd8] sm:$0xff]
    %v2419 = vld [vmem:[%s2390 + $0xe0] sm:$0xff]
    %v2420 = vld [vmem:[%s2390 + $0xe8] sm:$0xff]
    %v2421 = vld [vmem:[%s2390 + $0xf0] sm:$0xff]
    %v2422 = vld [vmem:[%s2390 + $0xf8] sm:$0xff]
    %v2423 = vld [vmem:[%s2390 + $0x100] sm:$0xff]
    %v2424 = vld [vmem:[%s2390 + $0x108] sm:$0xff]
    %v2425 = vld [vmem:[%s2390 + $0x110] sm:$0xff]
    %v2426 = vld [vmem:[%s2390 + $0x118] sm:$0xff]
    %v2427 = vld [vmem:[%s2390 + $0x120] sm:$0xff]
    %v2428 = vld [vmem:[%s2390 + $0x128] sm:$0xff]
    %v2429 = vld [vmem:[%s2390 + $0x130] sm:$0xff]
    %v2430 = vld [vmem:[%s2390 + $0x138] sm:$0xff]
    %v2431 = vld [vmem:[%s2390 + $0x140] sm:$0xff]
    %v2432 = vld [vmem:[%s2390 + $0x148] sm:$0xff]
    %v2433 = vld [vmem:[%s2390 + $0x150] sm:$0xff]
    %v2434 = vld [vmem:[%s2390 + $0x158] sm:$0xff]
    %v2435 = vld [vmem:[%s2390 + $0x160] sm:$0xff]
    %v2436 = vld [vmem:[%s2390 + $0x168] sm:$0xff]
    %v2437 = vld [vmem:[%s2390 + $0x170] sm:$0xff]
    %v2438 = vld [vmem:[%s2390 + $0x178] sm:$0xff]
    %v2439 = vld [vmem:[%s2390 + $0x180] sm:$0xff]
    %v2440 = vld [vmem:[%s2390 + $0x188] sm:$0xff]
    %v2441 = vld [vmem:[%s2390 + $0x190] sm:$0xff]
    %v2442 = vld [vmem:[%s2390 + $0x198] sm:$0xff]
    %v2443 = vld [vmem:[%s4 + $0x4] sm:$0x1]
    %v2444 = vlaneseq
    %v2445 = vshrl.u32 %v2444, 7
    %v2446 = vsub.s32 0, %v2445
    %v2447 = vrot.slane %v2443, %v2446
    %v2449 = vsel %vm374, %v2200, 0
    %v2452 = vsel %vm374, %v2239, 0
    %v2455 = vsel %vm374, %v2198, 0
    %v2458 = vsel %vm374, %v2238, 0
    %2460 = vmatprep.subr.mxu0 0.0
    %2461 = vmatpush1.msra.mxu0 %v2406
    %2462 = vmatprep.subr.mxu0 0.0
    %2463 = vmatpush1.msra.mxu0 %v2405
    %2464 = vmatprep.subr.mxu0 0.0
    %2465 = vmatpush1.msra.mxu0 %v2404
    %2466 = vmatprep.subr.mxu0 0.0
    %2467 = vmatpush1.msra.mxu0 %v2403
    %2468 = vmatprep.subr.mxu0 0.0
    %2469 = vmatpush1.msra.mxu0 %v2402
    %2470 = vmatprep.subr.mxu0 0.0
    %2471 = vmatpush1.msra.mxu0 %v2401
    %2472 = vmatprep.subr.mxu0 0.0
    %2473 = vmatpush1.msra.mxu0 %v2400
    %2474 = vmatprep.subr.mxu0 0.0
    %2475 = vmatpush1.msra.mxu0 %v2399
    %2476 = vmatprep.subr.mxu0 0.0
    %2477 = vmatpush1.msra.mxu0 %v2398
    %2478 = vmatprep.subr.mxu0 0.0
    %2479 = vmatpush1.msra.mxu0 %v2397
    %2480 = vmatprep.subr.mxu0 0.0
    %2481 = vmatpush1.msra.mxu0 %v2396
    %2482 = vmatprep.subr.mxu0 0.0
    %2483 = vmatpush1.msra.mxu0 %v2395
    %2484 = vmatprep.subr.mxu0 0.0
    %2485 = vmatpush1.msra.mxu0 %v2394
    %2486 = vmatprep.subr.mxu0 0.0
    %2487 = vmatpush1.msra.mxu0 %v2393
    %2488 = vmatprep.subr.mxu0 0.0
    %2489 = vmatpush1.msra.mxu0 %v2392
    %2490 = vmatprep.subr.mxu0 0.0
    %2491 = vmatpush1.msra.mxu0 %v2391
    %2492 = vmatprep.subr.mxu0 0.0
    %2493 = vmatpush2.msra.mxu0 %v2422
    %2494 = vmatprep.subr.mxu0 0.0
    %2495 = vmatpush2.msra.mxu0 %v2421
    %2496 = vmatprep.subr.mxu0 0.0
    %2497 = vmatpush2.msra.mxu0 %v2420
    %2498 = vmatprep.subr.mxu0 0.0
    %2499 = vmatpush2.msra.mxu0 %v2419
    %2500 = vmatprep.subr.mxu0 0.0
    %2501 = vmatpush2.msra.mxu0 %v2418
    %2502 = vmatprep.subr.mxu0 0.0
    %2503 = vmatpush2.msra.mxu0 %v2417
    %2504 = vmatprep.subr.mxu0 0.0
    %2505 = vmatpush2.msra.mxu0 %v2416
    %2506 = vmatprep.subr.mxu0 0.0
    %2507 = vmatpush2.msra.mxu0 %v2415
    %2508 = vmatprep.subr.mxu0 0.0
    %2509 = vmatpush2.msra.mxu0 %v2414
    %2510 = vmatprep.subr.mxu0 0.0
    %2511 = vmatpush2.msra.mxu0 %v2413
    %2512 = vmatprep.subr.mxu0 0.0
    %2513 = vmatpush2.msra.mxu0 %v2412
    %2514 = vmatprep.subr.mxu0 0.0
    %2515 = vmatpush2.msra.mxu0 %v2411
    %2516 = vmatprep.subr.mxu0 0.0
    %2517 = vmatpush2.msra.mxu0 %v2410
    %2518 = vmatprep.subr.mxu0 0.0
    %2519 = vmatpush2.msra.mxu0 %v2409
    %2520 = vmatprep.subr.mxu0 0.0
    %2521 = vmatpush2.msra.mxu0 %v2408
    %2522 = vmatprep.subr.mxu0 0.0
    %2523 = vmatpush2.msra.mxu0 %v2407
    %2524 = vmatprep.mubr.f32.mxu0 %v2380
    %2525 = vmatmul.mubr.f32.gmra.mxu0 %v2368
    %v2526 = vpop.f32.mrf.mxu0
    %v2527 = vadd.f32 %v2447, %v2526
    %v2528 = vpop.f32.mrf.mxu0
    %2529 = vmatprep.mubr.f32.mxu0 %v2381
    %2530 = vmatmul.mubr.f32.gmra.mxu0 %v2369
    %v2531 = vpop.f32.mrf.mxu0
    %v2532 = vadd.f32 %v2447, %v2531
    %v2533 = vpop.f32.mrf.mxu0
    %2534 = vmatprep.mubr.f32.mxu0 %v2382
    %2535 = vmatmul.mubr.f32.gmra.mxu0 %v2370
    %v2536 = vpop.f32.mrf.mxu0
    %v2537 = vadd.f32 %v2447, %v2536
    %v2538 = vpop.f32.mrf.mxu0
    %2539 = vmatprep.mubr.f32.mxu0 %v2383
    %2540 = vmatmul.mubr.f32.gmra.mxu0 %v2371
    %v2541 = vpop.f32.mrf.mxu0
    %v2542 = vadd.f32 %v2447, %v2541
    %v2543 = vpop.f32.mrf.mxu0
    %2544 = vdwg.mxu0
    %2545 = vmatprep.subr.mxu0 0.0
    %2546 = vmatpush1.msra.mxu0 %v2438
    %2547 = vmatprep.subr.mxu0 0.0
    %2548 = vmatpush1.msra.mxu0 %v2437
    %2549 = vmatprep.subr.mxu0 0.0
    %2550 = vmatpush1.msra.mxu0 %v2436
    %2551 = vmatprep.subr.mxu0 0.0
    %2552 = vmatpush1.msra.mxu0 %v2435
    %2553 = vmatprep.subr.mxu0 0.0
    %2554 = vmatpush1.msra.mxu0 %v2434
    %2555 = vmatprep.subr.mxu0 0.0
    %2556 = vmatpush1.msra.mxu0 %v2433
    %2557 = vmatprep.subr.mxu0 0.0
    %2558 = vmatpush1.msra.mxu0 %v2432
    %2559 = vmatprep.subr.mxu0 0.0
    %2560 = vmatpush1.msra.mxu0 %v2431
    %2561 = vmatprep.subr.mxu0 0.0
    %2562 = vmatpush1.msra.mxu0 %v2430
    %2563 = vmatprep.subr.mxu0 0.0
    %2564 = vmatpush1.msra.mxu0 %v2429
    %2565 = vmatprep.subr.mxu0 0.0
    %2566 = vmatpush1.msra.mxu0 %v2428
    %2567 = vmatprep.subr.mxu0 0.0
    %2568 = vmatpush1.msra.mxu0 %v2427
    %2569 = vmatprep.subr.mxu0 0.0
    %2570 = vmatpush1.msra.mxu0 %v2426
    %2571 = vmatprep.subr.mxu0 0.0
    %2572 = vmatpush1.msra.mxu0 %v2425
    %2573 = vmatprep.subr.mxu0 0.0
    %2574 = vmatpush1.msra.mxu0 %v2424
    %2575 = vmatprep.subr.mxu0 0.0
    %2576 = vmatpush1.msra.mxu0 %v2423
    %2577 = vmatprep.subr.mxu0 0.0
    %2578 = vmatpush2.msra.mxu0 0.0
    %2579 = vmatprep.subr.mxu0 0.0
    %2580 = vmatpush2.msra.mxu0 0.0
    %2581 = vmatprep.subr.mxu0 0.0
    %2582 = vmatpush2.msra.mxu0 0.0
    %2583 = vmatprep.subr.mxu0 0.0
    %2584 = vmatpush2.msra.mxu0 0.0
    %2585 = vmatprep.subr.mxu0 0.0
    %2586 = vmatpush2.msra.mxu0 0.0
    %2587 = vmatprep.subr.mxu0 0.0
    %2588 = vmatpush2.msra.mxu0 0.0
    %2589 = vmatprep.subr.mxu0 0.0
    %2590 = vmatpush2.msra.mxu0 0.0
    %2591 = vmatprep.subr.mxu0 0.0
    %2592 = vmatpush2.msra.mxu0 0.0
    %2593 = vmatprep.subr.mxu0 0.0
    %2594 = vmatpush2.msra.mxu0 0.0
    %2595 = vmatprep.subr.mxu0 0.0
    %2596 = vmatpush2.msra.mxu0 0.0
    %2597 = vmatprep.subr.mxu0 0.0
    %2598 = vmatpush2.msra.mxu0 0.0
    %2599 = vmatprep.subr.mxu0 0.0
    %2600 = vmatpush2.msra.mxu0 0.0
    %2601 = vmatprep.subr.mxu0 0.0
    %2602 = vmatpush2.msra.mxu0 %v2442
    %2603 = vmatprep.subr.mxu0 0.0
    %2604 = vmatpush2.msra.mxu0 %v2441
    %2605 = vmatprep.subr.mxu0 0.0
    %2606 = vmatpush2.msra.mxu0 %v2440
    %2607 = vmatprep.subr.mxu0 0.0
    %2608 = vmatpush2.msra.mxu0 %v2439
    %2609 = vmatprep.mubr.f32.mxu0 %v2449
    %2610 = vmatmul.mubr.f32.gmra.mxu0 %v2369
    %v2611 = vpop.f32.mrf.mxu0
    %v2612 = vadd.f32 %v2527, %v2611
    %v2613 = vpop.f32.mrf.mxu0
    %2614 = vmatprep.mubr.f32.mxu0 %v2452
    %2615 = vmatmul.mubr.f32.gmra.mxu0 %v2388
    %v2616 = vpop.f32.mrf.mxu0
    %v2617 = vadd.f32 %v2532, %v2616
    %v2618 = vpop.f32.mrf.mxu0
    %2619 = vmatprep.mubr.f32.mxu0 %v2455
    %2620 = vmatmul.mubr.f32.gmra.mxu0 %v2371
    %v2621 = vpop.f32.mrf.mxu0
    %v2622 = vadd.f32 %v2537, %v2621
    %v2623 = vpop.f32.mrf.mxu0
    %2624 = vmatprep.mubr.f32.mxu0 %v2458
    %2625 = vmatmul.mubr.f32.gmra.mxu0 %v2389
    %v2626 = vpop.f32.mrf.mxu0
    %v2627 = vadd.f32 %v2542, %v2626
    %v2628 = vpop.f32.mrf.mxu0
    %2629 = vdwg.mxu0
    %v2630 = vmax.f32 %v2612, 0.0
    %v2631 = vmax.f32 %v2617, 0.0
    %v2632 = vmax.f32 %v2622, 0.0
    %v2633 = vmax.f32 %v2627, 0.0
    %v2638 = vrot.slane %v2630, 2
    %v2639 = vrot.slane %v2631, 2
    %v2640 = vsel %vm150, %v2638, %v2639
    %v2641 = vrot.slane %v2632, 2
    %v2642 = vrot.slane %v2633, 2
    %v2643 = vsel %vm150, %v2641, %v2642
    %v2650 = vsel %vm150, 0.0, %v2638
    %v2651 = vsel %vm150, 0.0, %v2641
    %v2652 = vsel %vm150, %v2639, 0.0
    %v2653 = vsel %vm150, %v2642, 0.0
    %v2654 = vrot.slane %v2650, 1
    %v2655 = vrot.slane %v2640, 1
    %v2656 = vrot.slane %v2652, 1
    %v2657 = vrot.slane %v2651, 1
    %v2658 = vrot.slane %v2643, 1
    %v2659 = vrot.slane %v2653, 1
    %v2660 = vsel %vm175, %v2658, %v2659
    %v2661 = vsel %vm175, %v2657, %v2658
    %v2662 = vsel %vm175, %v2655, %v2656
    %v2663 = vsel %vm175, %v2654, %v2655
    %v2664 = vrot.slane %v2650, 2
    %v2665 = vrot.slane %v2640, 2
    %v2666 = vrot.slane %v2652, 2
    %v2667 = vrot.slane %v2651, 2
    %v2668 = vrot.slane %v2643, 2
    %v2669 = vrot.slane %v2653, 2
    %v2670 = vsel %vm186, %v2668, %v2669
    %v2671 = vsel %vm186, %v2667, %v2668
    %v2672 = vsel %vm186, %v2665, %v2666
    %v2673 = vsel %vm186, %v2664, %v2665
    %v2674 = vrot.slane %v2650, 3
    %v2675 = vrot.slane %v2640, 3
    %v2676 = vrot.slane %v2652, 3
    %v2677 = vrot.slane %v2651, 3
    %v2678 = vrot.slane %v2643, 3
    %v2679 = vrot.slane %v2653, 3
    %v2680 = vsel %vm197, %v2678, %v2679
    %v2681 = vsel %vm197, %v2677, %v2678
    %v2682 = vsel %vm197, %v2675, %v2676
    %v2683 = vsel %vm197, %v2674, %v2675
    %v2684 = vrot.slane %v2650, 4
    %v2685 = vrot.slane %v2640, 4
    %v2686 = vrot.slane %v2652, 4
    %v2687 = vrot.slane %v2651, 4
    %v2688 = vrot.slane %v2643, 4
    %v2689 = vrot.slane %v2653, 4
    %v2690 = vsel %vm208, %v2688, %v2689
    %v2691 = vsel %vm208, %v2687, %v2688
    %v2692 = vsel %vm208, %v2685, %v2686
    %v2693 = vsel %vm208, %v2684, %v2685
    %v2694 = vrot.slane %v2650, 5
    %v2695 = vrot.slane %v2640, 5
    %v2696 = vrot.slane %v2652, 5
    %v2697 = vrot.slane %v2651, 5
    %v2698 = vrot.slane %v2643, 5
    %v2699 = vrot.slane %v2653, 5
    %v2700 = vsel %vm219, %v2698, %v2699
    %v2701 = vsel %vm219, %v2697, %v2698
    %v2702 = vsel %vm219, %v2695, %v2696
    %v2703 = vsel %vm219, %v2694, %v2695
    %v2704 = vrot.slane %v2650, 6
    %v2705 = vrot.slane %v2640, 6
    %v2706 = vrot.slane %v2652, 6
    %v2707 = vrot.slane %v2651, 6
    %v2708 = vrot.slane %v2643, 6
    %v2709 = vrot.slane %v2653, 6
    %v2710 = vsel %vm230, %v2708, %v2709
    %v2711 = vsel %vm230, %v2707, %v2708
    %v2712 = vsel %vm230, %v2705, %v2706
    %v2713 = vsel %vm230, %v2704, %v2705
    %v2714 = vrot.slane %v2650, 7
    %v2715 = vrot.slane %v2640, 7
    %v2716 = vrot.slane %v2652, 7
    %v2717 = vrot.slane %v2651, 7
    %v2718 = vrot.slane %v2643, 7
    %v2719 = vrot.slane %v2653, 7
    %v2720 = vsel %vm241, %v2718, %v2719
    %v2721 = vsel %vm241, %v2717, %v2718
    %v2722 = vsel %vm241, %v2715, %v2716
    %v2723 = vsel %vm241, %v2714, %v2715
    %v2724 = vsel %vm175, %v2659, 0.0
    %v2725 = vsel %vm175, %v2656, 0.0
    %v2726 = vsel %vm186, %v2669, 0.0
    %v2727 = vsel %vm186, %v2666, 0.0
    %v2728 = vsel %vm197, %v2679, 0.0
    %v2729 = vsel %vm197, %v2676, 0.0
    %v2730 = vsel %vm208, %v2689, 0.0
    %v2731 = vsel %vm208, %v2686, 0.0
    %2736 = vrot.lane.b32.xlu0 %v2663, 32
    %v2737 = vpop.permute.xlu0 %2736
    %2738 = vrot.lane.b32.xlu0 %v2662, 32
    %v2739 = vpop.permute.xlu0 %2738
    %2740 = vrot.lane.b32.xlu0 %v2661, 32
    %v2741 = vpop.permute.xlu0 %2740
    %2742 = vrot.lane.b32.xlu0 %v2660, 32
    %v2743 = vpop.permute.xlu0 %2742
    %2752 = vrot.lane.b32.xlu0 %v2673, 64
    %v2753 = vpop.permute.xlu0 %2752
    %2754 = vrot.lane.b32.xlu0 %v2672, 64
    %v2755 = vpop.permute.xlu0 %2754
    %2756 = vrot.lane.b32.xlu0 %v2671, 64
    %v2757 = vpop.permute.xlu0 %2756
    %2758 = vrot.lane.b32.xlu0 %v2670, 64
    %v2759 = vpop.permute.xlu0 %2758
    %2768 = vrot.lane.b32.xlu0 %v2683, 96
    %v2769 = vpop.permute.xlu0 %2768
    %2770 = vrot.lane.b32.xlu0 %v2682, 96
    %v2771 = vpop.permute.xlu0 %2770
    %2772 = vrot.lane.b32.xlu0 %v2681, 96
    %v2773 = vpop.permute.xlu0 %2772
    %2774 = vrot.lane.b32.xlu0 %v2680, 96
    %v2775 = vpop.permute.xlu0 %2774
    %2784 = vrot.lane.b32.xlu0 %v2703, 32
    %v2785 = vpop.permute.xlu0 %2784
    %2786 = vrot.lane.b32.xlu0 %v2702, 32
    %v2787 = vpop.permute.xlu0 %2786
    %2788 = vrot.lane.b32.xlu0 %v2701, 32
    %v2789 = vpop.permute.xlu0 %2788
    %2790 = vrot.lane.b32.xlu0 %v2700, 32
    %v2791 = vpop.permute.xlu0 %2790
    %2800 = vrot.lane.b32.xlu0 %v2713, 64
    %v2801 = vpop.permute.xlu0 %2800
    %2802 = vrot.lane.b32.xlu0 %v2712, 64
    %v2803 = vpop.permute.xlu0 %2802
    %2804 = vrot.lane.b32.xlu0 %v2711, 64
    %v2805 = vpop.permute.xlu0 %2804
    %2806 = vrot.lane.b32.xlu0 %v2710, 64
    %v2807 = vpop.permute.xlu0 %2806
    %2816 = vrot.lane.b32.xlu0 %v2723, 96
    %v2817 = vpop.permute.xlu0 %2816
    %2818 = vrot.lane.b32.xlu0 %v2722, 96
    %v2819 = vpop.permute.xlu0 %2818
    %2820 = vrot.lane.b32.xlu0 %v2721, 96
    %v2821 = vpop.permute.xlu0 %2820
    %2822 = vrot.lane.b32.xlu0 %v2720, 96
    %v2823 = vpop.permute.xlu0 %2822
    %2830 = vrot.lane.b32.xlu0 %v2725, 32
    %v2831 = vpop.permute.xlu0 %2830
    %2832 = vrot.lane.b32.xlu0 %v2724, 32
    %v2833 = vpop.permute.xlu0 %2832
    %2838 = vrot.lane.b32.xlu0 %v2727, 64
    %v2839 = vpop.permute.xlu0 %2838
    %2840 = vrot.lane.b32.xlu0 %v2726, 64
    %v2841 = vpop.permute.xlu0 %2840
    %2846 = vrot.lane.b32.xlu0 %v2729, 96
    %v2847 = vpop.permute.xlu0 %2846
    %2848 = vrot.lane.b32.xlu0 %v2728, 96
    %v2849 = vpop.permute.xlu0 %2848
    %v2852 = vsel %vm374, %v2650, %v2737
    %v2853 = vsel %vm374, %v2640, %v2739
    %v2854 = vsel %vm374, %v2651, %v2741
    %v2855 = vsel %vm374, %v2643, %v2743
    %v2856 = vsel %vm379, %v2852, %v2753
    %v2857 = vsel %vm379, %v2853, %v2755
    %v2858 = vsel %vm379, %v2854, %v2757
    %v2859 = vsel %vm379, %v2855, %v2759
    %v2860 = vsel %vm384, %v2856, %v2769
    %v2861 = vsel %vm384, %v2857, %v2771
    %v2862 = vsel %vm384, %v2858, %v2773
    %v2863 = vsel %vm384, %v2859, %v2775
    %v2864 = vsel %vm374, %v2693, %v2785
    %v2865 = vsel %vm374, %v2692, %v2787
    %v2866 = vsel %vm374, %v2691, %v2789
    %v2867 = vsel %vm374, %v2690, %v2791
    %v2868 = vsel %vm379, %v2864, %v2801
    %v2869 = vsel %vm379, %v2865, %v2803
    %v2870 = vsel %vm379, %v2866, %v2805
    %v2871 = vsel %vm379, %v2867, %v2807
    %v2872 = vsel %vm384, %v2868, %v2817
    %v2873 = vsel %vm384, %v2869, %v2819
    %v2874 = vsel %vm384, %v2870, %v2821
    %v2875 = vsel %vm384, %v2871, %v2823
    %v2876 = vsel %vm374, %v2652, %v2831
    %v2877 = vsel %vm374, %v2653, %v2833
    %v2878 = vsel %vm379, %v2876, %v2839
    %v2879 = vsel %vm379, %v2877, %v2841
    %v2880 = vsel %vm384, %v2878, %v2847
    %v2881 = vsel %vm384, %v2879, %v2849
    %s2882 = scalar_lea.vmem %s3, 2080
    %v2883 = vld [vmem:[%s2882] sm:$0xff]
    %v2884 = vld [vmem:[%s2882 + $0x8] sm:$0xff]
    %v2885 = vld [vmem:[%s2882 + $0x10] sm:$0xff]
    %v2886 = vld [vmem:[%s2882 + $0x18] sm:$0xff]
    %v2887 = vld [vmem:[%s2882 + $0x20] sm:$0xff]
    %v2888 = vld [vmem:[%s2882 + $0x28] sm:$0xff]
    %v2889 = vld [vmem:[%s2882 + $0x30] sm:$0xff]
    %v2890 = vld [vmem:[%s2882 + $0x38] sm:$0xff]
    %v2891 = vld [vmem:[%s2882 + $0x40] sm:$0xff]
    %v2892 = vld [vmem:[%s2882 + $0x48] sm:$0xff]
    %v2893 = vld [vmem:[%s2882 + $0x50] sm:$0xff]
    %v2894 = vld [vmem:[%s2882 + $0x58] sm:$0xff]
    %v2895 = vld [vmem:[%s2882 + $0x60] sm:$0xff]
    %v2896 = vld [vmem:[%s2882 + $0x68] sm:$0xff]
    %v2897 = vld [vmem:[%s2882 + $0x70] sm:$0xff]
    %v2898 = vld [vmem:[%s2882 + $0x78] sm:$0xff]
    %v2899 = vld [vmem:[%s2882 + $0x80] sm:$0xff]
    %v2900 = vld [vmem:[%s2882 + $0x88] sm:$0xff]
    %v2901 = vld [vmem:[%s2882 + $0x90] sm:$0xff]
    %v2902 = vld [vmem:[%s2882 + $0x98] sm:$0xff]
    %v2903 = vld [vmem:[%s2882 + $0xa0] sm:$0xff]
    %v2904 = vld [vmem:[%s2882 + $0xa8] sm:$0xff]
    %v2905 = vld [vmem:[%s2882 + $0xb0] sm:$0xff]
    %v2906 = vld [vmem:[%s2882 + $0xb8] sm:$0xff]
    %v2907 = vld [vmem:[%s2882 + $0xc0] sm:$0xff]
    %v2908 = vld [vmem:[%s2882 + $0xc8] sm:$0xff]
    %v2909 = vld [vmem:[%s2882 + $0xd0] sm:$0xff]
    %v2910 = vld [vmem:[%s2882 + $0xd8] sm:$0xff]
    %v2911 = vld [vmem:[%s2882 + $0xe0] sm:$0xff]
    %v2912 = vld [vmem:[%s2882 + $0xe8] sm:$0xff]
    %v2913 = vld [vmem:[%s2882 + $0xf0] sm:$0xff]
    %v2914 = vld [vmem:[%s2882 + $0xf8] sm:$0xff]
    %v2915 = vld [vmem:[%s2882 + $0x100] sm:$0xff]
    %v2916 = vld [vmem:[%s2882 + $0x108] sm:$0xff]
    %v2917 = vld [vmem:[%s2882 + $0x110] sm:$0xff]
    %v2918 = vld [vmem:[%s2882 + $0x118] sm:$0xff]
    %v2919 = vld [vmem:[%s2882 + $0x120] sm:$0xff]
    %v2920 = vld [vmem:[%s2882 + $0x128] sm:$0xff]
    %v2921 = vld [vmem:[%s2882 + $0x130] sm:$0xff]
    %v2922 = vld [vmem:[%s2882 + $0x138] sm:$0xff]
    %v2923 = vld [vmem:[%s2882 + $0x140] sm:$0xff]
    %v2924 = vld [vmem:[%s2882 + $0x148] sm:$0xff]
    %v2925 = vld [vmem:[%s2882 + $0x150] sm:$0xff]
    %v2926 = vld [vmem:[%s2882 + $0x158] sm:$0xff]
    %v2927 = vld [vmem:[%s2882 + $0x160] sm:$0xff]
    %v2928 = vld [vmem:[%s2882 + $0x168] sm:$0xff]
    %v2929 = vld [vmem:[%s2882 + $0x170] sm:$0xff]
    %v2930 = vld [vmem:[%s2882 + $0x178] sm:$0xff]
    %v2931 = vld [vmem:[%s2882 + $0x180] sm:$0xff]
    %v2932 = vld [vmem:[%s2882 + $0x188] sm:$0xff]
    %v2933 = vld [vmem:[%s2882 + $0x190] sm:$0xff]
    %v2934 = vld [vmem:[%s2882 + $0x198] sm:$0xff]
    %v2935 = vld [vmem:[%s4 + $0x5] sm:$0x1]
    %v2936 = vlaneseq
    %v2937 = vshrl.u32 %v2936, 7
    %v2938 = vsub.s32 0, %v2937
    %v2939 = vrot.slane %v2935, %v2938
    %v2941 = vsel %vm374, %v2692, 0
    %v2944 = vsel %vm374, %v2731, 0
    %v2947 = vsel %vm374, %v2690, 0
    %v2950 = vsel %vm374, %v2730, 0
    %2952 = vmatprep.subr.mxu0 0.0
    %2953 = vmatpush1.msra.mxu0 %v2898
    %2954 = vmatprep.subr.mxu0 0.0
    %2955 = vmatpush1.msra.mxu0 %v2897
    %2956 = vmatprep.subr.mxu0 0.0
    %2957 = vmatpush1.msra.mxu0 %v2896
    %2958 = vmatprep.subr.mxu0 0.0
    %2959 = vmatpush1.msra.mxu0 %v2895
    %2960 = vmatprep.subr.mxu0 0.0
    %2961 = vmatpush1.msra.mxu0 %v2894
    %2962 = vmatprep.subr.mxu0 0.0
    %2963 = vmatpush1.msra.mxu0 %v2893
    %2964 = vmatprep.subr.mxu0 0.0
    %2965 = vmatpush1.msra.mxu0 %v2892
    %2966 = vmatprep.subr.mxu0 0.0
    %2967 = vmatpush1.msra.mxu0 %v2891
    %2968 = vmatprep.subr.mxu0 0.0
    %2969 = vmatpush1.msra.mxu0 %v2890
    %2970 = vmatprep.subr.mxu0 0.0
    %2971 = vmatpush1.msra.mxu0 %v2889
    %2972 = vmatprep.subr.mxu0 0.0
    %2973 = vmatpush1.msra.mxu0 %v2888
    %2974 = vmatprep.subr.mxu0 0.0
    %2975 = vmatpush1.msra.mxu0 %v2887
    %2976 = vmatprep.subr.mxu0 0.0
    %2977 = vmatpush1.msra.mxu0 %v2886
    %2978 = vmatprep.subr.mxu0 0.0
    %2979 = vmatpush1.msra.mxu0 %v2885
    %2980 = vmatprep.subr.mxu0 0.0
    %2981 = vmatpush1.msra.mxu0 %v2884
    %2982 = vmatprep.subr.mxu0 0.0
    %2983 = vmatpush1.msra.mxu0 %v2883
    %2984 = vmatprep.subr.mxu0 0.0
    %2985 = vmatpush2.msra.mxu0 %v2914
    %2986 = vmatprep.subr.mxu0 0.0
    %2987 = vmatpush2.msra.mxu0 %v2913
    %2988 = vmatprep.subr.mxu0 0.0
    %2989 = vmatpush2.msra.mxu0 %v2912
    %2990 = vmatprep.subr.mxu0 0.0
    %2991 = vmatpush2.msra.mxu0 %v2911
    %2992 = vmatprep.subr.mxu0 0.0
    %2993 = vmatpush2.msra.mxu0 %v2910
    %2994 = vmatprep.subr.mxu0 0.0
    %2995 = vmatpush2.msra.mxu0 %v2909
    %2996 = vmatprep.subr.mxu0 0.0
    %2997 = vmatpush2.msra.mxu0 %v2908
    %2998 = vmatprep.subr.mxu0 0.0
    %2999 = vmatpush2.msra.mxu0 %v2907
    %3000 = vmatprep.subr.mxu0 0.0
    %3001 = vmatpush2.msra.mxu0 %v2906
    %3002 = vmatprep.subr.mxu0 0.0
    %3003 = vmatpush2.msra.mxu0 %v2905
    %3004 = vmatprep.subr.mxu0 0.0
    %3005 = vmatpush2.msra.mxu0 %v2904
    %3006 = vmatprep.subr.mxu0 0.0
    %3007 = vmatpush2.msra.mxu0 %v2903
    %3008 = vmatprep.subr.mxu0 0.0
    %3009 = vmatpush2.msra.mxu0 %v2902
    %3010 = vmatprep.subr.mxu0 0.0
    %3011 = vmatpush2.msra.mxu0 %v2901
    %3012 = vmatprep.subr.mxu0 0.0
    %3013 = vmatpush2.msra.mxu0 %v2900
    %3014 = vmatprep.subr.mxu0 0.0
    %3015 = vmatpush2.msra.mxu0 %v2899
    %3016 = vmatprep.mubr.f32.mxu0 %v2872
    %3017 = vmatmul.mubr.f32.gmra.mxu0 %v2860
    %v3018 = vpop.f32.mrf.mxu0
    %v3019 = vadd.f32 %v2939, %v3018
    %v3020 = vpop.f32.mrf.mxu0
    %3021 = vmatprep.mubr.f32.mxu0 %v2873
    %3022 = vmatmul.mubr.f32.gmra.mxu0 %v2861
    %v3023 = vpop.f32.mrf.mxu0
    %v3024 = vadd.f32 %v2939, %v3023
    %v3025 = vpop.f32.mrf.mxu0
    %3026 = vmatprep.mubr.f32.mxu0 %v2874
    %3027 = vmatmul.mubr.f32.gmra.mxu0 %v2862
    %v3028 = vpop.f32.mrf.mxu0
    %v3029 = vadd.f32 %v2939, %v3028
    %v3030 = vpop.f32.mrf.mxu0
    %3031 = vmatprep.mubr.f32.mxu0 %v2875
    %3032 = vmatmul.mubr.f32.gmra.mxu0 %v2863
    %v3033 = vpop.f32.mrf.mxu0
    %v3034 = vadd.f32 %v2939, %v3033
    %v3035 = vpop.f32.mrf.mxu0
    %3036 = vdwg.mxu0
    %3037 = vmatprep.subr.mxu0 0.0
    %3038 = vmatpush1.msra.mxu0 %v2930
    %3039 = vmatprep.subr.mxu0 0.0
    %3040 = vmatpush1.msra.mxu0 %v2929
    %3041 = vmatprep.subr.mxu0 0.0
    %3042 = vmatpush1.msra.mxu0 %v2928
    %3043 = vmatprep.subr.mxu0 0.0
    %3044 = vmatpush1.msra.mxu0 %v2927
    %3045 = vmatprep.subr.mxu0 0.0
    %3046 = vmatpush1.msra.mxu0 %v2926
    %3047 = vmatprep.subr.mxu0 0.0
    %3048 = vmatpush1.msra.mxu0 %v2925
    %3049 = vmatprep.subr.mxu0 0.0
    %3050 = vmatpush1.msra.mxu0 %v2924
    %3051 = vmatprep.subr.mxu0 0.0
    %3052 = vmatpush1.msra.mxu0 %v2923
    %3053 = vmatprep.subr.mxu0 0.0
    %3054 = vmatpush1.msra.mxu0 %v2922
    %3055 = vmatprep.subr.mxu0 0.0
    %3056 = vmatpush1.msra.mxu0 %v2921
    %3057 = vmatprep.subr.mxu0 0.0
    %3058 = vmatpush1.msra.mxu0 %v2920
    %3059 = vmatprep.subr.mxu0 0.0
    %3060 = vmatpush1.msra.mxu0 %v2919
    %3061 = vmatprep.subr.mxu0 0.0
    %3062 = vmatpush1.msra.mxu0 %v2918
    %3063 = vmatprep.subr.mxu0 0.0
    %3064 = vmatpush1.msra.mxu0 %v2917
    %3065 = vmatprep.subr.mxu0 0.0
    %3066 = vmatpush1.msra.mxu0 %v2916
    %3067 = vmatprep.subr.mxu0 0.0
    %3068 = vmatpush1.msra.mxu0 %v2915
    %3069 = vmatprep.subr.mxu0 0.0
    %3070 = vmatpush2.msra.mxu0 0.0
    %3071 = vmatprep.subr.mxu0 0.0
    %3072 = vmatpush2.msra.mxu0 0.0
    %3073 = vmatprep.subr.mxu0 0.0
    %3074 = vmatpush2.msra.mxu0 0.0
    %3075 = vmatprep.subr.mxu0 0.0
    %3076 = vmatpush2.msra.mxu0 0.0
    %3077 = vmatprep.subr.mxu0 0.0
    %3078 = vmatpush2.msra.mxu0 0.0
    %3079 = vmatprep.subr.mxu0 0.0
    %3080 = vmatpush2.msra.mxu0 0.0
    %3081 = vmatprep.subr.mxu0 0.0
    %3082 = vmatpush2.msra.mxu0 0.0
    %3083 = vmatprep.subr.mxu0 0.0
    %3084 = vmatpush2.msra.mxu0 0.0
    %3085 = vmatprep.subr.mxu0 0.0
    %3086 = vmatpush2.msra.mxu0 0.0
    %3087 = vmatprep.subr.mxu0 0.0
    %3088 = vmatpush2.msra.mxu0 0.0
    %3089 = vmatprep.subr.mxu0 0.0
    %3090 = vmatpush2.msra.mxu0 0.0
    %3091 = vmatprep.subr.mxu0 0.0
    %3092 = vmatpush2.msra.mxu0 0.0
    %3093 = vmatprep.subr.mxu0 0.0
    %3094 = vmatpush2.msra.mxu0 %v2934
    %3095 = vmatprep.subr.mxu0 0.0
    %3096 = vmatpush2.msra.mxu0 %v2933
    %3097 = vmatprep.subr.mxu0 0.0
    %3098 = vmatpush2.msra.mxu0 %v2932
    %3099 = vmatprep.subr.mxu0 0.0
    %3100 = vmatpush2.msra.mxu0 %v2931
    %3101 = vmatprep.mubr.f32.mxu0 %v2941
    %3102 = vmatmul.mubr.f32.gmra.mxu0 %v2861
    %v3103 = vpop.f32.mrf.mxu0
    %v3104 = vadd.f32 %v3019, %v3103
    %v3105 = vpop.f32.mrf.mxu0
    %3106 = vmatprep.mubr.f32.mxu0 %v2944
    %3107 = vmatmul.mubr.f32.gmra.mxu0 %v2880
    %v3108 = vpop.f32.mrf.mxu0
    %v3109 = vadd.f32 %v3024, %v3108
    %v3110 = vpop.f32.mrf.mxu0
    %3111 = vmatprep.mubr.f32.mxu0 %v2947
    %3112 = vmatmul.mubr.f32.gmra.mxu0 %v2863
    %v3113 = vpop.f32.mrf.mxu0
    %v3114 = vadd.f32 %v3029, %v3113
    %v3115 = vpop.f32.mrf.mxu0
    %3116 = vmatprep.mubr.f32.mxu0 %v2950
    %3117 = vmatmul.mubr.f32.gmra.mxu0 %v2881
    %v3118 = vpop.f32.mrf.mxu0
    %v3119 = vadd.f32 %v3034, %v3118
    %v3120 = vpop.f32.mrf.mxu0
    %3121 = vdwg.mxu0
    %v3122 = vmul.f32 %v3104, 0.3
    %v3123 = vmul.f32 %v3109, 0.3
    %v3124 = vmul.f32 %v3114, 0.3
    %v3125 = vmul.f32 %v3119, 0.3
    %v3126 = vadd.f32 %v2134, %v3122
    %v3127 = vadd.f32 %v2135, %v3123
    %v3128 = vadd.f32 %v2136, %v3124
    %v3129 = vadd.f32 %v2137, %v3125
    %v3130 = vmax.f32 %v3126, 0.0
    %v3131 = vmax.f32 %v3127, 0.0
    %v3132 = vmax.f32 %v3128, 0.0
    %v3133 = vmax.f32 %v3129, 0.0
    %v3138 = vrot.slane %v3130, 2
    %v3139 = vrot.slane %v3131, 2
    %v3140 = vsel %vm150, %v3138, %v3139
    %v3141 = vrot.slane %v3132, 2
    %v3142 = vrot.slane %v3133, 2
    %v3143 = vsel %vm150, %v3141, %v3142
    %v3150 = vsel %vm150, 0.0, %v3138
    %v3151 = vsel %vm150, 0.0, %v3141
    %v3152 = vsel %vm150, %v3139, 0.0
    %v3153 = vsel %vm150, %v3142, 0.0
    %v3154 = vrot.slane %v3150, 1
    %v3155 = vrot.slane %v3140, 1
    %v3156 = vrot.slane %v3152, 1
    %v3157 = vrot.slane %v3151, 1
    %v3158 = vrot.slane %v3143, 1
    %v3159 = vrot.slane %v3153, 1
    %v3160 = vsel %vm175, %v3158, %v3159
    %v3161 = vsel %vm175, %v3157, %v3158
    %v3162 = vsel %vm175, %v3155, %v3156
    %v3163 = vsel %vm175, %v3154, %v3155
    %v3164 = vrot.slane %v3150, 2
    %v3165 = vrot.slane %v3140, 2
    %v3166 = vrot.slane %v3152, 2
    %v3167 = vrot.slane %v3151, 2
    %v3168 = vrot.slane %v3143, 2
    %v3169 = vrot.slane %v3153, 2
    %v3170 = vsel %vm186, %v3168, %v3169
    %v3171 = vsel %vm186, %v3167, %v3168
    %v3172 = vsel %vm186, %v3165, %v3166
    %v3173 = vsel %vm186, %v3164, %v3165
    %v3174 = vrot.slane %v3150, 3
    %v3175 = vrot.slane %v3140, 3
    %v3176 = vrot.slane %v3152, 3
    %v3177 = vrot.slane %v3151, 3
    %v3178 = vrot.slane %v3143, 3
    %v3179 = vrot.slane %v3153, 3
    %v3180 = vsel %vm197, %v3178, %v3179
    %v3181 = vsel %vm197, %v3177, %v3178
    %v3182 = vsel %vm197, %v3175, %v3176
    %v3183 = vsel %vm197, %v3174, %v3175
    %v3184 = vrot.slane %v3150, 4
    %v3185 = vrot.slane %v3140, 4
    %v3186 = vrot.slane %v3152, 4
    %v3187 = vrot.slane %v3151, 4
    %v3188 = vrot.slane %v3143, 4
    %v3189 = vrot.slane %v3153, 4
    %v3190 = vsel %vm208, %v3188, %v3189
    %v3191 = vsel %vm208, %v3187, %v3188
    %v3192 = vsel %vm208, %v3185, %v3186
    %v3193 = vsel %vm208, %v3184, %v3185
    %v3194 = vrot.slane %v3150, 5
    %v3195 = vrot.slane %v3140, 5
    %v3196 = vrot.slane %v3152, 5
    %v3197 = vrot.slane %v3151, 5
    %v3198 = vrot.slane %v3143, 5
    %v3199 = vrot.slane %v3153, 5
    %v3200 = vsel %vm219, %v3198, %v3199
    %v3201 = vsel %vm219, %v3197, %v3198
    %v3202 = vsel %vm219, %v3195, %v3196
    %v3203 = vsel %vm219, %v3194, %v3195
    %v3204 = vrot.slane %v3150, 6
    %v3205 = vrot.slane %v3140, 6
    %v3206 = vrot.slane %v3152, 6
    %v3207 = vrot.slane %v3151, 6
    %v3208 = vrot.slane %v3143, 6
    %v3209 = vrot.slane %v3153, 6
    %v3210 = vsel %vm230, %v3208, %v3209
    %v3211 = vsel %vm230, %v3207, %v3208
    %v3212 = vsel %vm230, %v3205, %v3206
    %v3213 = vsel %vm230, %v3204, %v3205
    %v3214 = vrot.slane %v3150, 7
    %v3215 = vrot.slane %v3140, 7
    %v3216 = vrot.slane %v3152, 7
    %v3217 = vrot.slane %v3151, 7
    %v3218 = vrot.slane %v3143, 7
    %v3219 = vrot.slane %v3153, 7
    %v3220 = vsel %vm241, %v3218, %v3219
    %v3221 = vsel %vm241, %v3217, %v3218
    %v3222 = vsel %vm241, %v3215, %v3216
    %v3223 = vsel %vm241, %v3214, %v3215
    %v3224 = vsel %vm175, %v3159, 0.0
    %v3225 = vsel %vm175, %v3156, 0.0
    %v3226 = vsel %vm186, %v3169, 0.0
    %v3227 = vsel %vm186, %v3166, 0.0
    %v3228 = vsel %vm197, %v3179, 0.0
    %v3229 = vsel %vm197, %v3176, 0.0
    %v3230 = vsel %vm208, %v3189, 0.0
    %v3231 = vsel %vm208, %v3186, 0.0
    %3236 = vrot.lane.b32.xlu0 %v3163, 32
    %v3237 = vpop.permute.xlu0 %3236
    %3238 = vrot.lane.b32.xlu0 %v3162, 32
    %v3239 = vpop.permute.xlu0 %3238
    %3240 = vrot.lane.b32.xlu0 %v3161, 32
    %v3241 = vpop.permute.xlu0 %3240
    %3242 = vrot.lane.b32.xlu0 %v3160, 32
    %v3243 = vpop.permute.xlu0 %3242
    %3252 = vrot.lane.b32.xlu0 %v3173, 64
    %v3253 = vpop.permute.xlu0 %3252
    %3254 = vrot.lane.b32.xlu0 %v3172, 64
    %v3255 = vpop.permute.xlu0 %3254
    %3256 = vrot.lane.b32.xlu0 %v3171, 64
    %v3257 = vpop.permute.xlu0 %3256
    %3258 = vrot.lane.b32.xlu0 %v3170, 64
    %v3259 = vpop.permute.xlu0 %3258
    %3268 = vrot.lane.b32.xlu0 %v3183, 96
    %v3269 = vpop.permute.xlu0 %3268
    %3270 = vrot.lane.b32.xlu0 %v3182, 96
    %v3271 = vpop.permute.xlu0 %3270
    %3272 = vrot.lane.b32.xlu0 %v3181, 96
    %v3273 = vpop.permute.xlu0 %3272
    %3274 = vrot.lane.b32.xlu0 %v3180, 96
    %v3275 = vpop.permute.xlu0 %3274
    %3284 = vrot.lane.b32.xlu0 %v3203, 32
    %v3285 = vpop.permute.xlu0 %3284
    %3286 = vrot.lane.b32.xlu0 %v3202, 32
    %v3287 = vpop.permute.xlu0 %3286
    %3288 = vrot.lane.b32.xlu0 %v3201, 32
    %v3289 = vpop.permute.xlu0 %3288
    %3290 = vrot.lane.b32.xlu0 %v3200, 32
    %v3291 = vpop.permute.xlu0 %3290
    %3300 = vrot.lane.b32.xlu0 %v3213, 64
    %v3301 = vpop.permute.xlu0 %3300
    %3302 = vrot.lane.b32.xlu0 %v3212, 64
    %v3303 = vpop.permute.xlu0 %3302
    %3304 = vrot.lane.b32.xlu0 %v3211, 64
    %v3305 = vpop.permute.xlu0 %3304
    %3306 = vrot.lane.b32.xlu0 %v3210, 64
    %v3307 = vpop.permute.xlu0 %3306
    %3316 = vrot.lane.b32.xlu0 %v3223, 96
    %v3317 = vpop.permute.xlu0 %3316
    %3318 = vrot.lane.b32.xlu0 %v3222, 96
    %v3319 = vpop.permute.xlu0 %3318
    %3320 = vrot.lane.b32.xlu0 %v3221, 96
    %v3321 = vpop.permute.xlu0 %3320
    %3322 = vrot.lane.b32.xlu0 %v3220, 96
    %v3323 = vpop.permute.xlu0 %3322
    %3330 = vrot.lane.b32.xlu0 %v3225, 32
    %v3331 = vpop.permute.xlu0 %3330
    %3332 = vrot.lane.b32.xlu0 %v3224, 32
    %v3333 = vpop.permute.xlu0 %3332
    %3338 = vrot.lane.b32.xlu0 %v3227, 64
    %v3339 = vpop.permute.xlu0 %3338
    %3340 = vrot.lane.b32.xlu0 %v3226, 64
    %v3341 = vpop.permute.xlu0 %3340
    %3346 = vrot.lane.b32.xlu0 %v3229, 96
    %v3347 = vpop.permute.xlu0 %3346
    %3348 = vrot.lane.b32.xlu0 %v3228, 96
    %v3349 = vpop.permute.xlu0 %3348
    %v3352 = vsel %vm374, %v3150, %v3237
    %v3353 = vsel %vm374, %v3140, %v3239
    %v3354 = vsel %vm374, %v3151, %v3241
    %v3355 = vsel %vm374, %v3143, %v3243
    %v3356 = vsel %vm379, %v3352, %v3253
    %v3357 = vsel %vm379, %v3353, %v3255
    %v3358 = vsel %vm379, %v3354, %v3257
    %v3359 = vsel %vm379, %v3355, %v3259
    %v3360 = vsel %vm384, %v3356, %v3269
    %v3361 = vsel %vm384, %v3357, %v3271
    %v3362 = vsel %vm384, %v3358, %v3273
    %v3363 = vsel %vm384, %v3359, %v3275
    %v3364 = vsel %vm374, %v3193, %v3285
    %v3365 = vsel %vm374, %v3192, %v3287
    %v3366 = vsel %vm374, %v3191, %v3289
    %v3367 = vsel %vm374, %v3190, %v3291
    %v3368 = vsel %vm379, %v3364, %v3301
    %v3369 = vsel %vm379, %v3365, %v3303
    %v3370 = vsel %vm379, %v3366, %v3305
    %v3371 = vsel %vm379, %v3367, %v3307
    %v3372 = vsel %vm384, %v3368, %v3317
    %v3373 = vsel %vm384, %v3369, %v3319
    %v3374 = vsel %vm384, %v3370, %v3321
    %v3375 = vsel %vm384, %v3371, %v3323
    %v3376 = vsel %vm374, %v3152, %v3331
    %v3377 = vsel %vm374, %v3153, %v3333
    %v3378 = vsel %vm379, %v3376, %v3339
    %v3379 = vsel %vm379, %v3377, %v3341
    %v3380 = vsel %vm384, %v3378, %v3347
    %v3381 = vsel %vm384, %v3379, %v3349
    %s3382 = scalar_lea.vmem %s3, 2496
    %v3383 = vld [vmem:[%s3382] sm:$0xff]
    %v3384 = vld [vmem:[%s3382 + $0x8] sm:$0xff]
    %v3385 = vld [vmem:[%s3382 + $0x10] sm:$0xff]
    %v3386 = vld [vmem:[%s3382 + $0x18] sm:$0xff]
    %v3387 = vld [vmem:[%s3382 + $0x20] sm:$0xff]
    %v3388 = vld [vmem:[%s3382 + $0x28] sm:$0xff]
    %v3389 = vld [vmem:[%s3382 + $0x30] sm:$0xff]
    %v3390 = vld [vmem:[%s3382 + $0x38] sm:$0xff]
    %v3391 = vld [vmem:[%s3382 + $0x40] sm:$0xff]
    %v3392 = vld [vmem:[%s3382 + $0x48] sm:$0xff]
    %v3393 = vld [vmem:[%s3382 + $0x50] sm:$0xff]
    %v3394 = vld [vmem:[%s3382 + $0x58] sm:$0xff]
    %v3395 = vld [vmem:[%s3382 + $0x60] sm:$0xff]
    %v3396 = vld [vmem:[%s3382 + $0x68] sm:$0xff]
    %v3397 = vld [vmem:[%s3382 + $0x70] sm:$0xff]
    %v3398 = vld [vmem:[%s3382 + $0x78] sm:$0xff]
    %v3399 = vld [vmem:[%s3382 + $0x80] sm:$0xff]
    %v3400 = vld [vmem:[%s3382 + $0x88] sm:$0xff]
    %v3401 = vld [vmem:[%s3382 + $0x90] sm:$0xff]
    %v3402 = vld [vmem:[%s3382 + $0x98] sm:$0xff]
    %v3403 = vld [vmem:[%s3382 + $0xa0] sm:$0xff]
    %v3404 = vld [vmem:[%s3382 + $0xa8] sm:$0xff]
    %v3405 = vld [vmem:[%s3382 + $0xb0] sm:$0xff]
    %v3406 = vld [vmem:[%s3382 + $0xb8] sm:$0xff]
    %v3407 = vld [vmem:[%s3382 + $0xc0] sm:$0xff]
    %v3408 = vld [vmem:[%s3382 + $0xc8] sm:$0xff]
    %v3409 = vld [vmem:[%s3382 + $0xd0] sm:$0xff]
    %v3410 = vld [vmem:[%s3382 + $0xd8] sm:$0xff]
    %v3411 = vld [vmem:[%s3382 + $0xe0] sm:$0xff]
    %v3412 = vld [vmem:[%s3382 + $0xe8] sm:$0xff]
    %v3413 = vld [vmem:[%s3382 + $0xf0] sm:$0xff]
    %v3414 = vld [vmem:[%s3382 + $0xf8] sm:$0xff]
    %v3415 = vld [vmem:[%s3382 + $0x100] sm:$0xff]
    %v3416 = vld [vmem:[%s3382 + $0x108] sm:$0xff]
    %v3417 = vld [vmem:[%s3382 + $0x110] sm:$0xff]
    %v3418 = vld [vmem:[%s3382 + $0x118] sm:$0xff]
    %v3419 = vld [vmem:[%s3382 + $0x120] sm:$0xff]
    %v3420 = vld [vmem:[%s3382 + $0x128] sm:$0xff]
    %v3421 = vld [vmem:[%s3382 + $0x130] sm:$0xff]
    %v3422 = vld [vmem:[%s3382 + $0x138] sm:$0xff]
    %v3423 = vld [vmem:[%s3382 + $0x140] sm:$0xff]
    %v3424 = vld [vmem:[%s3382 + $0x148] sm:$0xff]
    %v3425 = vld [vmem:[%s3382 + $0x150] sm:$0xff]
    %v3426 = vld [vmem:[%s3382 + $0x158] sm:$0xff]
    %v3427 = vld [vmem:[%s3382 + $0x160] sm:$0xff]
    %v3428 = vld [vmem:[%s3382 + $0x168] sm:$0xff]
    %v3429 = vld [vmem:[%s3382 + $0x170] sm:$0xff]
    %v3430 = vld [vmem:[%s3382 + $0x178] sm:$0xff]
    %v3431 = vld [vmem:[%s3382 + $0x180] sm:$0xff]
    %v3432 = vld [vmem:[%s3382 + $0x188] sm:$0xff]
    %v3433 = vld [vmem:[%s3382 + $0x190] sm:$0xff]
    %v3434 = vld [vmem:[%s3382 + $0x198] sm:$0xff]
    %v3435 = vld [vmem:[%s4 + $0x6] sm:$0x1]
    %v3436 = vlaneseq
    %v3437 = vshrl.u32 %v3436, 7
    %v3438 = vsub.s32 0, %v3437
    %v3439 = vrot.slane %v3435, %v3438
    %v3441 = vsel %vm374, %v3192, 0
    %v3444 = vsel %vm374, %v3231, 0
    %v3447 = vsel %vm374, %v3190, 0
    %v3450 = vsel %vm374, %v3230, 0
    %3452 = vmatprep.subr.mxu0 0.0
    %3453 = vmatpush1.msra.mxu0 %v3398
    %3454 = vmatprep.subr.mxu0 0.0
    %3455 = vmatpush1.msra.mxu0 %v3397
    %3456 = vmatprep.subr.mxu0 0.0
    %3457 = vmatpush1.msra.mxu0 %v3396
    %3458 = vmatprep.subr.mxu0 0.0
    %3459 = vmatpush1.msra.mxu0 %v3395
    %3460 = vmatprep.subr.mxu0 0.0
    %3461 = vmatpush1.msra.mxu0 %v3394
    %3462 = vmatprep.subr.mxu0 0.0
    %3463 = vmatpush1.msra.mxu0 %v3393
    %3464 = vmatprep.subr.mxu0 0.0
    %3465 = vmatpush1.msra.mxu0 %v3392
    %3466 = vmatprep.subr.mxu0 0.0
    %3467 = vmatpush1.msra.mxu0 %v3391
    %3468 = vmatprep.subr.mxu0 0.0
    %3469 = vmatpush1.msra.mxu0 %v3390
    %3470 = vmatprep.subr.mxu0 0.0
    %3471 = vmatpush1.msra.mxu0 %v3389
    %3472 = vmatprep.subr.mxu0 0.0
    %3473 = vmatpush1.msra.mxu0 %v3388
    %3474 = vmatprep.subr.mxu0 0.0
    %3475 = vmatpush1.msra.mxu0 %v3387
    %3476 = vmatprep.subr.mxu0 0.0
    %3477 = vmatpush1.msra.mxu0 %v3386
    %3478 = vmatprep.subr.mxu0 0.0
    %3479 = vmatpush1.msra.mxu0 %v3385
    %3480 = vmatprep.subr.mxu0 0.0
    %3481 = vmatpush1.msra.mxu0 %v3384
    %3482 = vmatprep.subr.mxu0 0.0
    %3483 = vmatpush1.msra.mxu0 %v3383
    %3484 = vmatprep.subr.mxu0 0.0
    %3485 = vmatpush2.msra.mxu0 %v3414
    %3486 = vmatprep.subr.mxu0 0.0
    %3487 = vmatpush2.msra.mxu0 %v3413
    %3488 = vmatprep.subr.mxu0 0.0
    %3489 = vmatpush2.msra.mxu0 %v3412
    %3490 = vmatprep.subr.mxu0 0.0
    %3491 = vmatpush2.msra.mxu0 %v3411
    %3492 = vmatprep.subr.mxu0 0.0
    %3493 = vmatpush2.msra.mxu0 %v3410
    %3494 = vmatprep.subr.mxu0 0.0
    %3495 = vmatpush2.msra.mxu0 %v3409
    %3496 = vmatprep.subr.mxu0 0.0
    %3497 = vmatpush2.msra.mxu0 %v3408
    %3498 = vmatprep.subr.mxu0 0.0
    %3499 = vmatpush2.msra.mxu0 %v3407
    %3500 = vmatprep.subr.mxu0 0.0
    %3501 = vmatpush2.msra.mxu0 %v3406
    %3502 = vmatprep.subr.mxu0 0.0
    %3503 = vmatpush2.msra.mxu0 %v3405
    %3504 = vmatprep.subr.mxu0 0.0
    %3505 = vmatpush2.msra.mxu0 %v3404
    %3506 = vmatprep.subr.mxu0 0.0
    %3507 = vmatpush2.msra.mxu0 %v3403
    %3508 = vmatprep.subr.mxu0 0.0
    %3509 = vmatpush2.msra.mxu0 %v3402
    %3510 = vmatprep.subr.mxu0 0.0
    %3511 = vmatpush2.msra.mxu0 %v3401
    %3512 = vmatprep.subr.mxu0 0.0
    %3513 = vmatpush2.msra.mxu0 %v3400
    %3514 = vmatprep.subr.mxu0 0.0
    %3515 = vmatpush2.msra.mxu0 %v3399
    %3516 = vmatprep.mubr.f32.mxu0 %v3372
    %3517 = vmatmul.mubr.f32.gmra.mxu0 %v3360
    %v3518 = vpop.f32.mrf.mxu0
    %v3519 = vadd.f32 %v3439, %v3518
    %v3520 = vpop.f32.mrf.mxu0
    %3521 = vmatprep.mubr.f32.mxu0 %v3373
    %3522 = vmatmul.mubr.f32.gmra.mxu0 %v3361
    %v3523 = vpop.f32.mrf.mxu0
    %v3524 = vadd.f32 %v3439, %v3523
    %v3525 = vpop.f32.mrf.mxu0
    %3526 = vmatprep.mubr.f32.mxu0 %v3374
    %3527 = vmatmul.mubr.f32.gmra.mxu0 %v3362
    %v3528 = vpop.f32.mrf.mxu0
    %v3529 = vadd.f32 %v3439, %v3528
    %v3530 = vpop.f32.mrf.mxu0
    %3531 = vmatprep.mubr.f32.mxu0 %v3375
    %3532 = vmatmul.mubr.f32.gmra.mxu0 %v3363
    %v3533 = vpop.f32.mrf.mxu0
    %v3534 = vadd.f32 %v3439, %v3533
    %v3535 = vpop.f32.mrf.mxu0
    %3536 = vdwg.mxu0
    %3537 = vmatprep.subr.mxu0 0.0
    %3538 = vmatpush1.msra.mxu0 %v3430
    %3539 = vmatprep.subr.mxu0 0.0
    %3540 = vmatpush1.msra.mxu0 %v3429
    %3541 = vmatprep.subr.mxu0 0.0
    %3542 = vmatpush1.msra.mxu0 %v3428
    %3543 = vmatprep.subr.mxu0 0.0
    %3544 = vmatpush1.msra.mxu0 %v3427
    %3545 = vmatprep.subr.mxu0 0.0
    %3546 = vmatpush1.msra.mxu0 %v3426
    %3547 = vmatprep.subr.mxu0 0.0
    %3548 = vmatpush1.msra.mxu0 %v3425
    %3549 = vmatprep.subr.mxu0 0.0
    %3550 = vmatpush1.msra.mxu0 %v3424
    %3551 = vmatprep.subr.mxu0 0.0
    %3552 = vmatpush1.msra.mxu0 %v3423
    %3553 = vmatprep.subr.mxu0 0.0
    %3554 = vmatpush1.msra.mxu0 %v3422
    %3555 = vmatprep.subr.mxu0 0.0
    %3556 = vmatpush1.msra.mxu0 %v3421
    %3557 = vmatprep.subr.mxu0 0.0
    %3558 = vmatpush1.msra.mxu0 %v3420
    %3559 = vmatprep.subr.mxu0 0.0
    %3560 = vmatpush1.msra.mxu0 %v3419
    %3561 = vmatprep.subr.mxu0 0.0
    %3562 = vmatpush1.msra.mxu0 %v3418
    %3563 = vmatprep.subr.mxu0 0.0
    %3564 = vmatpush1.msra.mxu0 %v3417
    %3565 = vmatprep.subr.mxu0 0.0
    %3566 = vmatpush1.msra.mxu0 %v3416
    %3567 = vmatprep.subr.mxu0 0.0
    %3568 = vmatpush1.msra.mxu0 %v3415
    %3569 = vmatprep.subr.mxu0 0.0
    %3570 = vmatpush2.msra.mxu0 0.0
    %3571 = vmatprep.subr.mxu0 0.0
    %3572 = vmatpush2.msra.mxu0 0.0
    %3573 = vmatprep.subr.mxu0 0.0
    %3574 = vmatpush2.msra.mxu0 0.0
    %3575 = vmatprep.subr.mxu0 0.0
    %3576 = vmatpush2.msra.mxu0 0.0
    %3577 = vmatprep.subr.mxu0 0.0
    %3578 = vmatpush2.msra.mxu0 0.0
    %3579 = vmatprep.subr.mxu0 0.0
    %3580 = vmatpush2.msra.mxu0 0.0
    %3581 = vmatprep.subr.mxu0 0.0
    %3582 = vmatpush2.msra.mxu0 0.0
    %3583 = vmatprep.subr.mxu0 0.0
    %3584 = vmatpush2.msra.mxu0 0.0
    %3585 = vmatprep.subr.mxu0 0.0
    %3586 = vmatpush2.msra.mxu0 0.0
    %3587 = vmatprep.subr.mxu0 0.0
    %3588 = vmatpush2.msra.mxu0 0.0
    %3589 = vmatprep.subr.mxu0 0.0
    %3590 = vmatpush2.msra.mxu0 0.0
    %3591 = vmatprep.subr.mxu0 0.0
    %3592 = vmatpush2.msra.mxu0 0.0
    %3593 = vmatprep.subr.mxu0 0.0
    %3594 = vmatpush2.msra.mxu0 %v3434
    %3595 = vmatprep.subr.mxu0 0.0
    %3596 = vmatpush2.msra.mxu0 %v3433
    %3597 = vmatprep.subr.mxu0 0.0
    %3598 = vmatpush2.msra.mxu0 %v3432
    %3599 = vmatprep.subr.mxu0 0.0
    %3600 = vmatpush2.msra.mxu0 %v3431
    %3601 = vmatprep.mubr.f32.mxu0 %v3441
    %3602 = vmatmul.mubr.f32.gmra.mxu0 %v3361
    %v3603 = vpop.f32.mrf.mxu0
    %v3604 = vadd.f32 %v3519, %v3603
    %v3605 = vpop.f32.mrf.mxu0
    %3606 = vmatprep.mubr.f32.mxu0 %v3444
    %3607 = vmatmul.mubr.f32.gmra.mxu0 %v3380
    %v3608 = vpop.f32.mrf.mxu0
    %v3609 = vadd.f32 %v3524, %v3608
    %v3610 = vpop.f32.mrf.mxu0
    %3611 = vmatprep.mubr.f32.mxu0 %v3447
    %3612 = vmatmul.mubr.f32.gmra.mxu0 %v3363
    %v3613 = vpop.f32.mrf.mxu0
    %v3614 = vadd.f32 %v3529, %v3613
    %v3615 = vpop.f32.mrf.mxu0
    %3616 = vmatprep.mubr.f32.mxu0 %v3450
    %3617 = vmatmul.mubr.f32.gmra.mxu0 %v3381
    %v3618 = vpop.f32.mrf.mxu0
    %v3619 = vadd.f32 %v3534, %v3618
    %v3620 = vpop.f32.mrf.mxu0
    %3621 = vdwg.mxu0
    %v3622 = vmax.f32 %v3604, 0.0
    %v3623 = vmax.f32 %v3609, 0.0
    %v3624 = vmax.f32 %v3614, 0.0
    %v3625 = vmax.f32 %v3619, 0.0
    %v3630 = vrot.slane %v3622, 2
    %v3631 = vrot.slane %v3623, 2
    %v3632 = vsel %vm150, %v3630, %v3631
    %v3633 = vrot.slane %v3624, 2
    %v3634 = vrot.slane %v3625, 2
    %v3635 = vsel %vm150, %v3633, %v3634
    %v3642 = vsel %vm150, 0.0, %v3630
    %v3643 = vsel %vm150, 0.0, %v3633
    %v3644 = vsel %vm150, %v3631, 0.0
    %v3645 = vsel %vm150, %v3634, 0.0
    %v3646 = vrot.slane %v3642, 1
    %v3647 = vrot.slane %v3632, 1
    %v3648 = vrot.slane %v3644, 1
    %v3649 = vrot.slane %v3643, 1
    %v3650 = vrot.slane %v3635, 1
    %v3651 = vrot.slane %v3645, 1
    %v3652 = vsel %vm175, %v3650, %v3651
    %v3653 = vsel %vm175, %v3649, %v3650
    %v3654 = vsel %vm175, %v3647, %v3648
    %v3655 = vsel %vm175, %v3646, %v3647
    %v3656 = vrot.slane %v3642, 2
    %v3657 = vrot.slane %v3632, 2
    %v3658 = vrot.slane %v3644, 2
    %v3659 = vrot.slane %v3643, 2
    %v3660 = vrot.slane %v3635, 2
    %v3661 = vrot.slane %v3645, 2
    %v3662 = vsel %vm186, %v3660, %v3661
    %v3663 = vsel %vm186, %v3659, %v3660
    %v3664 = vsel %vm186, %v3657, %v3658
    %v3665 = vsel %vm186, %v3656, %v3657
    %v3666 = vrot.slane %v3642, 3
    %v3667 = vrot.slane %v3632, 3
    %v3668 = vrot.slane %v3644, 3
    %v3669 = vrot.slane %v3643, 3
    %v3670 = vrot.slane %v3635, 3
    %v3671 = vrot.slane %v3645, 3
    %v3672 = vsel %vm197, %v3670, %v3671
    %v3673 = vsel %vm197, %v3669, %v3670
    %v3674 = vsel %vm197, %v3667, %v3668
    %v3675 = vsel %vm197, %v3666, %v3667
    %v3676 = vrot.slane %v3642, 4
    %v3677 = vrot.slane %v3632, 4
    %v3678 = vrot.slane %v3644, 4
    %v3679 = vrot.slane %v3643, 4
    %v3680 = vrot.slane %v3635, 4
    %v3681 = vrot.slane %v3645, 4
    %v3682 = vsel %vm208, %v3680, %v3681
    %v3683 = vsel %vm208, %v3679, %v3680
    %v3684 = vsel %vm208, %v3677, %v3678
    %v3685 = vsel %vm208, %v3676, %v3677
    %v3686 = vrot.slane %v3642, 5
    %v3687 = vrot.slane %v3632, 5
    %v3688 = vrot.slane %v3644, 5
    %v3689 = vrot.slane %v3643, 5
    %v3690 = vrot.slane %v3635, 5
    %v3691 = vrot.slane %v3645, 5
    %v3692 = vsel %vm219, %v3690, %v3691
    %v3693 = vsel %vm219, %v3689, %v3690
    %v3694 = vsel %vm219, %v3687, %v3688
    %v3695 = vsel %vm219, %v3686, %v3687
    %v3696 = vrot.slane %v3642, 6
    %v3697 = vrot.slane %v3632, 6
    %v3698 = vrot.slane %v3644, 6
    %v3699 = vrot.slane %v3643, 6
    %v3700 = vrot.slane %v3635, 6
    %v3701 = vrot.slane %v3645, 6
    %v3702 = vsel %vm230, %v3700, %v3701
    %v3703 = vsel %vm230, %v3699, %v3700
    %v3704 = vsel %vm230, %v3697, %v3698
    %v3705 = vsel %vm230, %v3696, %v3697
    %v3706 = vrot.slane %v3642, 7
    %v3707 = vrot.slane %v3632, 7
    %v3708 = vrot.slane %v3644, 7
    %v3709 = vrot.slane %v3643, 7
    %v3710 = vrot.slane %v3635, 7
    %v3711 = vrot.slane %v3645, 7
    %v3712 = vsel %vm241, %v3710, %v3711
    %v3713 = vsel %vm241, %v3709, %v3710
    %v3714 = vsel %vm241, %v3707, %v3708
    %v3715 = vsel %vm241, %v3706, %v3707
    %v3716 = vsel %vm175, %v3651, 0.0
    %v3717 = vsel %vm175, %v3648, 0.0
    %v3718 = vsel %vm186, %v3661, 0.0
    %v3719 = vsel %vm186, %v3658, 0.0
    %v3720 = vsel %vm197, %v3671, 0.0
    %v3721 = vsel %vm197, %v3668, 0.0
    %v3722 = vsel %vm208, %v3681, 0.0
    %v3723 = vsel %vm208, %v3678, 0.0
    %3728 = vrot.lane.b32.xlu0 %v3655, 32
    %v3729 = vpop.permute.xlu0 %3728
    %3730 = vrot.lane.b32.xlu0 %v3654, 32
    %v3731 = vpop.permute.xlu0 %3730
    %3732 = vrot.lane.b32.xlu0 %v3653, 32
    %v3733 = vpop.permute.xlu0 %3732
    %3734 = vrot.lane.b32.xlu0 %v3652, 32
    %v3735 = vpop.permute.xlu0 %3734
    %3744 = vrot.lane.b32.xlu0 %v3665, 64
    %v3745 = vpop.permute.xlu0 %3744
    %3746 = vrot.lane.b32.xlu0 %v3664, 64
    %v3747 = vpop.permute.xlu0 %3746
    %3748 = vrot.lane.b32.xlu0 %v3663, 64
    %v3749 = vpop.permute.xlu0 %3748
    %3750 = vrot.lane.b32.xlu0 %v3662, 64
    %v3751 = vpop.permute.xlu0 %3750
    %3760 = vrot.lane.b32.xlu0 %v3675, 96
    %v3761 = vpop.permute.xlu0 %3760
    %3762 = vrot.lane.b32.xlu0 %v3674, 96
    %v3763 = vpop.permute.xlu0 %3762
    %3764 = vrot.lane.b32.xlu0 %v3673, 96
    %v3765 = vpop.permute.xlu0 %3764
    %3766 = vrot.lane.b32.xlu0 %v3672, 96
    %v3767 = vpop.permute.xlu0 %3766
    %3776 = vrot.lane.b32.xlu0 %v3695, 32
    %v3777 = vpop.permute.xlu0 %3776
    %3778 = vrot.lane.b32.xlu0 %v3694, 32
    %v3779 = vpop.permute.xlu0 %3778
    %3780 = vrot.lane.b32.xlu0 %v3693, 32
    %v3781 = vpop.permute.xlu0 %3780
    %3782 = vrot.lane.b32.xlu0 %v3692, 32
    %v3783 = vpop.permute.xlu0 %3782
    %3792 = vrot.lane.b32.xlu0 %v3705, 64
    %v3793 = vpop.permute.xlu0 %3792
    %3794 = vrot.lane.b32.xlu0 %v3704, 64
    %v3795 = vpop.permute.xlu0 %3794
    %3796 = vrot.lane.b32.xlu0 %v3703, 64
    %v3797 = vpop.permute.xlu0 %3796
    %3798 = vrot.lane.b32.xlu0 %v3702, 64
    %v3799 = vpop.permute.xlu0 %3798
    %3808 = vrot.lane.b32.xlu0 %v3715, 96
    %v3809 = vpop.permute.xlu0 %3808
    %3810 = vrot.lane.b32.xlu0 %v3714, 96
    %v3811 = vpop.permute.xlu0 %3810
    %3812 = vrot.lane.b32.xlu0 %v3713, 96
    %v3813 = vpop.permute.xlu0 %3812
    %3814 = vrot.lane.b32.xlu0 %v3712, 96
    %v3815 = vpop.permute.xlu0 %3814
    %3822 = vrot.lane.b32.xlu0 %v3717, 32
    %v3823 = vpop.permute.xlu0 %3822
    %3824 = vrot.lane.b32.xlu0 %v3716, 32
    %v3825 = vpop.permute.xlu0 %3824
    %3830 = vrot.lane.b32.xlu0 %v3719, 64
    %v3831 = vpop.permute.xlu0 %3830
    %3832 = vrot.lane.b32.xlu0 %v3718, 64
    %v3833 = vpop.permute.xlu0 %3832
    %3838 = vrot.lane.b32.xlu0 %v3721, 96
    %v3839 = vpop.permute.xlu0 %3838
    %3840 = vrot.lane.b32.xlu0 %v3720, 96
    %v3841 = vpop.permute.xlu0 %3840
    %v3844 = vsel %vm374, %v3642, %v3729
    %v3845 = vsel %vm374, %v3632, %v3731
    %v3846 = vsel %vm374, %v3643, %v3733
    %v3847 = vsel %vm374, %v3635, %v3735
    %v3848 = vsel %vm379, %v3844, %v3745
    %v3849 = vsel %vm379, %v3845, %v3747
    %v3850 = vsel %vm379, %v3846, %v3749
    %v3851 = vsel %vm379, %v3847, %v3751
    %v3852 = vsel %vm384, %v3848, %v3761
    %v3853 = vsel %vm384, %v3849, %v3763
    %v3854 = vsel %vm384, %v3850, %v3765
    %v3855 = vsel %vm384, %v3851, %v3767
    %v3856 = vsel %vm374, %v3685, %v3777
    %v3857 = vsel %vm374, %v3684, %v3779
    %v3858 = vsel %vm374, %v3683, %v3781
    %v3859 = vsel %vm374, %v3682, %v3783
    %v3860 = vsel %vm379, %v3856, %v3793
    %v3861 = vsel %vm379, %v3857, %v3795
    %v3862 = vsel %vm379, %v3858, %v3797
    %v3863 = vsel %vm379, %v3859, %v3799
    %v3864 = vsel %vm384, %v3860, %v3809
    %v3865 = vsel %vm384, %v3861, %v3811
    %v3866 = vsel %vm384, %v3862, %v3813
    %v3867 = vsel %vm384, %v3863, %v3815
    %v3868 = vsel %vm374, %v3644, %v3823
    %v3869 = vsel %vm374, %v3645, %v3825
    %v3870 = vsel %vm379, %v3868, %v3831
    %v3871 = vsel %vm379, %v3869, %v3833
    %v3872 = vsel %vm384, %v3870, %v3839
    %v3873 = vsel %vm384, %v3871, %v3841
    %s3874 = scalar_lea.vmem %s3, 2912
    %v3875 = vld [vmem:[%s3874] sm:$0xff]
    %v3876 = vld [vmem:[%s3874 + $0x8] sm:$0xff]
    %v3877 = vld [vmem:[%s3874 + $0x10] sm:$0xff]
    %v3878 = vld [vmem:[%s3874 + $0x18] sm:$0xff]
    %v3879 = vld [vmem:[%s3874 + $0x20] sm:$0xff]
    %v3880 = vld [vmem:[%s3874 + $0x28] sm:$0xff]
    %v3881 = vld [vmem:[%s3874 + $0x30] sm:$0xff]
    %v3882 = vld [vmem:[%s3874 + $0x38] sm:$0xff]
    %v3883 = vld [vmem:[%s3874 + $0x40] sm:$0xff]
    %v3884 = vld [vmem:[%s3874 + $0x48] sm:$0xff]
    %v3885 = vld [vmem:[%s3874 + $0x50] sm:$0xff]
    %v3886 = vld [vmem:[%s3874 + $0x58] sm:$0xff]
    %v3887 = vld [vmem:[%s3874 + $0x60] sm:$0xff]
    %v3888 = vld [vmem:[%s3874 + $0x68] sm:$0xff]
    %v3889 = vld [vmem:[%s3874 + $0x70] sm:$0xff]
    %v3890 = vld [vmem:[%s3874 + $0x78] sm:$0xff]
    %v3891 = vld [vmem:[%s3874 + $0x80] sm:$0xff]
    %v3892 = vld [vmem:[%s3874 + $0x88] sm:$0xff]
    %v3893 = vld [vmem:[%s3874 + $0x90] sm:$0xff]
    %v3894 = vld [vmem:[%s3874 + $0x98] sm:$0xff]
    %v3895 = vld [vmem:[%s3874 + $0xa0] sm:$0xff]
    %v3896 = vld [vmem:[%s3874 + $0xa8] sm:$0xff]
    %v3897 = vld [vmem:[%s3874 + $0xb0] sm:$0xff]
    %v3898 = vld [vmem:[%s3874 + $0xb8] sm:$0xff]
    %v3899 = vld [vmem:[%s3874 + $0xc0] sm:$0xff]
    %v3900 = vld [vmem:[%s3874 + $0xc8] sm:$0xff]
    %v3901 = vld [vmem:[%s3874 + $0xd0] sm:$0xff]
    %v3902 = vld [vmem:[%s3874 + $0xd8] sm:$0xff]
    %v3903 = vld [vmem:[%s3874 + $0xe0] sm:$0xff]
    %v3904 = vld [vmem:[%s3874 + $0xe8] sm:$0xff]
    %v3905 = vld [vmem:[%s3874 + $0xf0] sm:$0xff]
    %v3906 = vld [vmem:[%s3874 + $0xf8] sm:$0xff]
    %v3907 = vld [vmem:[%s3874 + $0x100] sm:$0xff]
    %v3908 = vld [vmem:[%s3874 + $0x108] sm:$0xff]
    %v3909 = vld [vmem:[%s3874 + $0x110] sm:$0xff]
    %v3910 = vld [vmem:[%s3874 + $0x118] sm:$0xff]
    %v3911 = vld [vmem:[%s3874 + $0x120] sm:$0xff]
    %v3912 = vld [vmem:[%s3874 + $0x128] sm:$0xff]
    %v3913 = vld [vmem:[%s3874 + $0x130] sm:$0xff]
    %v3914 = vld [vmem:[%s3874 + $0x138] sm:$0xff]
    %v3915 = vld [vmem:[%s3874 + $0x140] sm:$0xff]
    %v3916 = vld [vmem:[%s3874 + $0x148] sm:$0xff]
    %v3917 = vld [vmem:[%s3874 + $0x150] sm:$0xff]
    %v3918 = vld [vmem:[%s3874 + $0x158] sm:$0xff]
    %v3919 = vld [vmem:[%s3874 + $0x160] sm:$0xff]
    %v3920 = vld [vmem:[%s3874 + $0x168] sm:$0xff]
    %v3921 = vld [vmem:[%s3874 + $0x170] sm:$0xff]
    %v3922 = vld [vmem:[%s3874 + $0x178] sm:$0xff]
    %v3923 = vld [vmem:[%s3874 + $0x180] sm:$0xff]
    %v3924 = vld [vmem:[%s3874 + $0x188] sm:$0xff]
    %v3925 = vld [vmem:[%s3874 + $0x190] sm:$0xff]
    %v3926 = vld [vmem:[%s3874 + $0x198] sm:$0xff]
    %v3927 = vld [vmem:[%s4 + $0x7] sm:$0x1]
    %v3928 = vlaneseq
    %v3929 = vshrl.u32 %v3928, 7
    %v3930 = vsub.s32 0, %v3929
    %v3931 = vrot.slane %v3927, %v3930
    %v3933 = vsel %vm374, %v3684, 0
    %v3936 = vsel %vm374, %v3723, 0
    %v3939 = vsel %vm374, %v3682, 0
    %v3942 = vsel %vm374, %v3722, 0
    %3944 = vmatprep.subr.mxu0 0.0
    %3945 = vmatpush1.msra.mxu0 %v3890
    %3946 = vmatprep.subr.mxu0 0.0
    %3947 = vmatpush1.msra.mxu0 %v3889
    %3948 = vmatprep.subr.mxu0 0.0
    %3949 = vmatpush1.msra.mxu0 %v3888
    %3950 = vmatprep.subr.mxu0 0.0
    %3951 = vmatpush1.msra.mxu0 %v3887
    %3952 = vmatprep.subr.mxu0 0.0
    %3953 = vmatpush1.msra.mxu0 %v3886
    %3954 = vmatprep.subr.mxu0 0.0
    %3955 = vmatpush1.msra.mxu0 %v3885
    %3956 = vmatprep.subr.mxu0 0.0
    %3957 = vmatpush1.msra.mxu0 %v3884
    %3958 = vmatprep.subr.mxu0 0.0
    %3959 = vmatpush1.msra.mxu0 %v3883
    %3960 = vmatprep.subr.mxu0 0.0
    %3961 = vmatpush1.msra.mxu0 %v3882
    %3962 = vmatprep.subr.mxu0 0.0
    %3963 = vmatpush1.msra.mxu0 %v3881
    %3964 = vmatprep.subr.mxu0 0.0
    %3965 = vmatpush1.msra.mxu0 %v3880
    %3966 = vmatprep.subr.mxu0 0.0
    %3967 = vmatpush1.msra.mxu0 %v3879
    %3968 = vmatprep.subr.mxu0 0.0
    %3969 = vmatpush1.msra.mxu0 %v3878
    %3970 = vmatprep.subr.mxu0 0.0
    %3971 = vmatpush1.msra.mxu0 %v3877
    %3972 = vmatprep.subr.mxu0 0.0
    %3973 = vmatpush1.msra.mxu0 %v3876
    %3974 = vmatprep.subr.mxu0 0.0
    %3975 = vmatpush1.msra.mxu0 %v3875
    %3976 = vmatprep.subr.mxu0 0.0
    %3977 = vmatpush2.msra.mxu0 %v3906
    %3978 = vmatprep.subr.mxu0 0.0
    %3979 = vmatpush2.msra.mxu0 %v3905
    %3980 = vmatprep.subr.mxu0 0.0
    %3981 = vmatpush2.msra.mxu0 %v3904
    %3982 = vmatprep.subr.mxu0 0.0
    %3983 = vmatpush2.msra.mxu0 %v3903
    %3984 = vmatprep.subr.mxu0 0.0
    %3985 = vmatpush2.msra.mxu0 %v3902
    %3986 = vmatprep.subr.mxu0 0.0
    %3987 = vmatpush2.msra.mxu0 %v3901
    %3988 = vmatprep.subr.mxu0 0.0
    %3989 = vmatpush2.msra.mxu0 %v3900
    %3990 = vmatprep.subr.mxu0 0.0
    %3991 = vmatpush2.msra.mxu0 %v3899
    %3992 = vmatprep.subr.mxu0 0.0
    %3993 = vmatpush2.msra.mxu0 %v3898
    %3994 = vmatprep.subr.mxu0 0.0
    %3995 = vmatpush2.msra.mxu0 %v3897
    %3996 = vmatprep.subr.mxu0 0.0
    %3997 = vmatpush2.msra.mxu0 %v3896
    %3998 = vmatprep.subr.mxu0 0.0
    %3999 = vmatpush2.msra.mxu0 %v3895
    %4000 = vmatprep.subr.mxu0 0.0
    %4001 = vmatpush2.msra.mxu0 %v3894
    %4002 = vmatprep.subr.mxu0 0.0
    %4003 = vmatpush2.msra.mxu0 %v3893
    %4004 = vmatprep.subr.mxu0 0.0
    %4005 = vmatpush2.msra.mxu0 %v3892
    %4006 = vmatprep.subr.mxu0 0.0
    %4007 = vmatpush2.msra.mxu0 %v3891
    %4008 = vmatprep.mubr.f32.mxu0 %v3864
    %4009 = vmatmul.mubr.f32.gmra.mxu0 %v3852
    %v4010 = vpop.f32.mrf.mxu0
    %v4011 = vadd.f32 %v3931, %v4010
    %v4012 = vpop.f32.mrf.mxu0
    %4013 = vmatprep.mubr.f32.mxu0 %v3865
    %4014 = vmatmul.mubr.f32.gmra.mxu0 %v3853
    %v4015 = vpop.f32.mrf.mxu0
    %v4016 = vadd.f32 %v3931, %v4015
    %v4017 = vpop.f32.mrf.mxu0
    %4018 = vmatprep.mubr.f32.mxu0 %v3866
    %4019 = vmatmul.mubr.f32.gmra.mxu0 %v3854
    %v4020 = vpop.f32.mrf.mxu0
    %v4021 = vadd.f32 %v3931, %v4020
    %v4022 = vpop.f32.mrf.mxu0
    %4023 = vmatprep.mubr.f32.mxu0 %v3867
    %4024 = vmatmul.mubr.f32.gmra.mxu0 %v3855
    %v4025 = vpop.f32.mrf.mxu0
    %v4026 = vadd.f32 %v3931, %v4025
    %v4027 = vpop.f32.mrf.mxu0
    %4028 = vdwg.mxu0
    %4029 = vmatprep.subr.mxu0 0.0
    %4030 = vmatpush1.msra.mxu0 %v3922
    %4031 = vmatprep.subr.mxu0 0.0
    %4032 = vmatpush1.msra.mxu0 %v3921
    %4033 = vmatprep.subr.mxu0 0.0
    %4034 = vmatpush1.msra.mxu0 %v3920
    %4035 = vmatprep.subr.mxu0 0.0
    %4036 = vmatpush1.msra.mxu0 %v3919
    %4037 = vmatprep.subr.mxu0 0.0
    %4038 = vmatpush1.msra.mxu0 %v3918
    %4039 = vmatprep.subr.mxu0 0.0
    %4040 = vmatpush1.msra.mxu0 %v3917
    %4041 = vmatprep.subr.mxu0 0.0
    %4042 = vmatpush1.msra.mxu0 %v3916
    %4043 = vmatprep.subr.mxu0 0.0
    %4044 = vmatpush1.msra.mxu0 %v3915
    %4045 = vmatprep.subr.mxu0 0.0
    %4046 = vmatpush1.msra.mxu0 %v3914
    %4047 = vmatprep.subr.mxu0 0.0
    %4048 = vmatpush1.msra.mxu0 %v3913
    %4049 = vmatprep.subr.mxu0 0.0
    %4050 = vmatpush1.msra.mxu0 %v3912
    %4051 = vmatprep.subr.mxu0 0.0
    %4052 = vmatpush1.msra.mxu0 %v3911
    %4053 = vmatprep.subr.mxu0 0.0
    %4054 = vmatpush1.msra.mxu0 %v3910
    %4055 = vmatprep.subr.mxu0 0.0
    %4056 = vmatpush1.msra.mxu0 %v3909
    %4057 = vmatprep.subr.mxu0 0.0
    %4058 = vmatpush1.msra.mxu0 %v3908
    %4059 = vmatprep.subr.mxu0 0.0
    %4060 = vmatpush1.msra.mxu0 %v3907
    %4061 = vmatprep.subr.mxu0 0.0
    %4062 = vmatpush2.msra.mxu0 0.0
    %4063 = vmatprep.subr.mxu0 0.0
    %4064 = vmatpush2.msra.mxu0 0.0
    %4065 = vmatprep.subr.mxu0 0.0
    %4066 = vmatpush2.msra.mxu0 0.0
    %4067 = vmatprep.subr.mxu0 0.0
    %4068 = vmatpush2.msra.mxu0 0.0
    %4069 = vmatprep.subr.mxu0 0.0
    %4070 = vmatpush2.msra.mxu0 0.0
    %4071 = vmatprep.subr.mxu0 0.0
    %4072 = vmatpush2.msra.mxu0 0.0
    %4073 = vmatprep.subr.mxu0 0.0
    %4074 = vmatpush2.msra.mxu0 0.0
    %4075 = vmatprep.subr.mxu0 0.0
    %4076 = vmatpush2.msra.mxu0 0.0
    %4077 = vmatprep.subr.mxu0 0.0
    %4078 = vmatpush2.msra.mxu0 0.0
    %4079 = vmatprep.subr.mxu0 0.0
    %4080 = vmatpush2.msra.mxu0 0.0
    %4081 = vmatprep.subr.mxu0 0.0
    %4082 = vmatpush2.msra.mxu0 0.0
    %4083 = vmatprep.subr.mxu0 0.0
    %4084 = vmatpush2.msra.mxu0 0.0
    %4085 = vmatprep.subr.mxu0 0.0
    %4086 = vmatpush2.msra.mxu0 %v3926
    %4087 = vmatprep.subr.mxu0 0.0
    %4088 = vmatpush2.msra.mxu0 %v3925
    %4089 = vmatprep.subr.mxu0 0.0
    %4090 = vmatpush2.msra.mxu0 %v3924
    %4091 = vmatprep.subr.mxu0 0.0
    %4092 = vmatpush2.msra.mxu0 %v3923
    %4093 = vmatprep.mubr.f32.mxu0 %v3933
    %4094 = vmatmul.mubr.f32.gmra.mxu0 %v3853
    %v4095 = vpop.f32.mrf.mxu0
    %v4096 = vadd.f32 %v4011, %v4095
    %v4097 = vpop.f32.mrf.mxu0
    %4098 = vmatprep.mubr.f32.mxu0 %v3936
    %4099 = vmatmul.mubr.f32.gmra.mxu0 %v3872
    %v4100 = vpop.f32.mrf.mxu0
    %v4101 = vadd.f32 %v4016, %v4100
    %v4102 = vpop.f32.mrf.mxu0
    %4103 = vmatprep.mubr.f32.mxu0 %v3939
    %4104 = vmatmul.mubr.f32.gmra.mxu0 %v3855
    %v4105 = vpop.f32.mrf.mxu0
    %v4106 = vadd.f32 %v4021, %v4105
    %v4107 = vpop.f32.mrf.mxu0
    %4108 = vmatprep.mubr.f32.mxu0 %v3942
    %4109 = vmatmul.mubr.f32.gmra.mxu0 %v3873
    %v4110 = vpop.f32.mrf.mxu0
    %v4111 = vadd.f32 %v4026, %v4110
    %v4112 = vpop.f32.mrf.mxu0
    %4113 = vdwg.mxu0
    %v4114 = vmul.f32 %v4096, 0.3
    %v4115 = vmul.f32 %v4101, 0.3
    %v4116 = vmul.f32 %v4106, 0.3
    %v4117 = vmul.f32 %v4111, 0.3
    %v4118 = vadd.f32 %v3126, %v4114
    %v4119 = vadd.f32 %v3127, %v4115
    %v4120 = vadd.f32 %v3128, %v4116
    %v4121 = vadd.f32 %v3129, %v4117
    %v4122 = vmax.f32 %v4118, 0.0
    %v4123 = vmax.f32 %v4119, 0.0
    %v4124 = vmax.f32 %v4120, 0.0
    %v4125 = vmax.f32 %v4121, 0.0
    %v4130 = vrot.slane %v4122, 2
    %v4131 = vrot.slane %v4123, 2
    %v4132 = vsel %vm150, %v4130, %v4131
    %v4133 = vrot.slane %v4124, 2
    %v4134 = vrot.slane %v4125, 2
    %v4135 = vsel %vm150, %v4133, %v4134
    %v4142 = vsel %vm150, 0.0, %v4130
    %v4143 = vsel %vm150, 0.0, %v4133
    %v4144 = vsel %vm150, %v4131, 0.0
    %v4145 = vsel %vm150, %v4134, 0.0
    %v4146 = vrot.slane %v4142, 1
    %v4147 = vrot.slane %v4132, 1
    %v4148 = vrot.slane %v4144, 1
    %v4149 = vrot.slane %v4143, 1
    %v4150 = vrot.slane %v4135, 1
    %v4151 = vrot.slane %v4145, 1
    %v4152 = vsel %vm175, %v4150, %v4151
    %v4153 = vsel %vm175, %v4149, %v4150
    %v4154 = vsel %vm175, %v4147, %v4148
    %v4155 = vsel %vm175, %v4146, %v4147
    %v4156 = vrot.slane %v4142, 2
    %v4157 = vrot.slane %v4132, 2
    %v4158 = vrot.slane %v4144, 2
    %v4159 = vrot.slane %v4143, 2
    %v4160 = vrot.slane %v4135, 2
    %v4161 = vrot.slane %v4145, 2
    %v4162 = vsel %vm186, %v4160, %v4161
    %v4163 = vsel %vm186, %v4159, %v4160
    %v4164 = vsel %vm186, %v4157, %v4158
    %v4165 = vsel %vm186, %v4156, %v4157
    %v4166 = vrot.slane %v4142, 3
    %v4167 = vrot.slane %v4132, 3
    %v4168 = vrot.slane %v4144, 3
    %v4169 = vrot.slane %v4143, 3
    %v4170 = vrot.slane %v4135, 3
    %v4171 = vrot.slane %v4145, 3
    %v4172 = vsel %vm197, %v4170, %v4171
    %v4173 = vsel %vm197, %v4169, %v4170
    %v4174 = vsel %vm197, %v4167, %v4168
    %v4175 = vsel %vm197, %v4166, %v4167
    %v4176 = vrot.slane %v4142, 4
    %v4177 = vrot.slane %v4132, 4
    %v4178 = vrot.slane %v4144, 4
    %v4179 = vrot.slane %v4143, 4
    %v4180 = vrot.slane %v4135, 4
    %v4181 = vrot.slane %v4145, 4
    %v4182 = vsel %vm208, %v4180, %v4181
    %v4183 = vsel %vm208, %v4179, %v4180
    %v4184 = vsel %vm208, %v4177, %v4178
    %v4185 = vsel %vm208, %v4176, %v4177
    %v4186 = vrot.slane %v4142, 5
    %v4187 = vrot.slane %v4132, 5
    %v4188 = vrot.slane %v4144, 5
    %v4189 = vrot.slane %v4143, 5
    %v4190 = vrot.slane %v4135, 5
    %v4191 = vrot.slane %v4145, 5
    %v4192 = vsel %vm219, %v4190, %v4191
    %v4193 = vsel %vm219, %v4189, %v4190
    %v4194 = vsel %vm219, %v4187, %v4188
    %v4195 = vsel %vm219, %v4186, %v4187
    %v4196 = vrot.slane %v4142, 6
    %v4197 = vrot.slane %v4132, 6
    %v4198 = vrot.slane %v4144, 6
    %v4199 = vrot.slane %v4143, 6
    %v4200 = vrot.slane %v4135, 6
    %v4201 = vrot.slane %v4145, 6
    %v4202 = vsel %vm230, %v4200, %v4201
    %v4203 = vsel %vm230, %v4199, %v4200
    %v4204 = vsel %vm230, %v4197, %v4198
    %v4205 = vsel %vm230, %v4196, %v4197
    %v4206 = vrot.slane %v4142, 7
    %v4207 = vrot.slane %v4132, 7
    %v4208 = vrot.slane %v4144, 7
    %v4209 = vrot.slane %v4143, 7
    %v4210 = vrot.slane %v4135, 7
    %v4211 = vrot.slane %v4145, 7
    %v4212 = vsel %vm241, %v4210, %v4211
    %v4213 = vsel %vm241, %v4209, %v4210
    %v4214 = vsel %vm241, %v4207, %v4208
    %v4215 = vsel %vm241, %v4206, %v4207
    %v4216 = vsel %vm175, %v4151, 0.0
    %v4217 = vsel %vm175, %v4148, 0.0
    %v4218 = vsel %vm186, %v4161, 0.0
    %v4219 = vsel %vm186, %v4158, 0.0
    %v4220 = vsel %vm197, %v4171, 0.0
    %v4221 = vsel %vm197, %v4168, 0.0
    %v4222 = vsel %vm208, %v4181, 0.0
    %v4223 = vsel %vm208, %v4178, 0.0
    %4228 = vrot.lane.b32.xlu0 %v4155, 32
    %v4229 = vpop.permute.xlu0 %4228
    %4230 = vrot.lane.b32.xlu0 %v4154, 32
    %v4231 = vpop.permute.xlu0 %4230
    %4232 = vrot.lane.b32.xlu0 %v4153, 32
    %v4233 = vpop.permute.xlu0 %4232
    %4234 = vrot.lane.b32.xlu0 %v4152, 32
    %v4235 = vpop.permute.xlu0 %4234
    %4244 = vrot.lane.b32.xlu0 %v4165, 64
    %v4245 = vpop.permute.xlu0 %4244
    %4246 = vrot.lane.b32.xlu0 %v4164, 64
    %v4247 = vpop.permute.xlu0 %4246
    %4248 = vrot.lane.b32.xlu0 %v4163, 64
    %v4249 = vpop.permute.xlu0 %4248
    %4250 = vrot.lane.b32.xlu0 %v4162, 64
    %v4251 = vpop.permute.xlu0 %4250
    %4260 = vrot.lane.b32.xlu0 %v4175, 96
    %v4261 = vpop.permute.xlu0 %4260
    %4262 = vrot.lane.b32.xlu0 %v4174, 96
    %v4263 = vpop.permute.xlu0 %4262
    %4264 = vrot.lane.b32.xlu0 %v4173, 96
    %v4265 = vpop.permute.xlu0 %4264
    %4266 = vrot.lane.b32.xlu0 %v4172, 96
    %v4267 = vpop.permute.xlu0 %4266
    %4276 = vrot.lane.b32.xlu0 %v4195, 32
    %v4277 = vpop.permute.xlu0 %4276
    %4278 = vrot.lane.b32.xlu0 %v4194, 32
    %v4279 = vpop.permute.xlu0 %4278
    %4280 = vrot.lane.b32.xlu0 %v4193, 32
    %v4281 = vpop.permute.xlu0 %4280
    %4282 = vrot.lane.b32.xlu0 %v4192, 32
    %v4283 = vpop.permute.xlu0 %4282
    %4292 = vrot.lane.b32.xlu0 %v4205, 64
    %v4293 = vpop.permute.xlu0 %4292
    %4294 = vrot.lane.b32.xlu0 %v4204, 64
    %v4295 = vpop.permute.xlu0 %4294
    %4296 = vrot.lane.b32.xlu0 %v4203, 64
    %v4297 = vpop.permute.xlu0 %4296
    %4298 = vrot.lane.b32.xlu0 %v4202, 64
    %v4299 = vpop.permute.xlu0 %4298
    %4308 = vrot.lane.b32.xlu0 %v4215, 96
    %v4309 = vpop.permute.xlu0 %4308
    %4310 = vrot.lane.b32.xlu0 %v4214, 96
    %v4311 = vpop.permute.xlu0 %4310
    %4312 = vrot.lane.b32.xlu0 %v4213, 96
    %v4313 = vpop.permute.xlu0 %4312
    %4314 = vrot.lane.b32.xlu0 %v4212, 96
    %v4315 = vpop.permute.xlu0 %4314
    %4322 = vrot.lane.b32.xlu0 %v4217, 32
    %v4323 = vpop.permute.xlu0 %4322
    %4324 = vrot.lane.b32.xlu0 %v4216, 32
    %v4325 = vpop.permute.xlu0 %4324
    %4330 = vrot.lane.b32.xlu0 %v4219, 64
    %v4331 = vpop.permute.xlu0 %4330
    %4332 = vrot.lane.b32.xlu0 %v4218, 64
    %v4333 = vpop.permute.xlu0 %4332
    %4338 = vrot.lane.b32.xlu0 %v4221, 96
    %v4339 = vpop.permute.xlu0 %4338
    %4340 = vrot.lane.b32.xlu0 %v4220, 96
    %v4341 = vpop.permute.xlu0 %4340
    %v4344 = vsel %vm374, %v4142, %v4229
    %v4345 = vsel %vm374, %v4132, %v4231
    %v4346 = vsel %vm374, %v4143, %v4233
    %v4347 = vsel %vm374, %v4135, %v4235
    %v4348 = vsel %vm379, %v4344, %v4245
    %v4349 = vsel %vm379, %v4345, %v4247
    %v4350 = vsel %vm379, %v4346, %v4249
    %v4351 = vsel %vm379, %v4347, %v4251
    %v4352 = vsel %vm384, %v4348, %v4261
    %v4353 = vsel %vm384, %v4349, %v4263
    %v4354 = vsel %vm384, %v4350, %v4265
    %v4355 = vsel %vm384, %v4351, %v4267
    %v4356 = vsel %vm374, %v4185, %v4277
    %v4357 = vsel %vm374, %v4184, %v4279
    %v4358 = vsel %vm374, %v4183, %v4281
    %v4359 = vsel %vm374, %v4182, %v4283
    %v4360 = vsel %vm379, %v4356, %v4293
    %v4361 = vsel %vm379, %v4357, %v4295
    %v4362 = vsel %vm379, %v4358, %v4297
    %v4363 = vsel %vm379, %v4359, %v4299
    %v4364 = vsel %vm384, %v4360, %v4309
    %v4365 = vsel %vm384, %v4361, %v4311
    %v4366 = vsel %vm384, %v4362, %v4313
    %v4367 = vsel %vm384, %v4363, %v4315
    %v4368 = vsel %vm374, %v4144, %v4323
    %v4369 = vsel %vm374, %v4145, %v4325
    %v4370 = vsel %vm379, %v4368, %v4331
    %v4371 = vsel %vm379, %v4369, %v4333
    %v4372 = vsel %vm384, %v4370, %v4339
    %v4373 = vsel %vm384, %v4371, %v4341
    %s4374 = scalar_lea.vmem %s3, 3328
    %v4375 = vld [vmem:[%s4374] sm:$0xff]
    %v4376 = vld [vmem:[%s4374 + $0x8] sm:$0xff]
    %v4377 = vld [vmem:[%s4374 + $0x10] sm:$0xff]
    %v4378 = vld [vmem:[%s4374 + $0x18] sm:$0xff]
    %v4379 = vld [vmem:[%s4374 + $0x20] sm:$0xff]
    %v4380 = vld [vmem:[%s4374 + $0x28] sm:$0xff]
    %v4381 = vld [vmem:[%s4374 + $0x30] sm:$0xff]
    %v4382 = vld [vmem:[%s4374 + $0x38] sm:$0xff]
    %v4383 = vld [vmem:[%s4374 + $0x40] sm:$0xff]
    %v4384 = vld [vmem:[%s4374 + $0x48] sm:$0xff]
    %v4385 = vld [vmem:[%s4374 + $0x50] sm:$0xff]
    %v4386 = vld [vmem:[%s4374 + $0x58] sm:$0xff]
    %v4387 = vld [vmem:[%s4374 + $0x60] sm:$0xff]
    %v4388 = vld [vmem:[%s4374 + $0x68] sm:$0xff]
    %v4389 = vld [vmem:[%s4374 + $0x70] sm:$0xff]
    %v4390 = vld [vmem:[%s4374 + $0x78] sm:$0xff]
    %v4391 = vld [vmem:[%s4374 + $0x80] sm:$0xff]
    %v4392 = vld [vmem:[%s4374 + $0x88] sm:$0xff]
    %v4393 = vld [vmem:[%s4374 + $0x90] sm:$0xff]
    %v4394 = vld [vmem:[%s4374 + $0x98] sm:$0xff]
    %v4395 = vld [vmem:[%s4374 + $0xa0] sm:$0xff]
    %v4396 = vld [vmem:[%s4374 + $0xa8] sm:$0xff]
    %v4397 = vld [vmem:[%s4374 + $0xb0] sm:$0xff]
    %v4398 = vld [vmem:[%s4374 + $0xb8] sm:$0xff]
    %v4399 = vld [vmem:[%s4374 + $0xc0] sm:$0xff]
    %v4400 = vld [vmem:[%s4374 + $0xc8] sm:$0xff]
    %v4401 = vld [vmem:[%s4374 + $0xd0] sm:$0xff]
    %v4402 = vld [vmem:[%s4374 + $0xd8] sm:$0xff]
    %v4403 = vld [vmem:[%s4374 + $0xe0] sm:$0xff]
    %v4404 = vld [vmem:[%s4374 + $0xe8] sm:$0xff]
    %v4405 = vld [vmem:[%s4374 + $0xf0] sm:$0xff]
    %v4406 = vld [vmem:[%s4374 + $0xf8] sm:$0xff]
    %v4407 = vld [vmem:[%s4374 + $0x100] sm:$0xff]
    %v4408 = vld [vmem:[%s4374 + $0x108] sm:$0xff]
    %v4409 = vld [vmem:[%s4374 + $0x110] sm:$0xff]
    %v4410 = vld [vmem:[%s4374 + $0x118] sm:$0xff]
    %v4411 = vld [vmem:[%s4374 + $0x120] sm:$0xff]
    %v4412 = vld [vmem:[%s4374 + $0x128] sm:$0xff]
    %v4413 = vld [vmem:[%s4374 + $0x130] sm:$0xff]
    %v4414 = vld [vmem:[%s4374 + $0x138] sm:$0xff]
    %v4415 = vld [vmem:[%s4374 + $0x140] sm:$0xff]
    %v4416 = vld [vmem:[%s4374 + $0x148] sm:$0xff]
    %v4417 = vld [vmem:[%s4374 + $0x150] sm:$0xff]
    %v4418 = vld [vmem:[%s4374 + $0x158] sm:$0xff]
    %v4419 = vld [vmem:[%s4374 + $0x160] sm:$0xff]
    %v4420 = vld [vmem:[%s4374 + $0x168] sm:$0xff]
    %v4421 = vld [vmem:[%s4374 + $0x170] sm:$0xff]
    %v4422 = vld [vmem:[%s4374 + $0x178] sm:$0xff]
    %v4423 = vld [vmem:[%s4374 + $0x180] sm:$0xff]
    %v4424 = vld [vmem:[%s4374 + $0x188] sm:$0xff]
    %v4425 = vld [vmem:[%s4374 + $0x190] sm:$0xff]
    %v4426 = vld [vmem:[%s4374 + $0x198] sm:$0xff]
    %v4427 = vld [vmem:[%s4 + $0x8] sm:$0x1]
    %v4428 = vlaneseq
    %v4429 = vshrl.u32 %v4428, 7
    %v4430 = vsub.s32 0, %v4429
    %v4431 = vrot.slane %v4427, %v4430
    %v4433 = vsel %vm374, %v4184, 0
    %v4436 = vsel %vm374, %v4223, 0
    %v4439 = vsel %vm374, %v4182, 0
    %v4442 = vsel %vm374, %v4222, 0
    %4444 = vmatprep.subr.mxu0 0.0
    %4445 = vmatpush1.msra.mxu0 %v4390
    %4446 = vmatprep.subr.mxu0 0.0
    %4447 = vmatpush1.msra.mxu0 %v4389
    %4448 = vmatprep.subr.mxu0 0.0
    %4449 = vmatpush1.msra.mxu0 %v4388
    %4450 = vmatprep.subr.mxu0 0.0
    %4451 = vmatpush1.msra.mxu0 %v4387
    %4452 = vmatprep.subr.mxu0 0.0
    %4453 = vmatpush1.msra.mxu0 %v4386
    %4454 = vmatprep.subr.mxu0 0.0
    %4455 = vmatpush1.msra.mxu0 %v4385
    %4456 = vmatprep.subr.mxu0 0.0
    %4457 = vmatpush1.msra.mxu0 %v4384
    %4458 = vmatprep.subr.mxu0 0.0
    %4459 = vmatpush1.msra.mxu0 %v4383
    %4460 = vmatprep.subr.mxu0 0.0
    %4461 = vmatpush1.msra.mxu0 %v4382
    %4462 = vmatprep.subr.mxu0 0.0
    %4463 = vmatpush1.msra.mxu0 %v4381
    %4464 = vmatprep.subr.mxu0 0.0
    %4465 = vmatpush1.msra.mxu0 %v4380
    %4466 = vmatprep.subr.mxu0 0.0
    %4467 = vmatpush1.msra.mxu0 %v4379
    %4468 = vmatprep.subr.mxu0 0.0
    %4469 = vmatpush1.msra.mxu0 %v4378
    %4470 = vmatprep.subr.mxu0 0.0
    %4471 = vmatpush1.msra.mxu0 %v4377
    %4472 = vmatprep.subr.mxu0 0.0
    %4473 = vmatpush1.msra.mxu0 %v4376
    %4474 = vmatprep.subr.mxu0 0.0
    %4475 = vmatpush1.msra.mxu0 %v4375
    %4476 = vmatprep.subr.mxu0 0.0
    %4477 = vmatpush2.msra.mxu0 %v4406
    %4478 = vmatprep.subr.mxu0 0.0
    %4479 = vmatpush2.msra.mxu0 %v4405
    %4480 = vmatprep.subr.mxu0 0.0
    %4481 = vmatpush2.msra.mxu0 %v4404
    %4482 = vmatprep.subr.mxu0 0.0
    %4483 = vmatpush2.msra.mxu0 %v4403
    %4484 = vmatprep.subr.mxu0 0.0
    %4485 = vmatpush2.msra.mxu0 %v4402
    %4486 = vmatprep.subr.mxu0 0.0
    %4487 = vmatpush2.msra.mxu0 %v4401
    %4488 = vmatprep.subr.mxu0 0.0
    %4489 = vmatpush2.msra.mxu0 %v4400
    %4490 = vmatprep.subr.mxu0 0.0
    %4491 = vmatpush2.msra.mxu0 %v4399
    %4492 = vmatprep.subr.mxu0 0.0
    %4493 = vmatpush2.msra.mxu0 %v4398
    %4494 = vmatprep.subr.mxu0 0.0
    %4495 = vmatpush2.msra.mxu0 %v4397
    %4496 = vmatprep.subr.mxu0 0.0
    %4497 = vmatpush2.msra.mxu0 %v4396
    %4498 = vmatprep.subr.mxu0 0.0
    %4499 = vmatpush2.msra.mxu0 %v4395
    %4500 = vmatprep.subr.mxu0 0.0
    %4501 = vmatpush2.msra.mxu0 %v4394
    %4502 = vmatprep.subr.mxu0 0.0
    %4503 = vmatpush2.msra.mxu0 %v4393
    %4504 = vmatprep.subr.mxu0 0.0
    %4505 = vmatpush2.msra.mxu0 %v4392
    %4506 = vmatprep.subr.mxu0 0.0
    %4507 = vmatpush2.msra.mxu0 %v4391
    %4508 = vmatprep.mubr.f32.mxu0 %v4364
    %4509 = vmatmul.mubr.f32.gmra.mxu0 %v4352
    %v4510 = vpop.f32.mrf.mxu0
    %v4511 = vadd.f32 %v4431, %v4510
    %v4512 = vpop.f32.mrf.mxu0
    %4513 = vmatprep.mubr.f32.mxu0 %v4365
    %4514 = vmatmul.mubr.f32.gmra.mxu0 %v4353
    %v4515 = vpop.f32.mrf.mxu0
    %v4516 = vadd.f32 %v4431, %v4515
    %v4517 = vpop.f32.mrf.mxu0
    %4518 = vmatprep.mubr.f32.mxu0 %v4366
    %4519 = vmatmul.mubr.f32.gmra.mxu0 %v4354
    %v4520 = vpop.f32.mrf.mxu0
    %v4521 = vadd.f32 %v4431, %v4520
    %v4522 = vpop.f32.mrf.mxu0
    %4523 = vmatprep.mubr.f32.mxu0 %v4367
    %4524 = vmatmul.mubr.f32.gmra.mxu0 %v4355
    %v4525 = vpop.f32.mrf.mxu0
    %v4526 = vadd.f32 %v4431, %v4525
    %v4527 = vpop.f32.mrf.mxu0
    %4528 = vdwg.mxu0
    %4529 = vmatprep.subr.mxu0 0.0
    %4530 = vmatpush1.msra.mxu0 %v4422
    %4531 = vmatprep.subr.mxu0 0.0
    %4532 = vmatpush1.msra.mxu0 %v4421
    %4533 = vmatprep.subr.mxu0 0.0
    %4534 = vmatpush1.msra.mxu0 %v4420
    %4535 = vmatprep.subr.mxu0 0.0
    %4536 = vmatpush1.msra.mxu0 %v4419
    %4537 = vmatprep.subr.mxu0 0.0
    %4538 = vmatpush1.msra.mxu0 %v4418
    %4539 = vmatprep.subr.mxu0 0.0
    %4540 = vmatpush1.msra.mxu0 %v4417
    %4541 = vmatprep.subr.mxu0 0.0
    %4542 = vmatpush1.msra.mxu0 %v4416
    %4543 = vmatprep.subr.mxu0 0.0
    %4544 = vmatpush1.msra.mxu0 %v4415
    %4545 = vmatprep.subr.mxu0 0.0
    %4546 = vmatpush1.msra.mxu0 %v4414
    %4547 = vmatprep.subr.mxu0 0.0
    %4548 = vmatpush1.msra.mxu0 %v4413
    %4549 = vmatprep.subr.mxu0 0.0
    %4550 = vmatpush1.msra.mxu0 %v4412
    %4551 = vmatprep.subr.mxu0 0.0
    %4552 = vmatpush1.msra.mxu0 %v4411
    %4553 = vmatprep.subr.mxu0 0.0
    %4554 = vmatpush1.msra.mxu0 %v4410
    %4555 = vmatprep.subr.mxu0 0.0
    %4556 = vmatpush1.msra.mxu0 %v4409
    %4557 = vmatprep.subr.mxu0 0.0
    %4558 = vmatpush1.msra.mxu0 %v4408
    %4559 = vmatprep.subr.mxu0 0.0
    %4560 = vmatpush1.msra.mxu0 %v4407
    %4561 = vmatprep.subr.mxu0 0.0
    %4562 = vmatpush2.msra.mxu0 0.0
    %4563 = vmatprep.subr.mxu0 0.0
    %4564 = vmatpush2.msra.mxu0 0.0
    %4565 = vmatprep.subr.mxu0 0.0
    %4566 = vmatpush2.msra.mxu0 0.0
    %4567 = vmatprep.subr.mxu0 0.0
    %4568 = vmatpush2.msra.mxu0 0.0
    %4569 = vmatprep.subr.mxu0 0.0
    %4570 = vmatpush2.msra.mxu0 0.0
    %4571 = vmatprep.subr.mxu0 0.0
    %4572 = vmatpush2.msra.mxu0 0.0
    %4573 = vmatprep.subr.mxu0 0.0
    %4574 = vmatpush2.msra.mxu0 0.0
    %4575 = vmatprep.subr.mxu0 0.0
    %4576 = vmatpush2.msra.mxu0 0.0
    %4577 = vmatprep.subr.mxu0 0.0
    %4578 = vmatpush2.msra.mxu0 0.0
    %4579 = vmatprep.subr.mxu0 0.0
    %4580 = vmatpush2.msra.mxu0 0.0
    %4581 = vmatprep.subr.mxu0 0.0
    %4582 = vmatpush2.msra.mxu0 0.0
    %4583 = vmatprep.subr.mxu0 0.0
    %4584 = vmatpush2.msra.mxu0 0.0
    %4585 = vmatprep.subr.mxu0 0.0
    %4586 = vmatpush2.msra.mxu0 %v4426
    %4587 = vmatprep.subr.mxu0 0.0
    %4588 = vmatpush2.msra.mxu0 %v4425
    %4589 = vmatprep.subr.mxu0 0.0
    %4590 = vmatpush2.msra.mxu0 %v4424
    %4591 = vmatprep.subr.mxu0 0.0
    %4592 = vmatpush2.msra.mxu0 %v4423
    %4593 = vmatprep.mubr.f32.mxu0 %v4433
    %4594 = vmatmul.mubr.f32.gmra.mxu0 %v4353
    %v4595 = vpop.f32.mrf.mxu0
    %v4596 = vadd.f32 %v4511, %v4595
    %v4597 = vpop.f32.mrf.mxu0
    %4598 = vmatprep.mubr.f32.mxu0 %v4436
    %4599 = vmatmul.mubr.f32.gmra.mxu0 %v4372
    %v4600 = vpop.f32.mrf.mxu0
    %v4601 = vadd.f32 %v4516, %v4600
    %v4602 = vpop.f32.mrf.mxu0
    %4603 = vmatprep.mubr.f32.mxu0 %v4439
    %4604 = vmatmul.mubr.f32.gmra.mxu0 %v4355
    %v4605 = vpop.f32.mrf.mxu0
    %v4606 = vadd.f32 %v4521, %v4605
    %v4607 = vpop.f32.mrf.mxu0
    %4608 = vmatprep.mubr.f32.mxu0 %v4442
    %4609 = vmatmul.mubr.f32.gmra.mxu0 %v4373
    %v4610 = vpop.f32.mrf.mxu0
    %v4611 = vadd.f32 %v4526, %v4610
    %v4612 = vpop.f32.mrf.mxu0
    %4613 = vdwg.mxu0
    %v4614 = vmax.f32 %v4596, 0.0
    %v4615 = vmax.f32 %v4601, 0.0
    %v4616 = vmax.f32 %v4606, 0.0
    %v4617 = vmax.f32 %v4611, 0.0
    %v4622 = vrot.slane %v4614, 2
    %v4623 = vrot.slane %v4615, 2
    %v4624 = vsel %vm150, %v4622, %v4623
    %v4625 = vrot.slane %v4616, 2
    %v4626 = vrot.slane %v4617, 2
    %v4627 = vsel %vm150, %v4625, %v4626
    %v4634 = vsel %vm150, 0.0, %v4622
    %v4635 = vsel %vm150, 0.0, %v4625
    %v4636 = vsel %vm150, %v4623, 0.0
    %v4637 = vsel %vm150, %v4626, 0.0
    %v4638 = vrot.slane %v4634, 1
    %v4639 = vrot.slane %v4624, 1
    %v4640 = vrot.slane %v4636, 1
    %v4641 = vrot.slane %v4635, 1
    %v4642 = vrot.slane %v4627, 1
    %v4643 = vrot.slane %v4637, 1
    %v4644 = vsel %vm175, %v4642, %v4643
    %v4645 = vsel %vm175, %v4641, %v4642
    %v4646 = vsel %vm175, %v4639, %v4640
    %v4647 = vsel %vm175, %v4638, %v4639
    %v4648 = vrot.slane %v4634, 2
    %v4649 = vrot.slane %v4624, 2
    %v4650 = vrot.slane %v4636, 2
    %v4651 = vrot.slane %v4635, 2
    %v4652 = vrot.slane %v4627, 2
    %v4653 = vrot.slane %v4637, 2
    %v4654 = vsel %vm186, %v4652, %v4653
    %v4655 = vsel %vm186, %v4651, %v4652
    %v4656 = vsel %vm186, %v4649, %v4650
    %v4657 = vsel %vm186, %v4648, %v4649
    %v4658 = vrot.slane %v4634, 3
    %v4659 = vrot.slane %v4624, 3
    %v4660 = vrot.slane %v4636, 3
    %v4661 = vrot.slane %v4635, 3
    %v4662 = vrot.slane %v4627, 3
    %v4663 = vrot.slane %v4637, 3
    %v4664 = vsel %vm197, %v4662, %v4663
    %v4665 = vsel %vm197, %v4661, %v4662
    %v4666 = vsel %vm197, %v4659, %v4660
    %v4667 = vsel %vm197, %v4658, %v4659
    %v4668 = vrot.slane %v4634, 4
    %v4669 = vrot.slane %v4624, 4
    %v4670 = vrot.slane %v4636, 4
    %v4671 = vrot.slane %v4635, 4
    %v4672 = vrot.slane %v4627, 4
    %v4673 = vrot.slane %v4637, 4
    %v4674 = vsel %vm208, %v4672, %v4673
    %v4675 = vsel %vm208, %v4671, %v4672
    %v4676 = vsel %vm208, %v4669, %v4670
    %v4677 = vsel %vm208, %v4668, %v4669
    %v4678 = vrot.slane %v4634, 5
    %v4679 = vrot.slane %v4624, 5
    %v4680 = vrot.slane %v4636, 5
    %v4681 = vrot.slane %v4635, 5
    %v4682 = vrot.slane %v4627, 5
    %v4683 = vrot.slane %v4637, 5
    %v4684 = vsel %vm219, %v4682, %v4683
    %v4685 = vsel %vm219, %v4681, %v4682
    %v4686 = vsel %vm219, %v4679, %v4680
    %v4687 = vsel %vm219, %v4678, %v4679
    %v4688 = vrot.slane %v4634, 6
    %v4689 = vrot.slane %v4624, 6
    %v4690 = vrot.slane %v4636, 6
    %v4691 = vrot.slane %v4635, 6
    %v4692 = vrot.slane %v4627, 6
    %v4693 = vrot.slane %v4637, 6
    %v4694 = vsel %vm230, %v4692, %v4693
    %v4695 = vsel %vm230, %v4691, %v4692
    %v4696 = vsel %vm230, %v4689, %v4690
    %v4697 = vsel %vm230, %v4688, %v4689
    %v4698 = vrot.slane %v4634, 7
    %v4699 = vrot.slane %v4624, 7
    %v4700 = vrot.slane %v4636, 7
    %v4701 = vrot.slane %v4635, 7
    %v4702 = vrot.slane %v4627, 7
    %v4703 = vrot.slane %v4637, 7
    %v4704 = vsel %vm241, %v4702, %v4703
    %v4705 = vsel %vm241, %v4701, %v4702
    %v4706 = vsel %vm241, %v4699, %v4700
    %v4707 = vsel %vm241, %v4698, %v4699
    %v4708 = vsel %vm175, %v4643, 0.0
    %v4709 = vsel %vm175, %v4640, 0.0
    %v4710 = vsel %vm186, %v4653, 0.0
    %v4711 = vsel %vm186, %v4650, 0.0
    %v4712 = vsel %vm197, %v4663, 0.0
    %v4713 = vsel %vm197, %v4660, 0.0
    %v4714 = vsel %vm208, %v4673, 0.0
    %v4715 = vsel %vm208, %v4670, 0.0
    %4720 = vrot.lane.b32.xlu0 %v4647, 32
    %v4721 = vpop.permute.xlu0 %4720
    %4722 = vrot.lane.b32.xlu0 %v4646, 32
    %v4723 = vpop.permute.xlu0 %4722
    %4724 = vrot.lane.b32.xlu0 %v4645, 32
    %v4725 = vpop.permute.xlu0 %4724
    %4726 = vrot.lane.b32.xlu0 %v4644, 32
    %v4727 = vpop.permute.xlu0 %4726
    %4736 = vrot.lane.b32.xlu0 %v4657, 64
    %v4737 = vpop.permute.xlu0 %4736
    %4738 = vrot.lane.b32.xlu0 %v4656, 64
    %v4739 = vpop.permute.xlu0 %4738
    %4740 = vrot.lane.b32.xlu0 %v4655, 64
    %v4741 = vpop.permute.xlu0 %4740
    %4742 = vrot.lane.b32.xlu0 %v4654, 64
    %v4743 = vpop.permute.xlu0 %4742
    %4752 = vrot.lane.b32.xlu0 %v4667, 96
    %v4753 = vpop.permute.xlu0 %4752
    %4754 = vrot.lane.b32.xlu0 %v4666, 96
    %v4755 = vpop.permute.xlu0 %4754
    %4756 = vrot.lane.b32.xlu0 %v4665, 96
    %v4757 = vpop.permute.xlu0 %4756
    %4758 = vrot.lane.b32.xlu0 %v4664, 96
    %v4759 = vpop.permute.xlu0 %4758
    %4768 = vrot.lane.b32.xlu0 %v4687, 32
    %v4769 = vpop.permute.xlu0 %4768
    %4770 = vrot.lane.b32.xlu0 %v4686, 32
    %v4771 = vpop.permute.xlu0 %4770
    %4772 = vrot.lane.b32.xlu0 %v4685, 32
    %v4773 = vpop.permute.xlu0 %4772
    %4774 = vrot.lane.b32.xlu0 %v4684, 32
    %v4775 = vpop.permute.xlu0 %4774
    %4784 = vrot.lane.b32.xlu0 %v4697, 64
    %v4785 = vpop.permute.xlu0 %4784
    %4786 = vrot.lane.b32.xlu0 %v4696, 64
    %v4787 = vpop.permute.xlu0 %4786
    %4788 = vrot.lane.b32.xlu0 %v4695, 64
    %v4789 = vpop.permute.xlu0 %4788
    %4790 = vrot.lane.b32.xlu0 %v4694, 64
    %v4791 = vpop.permute.xlu0 %4790
    %4800 = vrot.lane.b32.xlu0 %v4707, 96
    %v4801 = vpop.permute.xlu0 %4800
    %4802 = vrot.lane.b32.xlu0 %v4706, 96
    %v4803 = vpop.permute.xlu0 %4802
    %4804 = vrot.lane.b32.xlu0 %v4705, 96
    %v4805 = vpop.permute.xlu0 %4804
    %4806 = vrot.lane.b32.xlu0 %v4704, 96
    %v4807 = vpop.permute.xlu0 %4806
    %4814 = vrot.lane.b32.xlu0 %v4709, 32
    %v4815 = vpop.permute.xlu0 %4814
    %4816 = vrot.lane.b32.xlu0 %v4708, 32
    %v4817 = vpop.permute.xlu0 %4816
    %4822 = vrot.lane.b32.xlu0 %v4711, 64
    %v4823 = vpop.permute.xlu0 %4822
    %4824 = vrot.lane.b32.xlu0 %v4710, 64
    %v4825 = vpop.permute.xlu0 %4824
    %4830 = vrot.lane.b32.xlu0 %v4713, 96
    %v4831 = vpop.permute.xlu0 %4830
    %4832 = vrot.lane.b32.xlu0 %v4712, 96
    %v4833 = vpop.permute.xlu0 %4832
    %v4836 = vsel %vm374, %v4634, %v4721
    %v4837 = vsel %vm374, %v4624, %v4723
    %v4838 = vsel %vm374, %v4635, %v4725
    %v4839 = vsel %vm374, %v4627, %v4727
    %v4840 = vsel %vm379, %v4836, %v4737
    %v4841 = vsel %vm379, %v4837, %v4739
    %v4842 = vsel %vm379, %v4838, %v4741
    %v4843 = vsel %vm379, %v4839, %v4743
    %v4844 = vsel %vm384, %v4840, %v4753
    %v4845 = vsel %vm384, %v4841, %v4755
    %v4846 = vsel %vm384, %v4842, %v4757
    %v4847 = vsel %vm384, %v4843, %v4759
    %v4848 = vsel %vm374, %v4677, %v4769
    %v4849 = vsel %vm374, %v4676, %v4771
    %v4850 = vsel %vm374, %v4675, %v4773
    %v4851 = vsel %vm374, %v4674, %v4775
    %v4852 = vsel %vm379, %v4848, %v4785
    %v4853 = vsel %vm379, %v4849, %v4787
    %v4854 = vsel %vm379, %v4850, %v4789
    %v4855 = vsel %vm379, %v4851, %v4791
    %v4856 = vsel %vm384, %v4852, %v4801
    %v4857 = vsel %vm384, %v4853, %v4803
    %v4858 = vsel %vm384, %v4854, %v4805
    %v4859 = vsel %vm384, %v4855, %v4807
    %v4860 = vsel %vm374, %v4636, %v4815
    %v4861 = vsel %vm374, %v4637, %v4817
    %v4862 = vsel %vm379, %v4860, %v4823
    %v4863 = vsel %vm379, %v4861, %v4825
    %v4864 = vsel %vm384, %v4862, %v4831
    %v4865 = vsel %vm384, %v4863, %v4833
    %s4866 = scalar_lea.vmem %s3, 3744
    %v4867 = vld [vmem:[%s4866] sm:$0xff]
    %v4868 = vld [vmem:[%s4866 + $0x8] sm:$0xff]
    %v4869 = vld [vmem:[%s4866 + $0x10] sm:$0xff]
    %v4870 = vld [vmem:[%s4866 + $0x18] sm:$0xff]
    %v4871 = vld [vmem:[%s4866 + $0x20] sm:$0xff]
    %v4872 = vld [vmem:[%s4866 + $0x28] sm:$0xff]
    %v4873 = vld [vmem:[%s4866 + $0x30] sm:$0xff]
    %v4874 = vld [vmem:[%s4866 + $0x38] sm:$0xff]
    %v4875 = vld [vmem:[%s4866 + $0x40] sm:$0xff]
    %v4876 = vld [vmem:[%s4866 + $0x48] sm:$0xff]
    %v4877 = vld [vmem:[%s4866 + $0x50] sm:$0xff]
    %v4878 = vld [vmem:[%s4866 + $0x58] sm:$0xff]
    %v4879 = vld [vmem:[%s4866 + $0x60] sm:$0xff]
    %v4880 = vld [vmem:[%s4866 + $0x68] sm:$0xff]
    %v4881 = vld [vmem:[%s4866 + $0x70] sm:$0xff]
    %v4882 = vld [vmem:[%s4866 + $0x78] sm:$0xff]
    %v4883 = vld [vmem:[%s4866 + $0x80] sm:$0xff]
    %v4884 = vld [vmem:[%s4866 + $0x88] sm:$0xff]
    %v4885 = vld [vmem:[%s4866 + $0x90] sm:$0xff]
    %v4886 = vld [vmem:[%s4866 + $0x98] sm:$0xff]
    %v4887 = vld [vmem:[%s4866 + $0xa0] sm:$0xff]
    %v4888 = vld [vmem:[%s4866 + $0xa8] sm:$0xff]
    %v4889 = vld [vmem:[%s4866 + $0xb0] sm:$0xff]
    %v4890 = vld [vmem:[%s4866 + $0xb8] sm:$0xff]
    %v4891 = vld [vmem:[%s4866 + $0xc0] sm:$0xff]
    %v4892 = vld [vmem:[%s4866 + $0xc8] sm:$0xff]
    %v4893 = vld [vmem:[%s4866 + $0xd0] sm:$0xff]
    %v4894 = vld [vmem:[%s4866 + $0xd8] sm:$0xff]
    %v4895 = vld [vmem:[%s4866 + $0xe0] sm:$0xff]
    %v4896 = vld [vmem:[%s4866 + $0xe8] sm:$0xff]
    %v4897 = vld [vmem:[%s4866 + $0xf0] sm:$0xff]
    %v4898 = vld [vmem:[%s4866 + $0xf8] sm:$0xff]
    %v4899 = vld [vmem:[%s4866 + $0x100] sm:$0xff]
    %v4900 = vld [vmem:[%s4866 + $0x108] sm:$0xff]
    %v4901 = vld [vmem:[%s4866 + $0x110] sm:$0xff]
    %v4902 = vld [vmem:[%s4866 + $0x118] sm:$0xff]
    %v4903 = vld [vmem:[%s4866 + $0x120] sm:$0xff]
    %v4904 = vld [vmem:[%s4866 + $0x128] sm:$0xff]
    %v4905 = vld [vmem:[%s4866 + $0x130] sm:$0xff]
    %v4906 = vld [vmem:[%s4866 + $0x138] sm:$0xff]
    %v4907 = vld [vmem:[%s4866 + $0x140] sm:$0xff]
    %v4908 = vld [vmem:[%s4866 + $0x148] sm:$0xff]
    %v4909 = vld [vmem:[%s4866 + $0x150] sm:$0xff]
    %v4910 = vld [vmem:[%s4866 + $0x158] sm:$0xff]
    %v4911 = vld [vmem:[%s4866 + $0x160] sm:$0xff]
    %v4912 = vld [vmem:[%s4866 + $0x168] sm:$0xff]
    %v4913 = vld [vmem:[%s4866 + $0x170] sm:$0xff]
    %v4914 = vld [vmem:[%s4866 + $0x178] sm:$0xff]
    %v4915 = vld [vmem:[%s4866 + $0x180] sm:$0xff]
    %v4916 = vld [vmem:[%s4866 + $0x188] sm:$0xff]
    %v4917 = vld [vmem:[%s4866 + $0x190] sm:$0xff]
    %v4918 = vld [vmem:[%s4866 + $0x198] sm:$0xff]
    %v4919 = vld [vmem:[%s4 + $0x9] sm:$0x1]
    %v4920 = vlaneseq
    %v4921 = vshrl.u32 %v4920, 7
    %v4922 = vsub.s32 0, %v4921
    %v4923 = vrot.slane %v4919, %v4922
    %v4925 = vsel %vm374, %v4676, 0
    %v4928 = vsel %vm374, %v4715, 0
    %v4931 = vsel %vm374, %v4674, 0
    %v4934 = vsel %vm374, %v4714, 0
    %4936 = vmatprep.subr.mxu0 0.0
    %4937 = vmatpush1.msra.mxu0 %v4882
    %4938 = vmatprep.subr.mxu0 0.0
    %4939 = vmatpush1.msra.mxu0 %v4881
    %4940 = vmatprep.subr.mxu0 0.0
    %4941 = vmatpush1.msra.mxu0 %v4880
    %4942 = vmatprep.subr.mxu0 0.0
    %4943 = vmatpush1.msra.mxu0 %v4879
    %4944 = vmatprep.subr.mxu0 0.0
    %4945 = vmatpush1.msra.mxu0 %v4878
    %4946 = vmatprep.subr.mxu0 0.0
    %4947 = vmatpush1.msra.mxu0 %v4877
    %4948 = vmatprep.subr.mxu0 0.0
    %4949 = vmatpush1.msra.mxu0 %v4876
    %4950 = vmatprep.subr.mxu0 0.0
    %4951 = vmatpush1.msra.mxu0 %v4875
    %4952 = vmatprep.subr.mxu0 0.0
    %4953 = vmatpush1.msra.mxu0 %v4874
    %4954 = vmatprep.subr.mxu0 0.0
    %4955 = vmatpush1.msra.mxu0 %v4873
    %4956 = vmatprep.subr.mxu0 0.0
    %4957 = vmatpush1.msra.mxu0 %v4872
    %4958 = vmatprep.subr.mxu0 0.0
    %4959 = vmatpush1.msra.mxu0 %v4871
    %4960 = vmatprep.subr.mxu0 0.0
    %4961 = vmatpush1.msra.mxu0 %v4870
    %4962 = vmatprep.subr.mxu0 0.0
    %4963 = vmatpush1.msra.mxu0 %v4869
    %4964 = vmatprep.subr.mxu0 0.0
    %4965 = vmatpush1.msra.mxu0 %v4868
    %4966 = vmatprep.subr.mxu0 0.0
    %4967 = vmatpush1.msra.mxu0 %v4867
    %4968 = vmatprep.subr.mxu0 0.0
    %4969 = vmatpush2.msra.mxu0 %v4898
    %4970 = vmatprep.subr.mxu0 0.0
    %4971 = vmatpush2.msra.mxu0 %v4897
    %4972 = vmatprep.subr.mxu0 0.0
    %4973 = vmatpush2.msra.mxu0 %v4896
    %4974 = vmatprep.subr.mxu0 0.0
    %4975 = vmatpush2.msra.mxu0 %v4895
    %4976 = vmatprep.subr.mxu0 0.0
    %4977 = vmatpush2.msra.mxu0 %v4894
    %4978 = vmatprep.subr.mxu0 0.0
    %4979 = vmatpush2.msra.mxu0 %v4893
    %4980 = vmatprep.subr.mxu0 0.0
    %4981 = vmatpush2.msra.mxu0 %v4892
    %4982 = vmatprep.subr.mxu0 0.0
    %4983 = vmatpush2.msra.mxu0 %v4891
    %4984 = vmatprep.subr.mxu0 0.0
    %4985 = vmatpush2.msra.mxu0 %v4890
    %4986 = vmatprep.subr.mxu0 0.0
    %4987 = vmatpush2.msra.mxu0 %v4889
    %4988 = vmatprep.subr.mxu0 0.0
    %4989 = vmatpush2.msra.mxu0 %v4888
    %4990 = vmatprep.subr.mxu0 0.0
    %4991 = vmatpush2.msra.mxu0 %v4887
    %4992 = vmatprep.subr.mxu0 0.0
    %4993 = vmatpush2.msra.mxu0 %v4886
    %4994 = vmatprep.subr.mxu0 0.0
    %4995 = vmatpush2.msra.mxu0 %v4885
    %4996 = vmatprep.subr.mxu0 0.0
    %4997 = vmatpush2.msra.mxu0 %v4884
    %4998 = vmatprep.subr.mxu0 0.0
    %4999 = vmatpush2.msra.mxu0 %v4883
    %5000 = vmatprep.mubr.f32.mxu0 %v4856
    %5001 = vmatmul.mubr.f32.gmra.mxu0 %v4844
    %v5002 = vpop.f32.mrf.mxu0
    %v5003 = vadd.f32 %v4923, %v5002
    %v5004 = vpop.f32.mrf.mxu0
    %5005 = vmatprep.mubr.f32.mxu0 %v4857
    %5006 = vmatmul.mubr.f32.gmra.mxu0 %v4845
    %v5007 = vpop.f32.mrf.mxu0
    %v5008 = vadd.f32 %v4923, %v5007
    %v5009 = vpop.f32.mrf.mxu0
    %5010 = vmatprep.mubr.f32.mxu0 %v4858
    %5011 = vmatmul.mubr.f32.gmra.mxu0 %v4846
    %v5012 = vpop.f32.mrf.mxu0
    %v5013 = vadd.f32 %v4923, %v5012
    %v5014 = vpop.f32.mrf.mxu0
    %5015 = vmatprep.mubr.f32.mxu0 %v4859
    %5016 = vmatmul.mubr.f32.gmra.mxu0 %v4847
    %v5017 = vpop.f32.mrf.mxu0
    %v5018 = vadd.f32 %v4923, %v5017
    %v5019 = vpop.f32.mrf.mxu0
    %5020 = vdwg.mxu0
    %5021 = vmatprep.subr.mxu0 0.0
    %5022 = vmatpush1.msra.mxu0 %v4914
    %5023 = vmatprep.subr.mxu0 0.0
    %5024 = vmatpush1.msra.mxu0 %v4913
    %5025 = vmatprep.subr.mxu0 0.0
    %5026 = vmatpush1.msra.mxu0 %v4912
    %5027 = vmatprep.subr.mxu0 0.0
    %5028 = vmatpush1.msra.mxu0 %v4911
    %5029 = vmatprep.subr.mxu0 0.0
    %5030 = vmatpush1.msra.mxu0 %v4910
    %5031 = vmatprep.subr.mxu0 0.0
    %5032 = vmatpush1.msra.mxu0 %v4909
    %5033 = vmatprep.subr.mxu0 0.0
    %5034 = vmatpush1.msra.mxu0 %v4908
    %5035 = vmatprep.subr.mxu0 0.0
    %5036 = vmatpush1.msra.mxu0 %v4907
    %5037 = vmatprep.subr.mxu0 0.0
    %5038 = vmatpush1.msra.mxu0 %v4906
    %5039 = vmatprep.subr.mxu0 0.0
    %5040 = vmatpush1.msra.mxu0 %v4905
    %5041 = vmatprep.subr.mxu0 0.0
    %5042 = vmatpush1.msra.mxu0 %v4904
    %5043 = vmatprep.subr.mxu0 0.0
    %5044 = vmatpush1.msra.mxu0 %v4903
    %5045 = vmatprep.subr.mxu0 0.0
    %5046 = vmatpush1.msra.mxu0 %v4902
    %5047 = vmatprep.subr.mxu0 0.0
    %5048 = vmatpush1.msra.mxu0 %v4901
    %5049 = vmatprep.subr.mxu0 0.0
    %5050 = vmatpush1.msra.mxu0 %v4900
    %5051 = vmatprep.subr.mxu0 0.0
    %5052 = vmatpush1.msra.mxu0 %v4899
    %5053 = vmatprep.subr.mxu0 0.0
    %5054 = vmatpush2.msra.mxu0 0.0
    %5055 = vmatprep.subr.mxu0 0.0
    %5056 = vmatpush2.msra.mxu0 0.0
    %5057 = vmatprep.subr.mxu0 0.0
    %5058 = vmatpush2.msra.mxu0 0.0
    %5059 = vmatprep.subr.mxu0 0.0
    %5060 = vmatpush2.msra.mxu0 0.0
    %5061 = vmatprep.subr.mxu0 0.0
    %5062 = vmatpush2.msra.mxu0 0.0
    %5063 = vmatprep.subr.mxu0 0.0
    %5064 = vmatpush2.msra.mxu0 0.0
    %5065 = vmatprep.subr.mxu0 0.0
    %5066 = vmatpush2.msra.mxu0 0.0
    %5067 = vmatprep.subr.mxu0 0.0
    %5068 = vmatpush2.msra.mxu0 0.0
    %5069 = vmatprep.subr.mxu0 0.0
    %5070 = vmatpush2.msra.mxu0 0.0
    %5071 = vmatprep.subr.mxu0 0.0
    %5072 = vmatpush2.msra.mxu0 0.0
    %5073 = vmatprep.subr.mxu0 0.0
    %5074 = vmatpush2.msra.mxu0 0.0
    %5075 = vmatprep.subr.mxu0 0.0
    %5076 = vmatpush2.msra.mxu0 0.0
    %5077 = vmatprep.subr.mxu0 0.0
    %5078 = vmatpush2.msra.mxu0 %v4918
    %5079 = vmatprep.subr.mxu0 0.0
    %5080 = vmatpush2.msra.mxu0 %v4917
    %5081 = vmatprep.subr.mxu0 0.0
    %5082 = vmatpush2.msra.mxu0 %v4916
    %5083 = vmatprep.subr.mxu0 0.0
    %5084 = vmatpush2.msra.mxu0 %v4915
    %5085 = vmatprep.mubr.f32.mxu0 %v4925
    %5086 = vmatmul.mubr.f32.gmra.mxu0 %v4845
    %v5087 = vpop.f32.mrf.mxu0
    %v5088 = vadd.f32 %v5003, %v5087
    %v5089 = vpop.f32.mrf.mxu0
    %5090 = vmatprep.mubr.f32.mxu0 %v4928
    %5091 = vmatmul.mubr.f32.gmra.mxu0 %v4864
    %v5092 = vpop.f32.mrf.mxu0
    %v5093 = vadd.f32 %v5008, %v5092
    %v5094 = vpop.f32.mrf.mxu0
    %5095 = vmatprep.mubr.f32.mxu0 %v4931
    %5096 = vmatmul.mubr.f32.gmra.mxu0 %v4847
    %v5097 = vpop.f32.mrf.mxu0
    %v5098 = vadd.f32 %v5013, %v5097
    %v5099 = vpop.f32.mrf.mxu0
    %5100 = vmatprep.mubr.f32.mxu0 %v4934
    %5101 = vmatmul.mubr.f32.gmra.mxu0 %v4865
    %v5102 = vpop.f32.mrf.mxu0
    %v5103 = vadd.f32 %v5018, %v5102
    %v5104 = vpop.f32.mrf.mxu0
    %5105 = vdwg.mxu0
    %v5106 = vmul.f32 %v5088, 0.3
    %v5107 = vmul.f32 %v5093, 0.3
    %v5108 = vmul.f32 %v5098, 0.3
    %v5109 = vmul.f32 %v5103, 0.3
    %v5110 = vadd.f32 %v4118, %v5106
    %v5111 = vadd.f32 %v4119, %v5107
    %v5112 = vadd.f32 %v4120, %v5108
    %v5113 = vadd.f32 %v4121, %v5109
    %v5114 = vld [vmem:[%s5] sm:$0xff]
    %v5115 = vld [vmem:[%s5 + $0x8] sm:$0xff]
    %v5116 = vmul.f32 %v5110, %v5114
    %v5117 = vmul.f32 %v5111, %v5115
    %v5118 = vmul.f32 %v5112, %v5114
    %v5119 = vmul.f32 %v5113, %v5115
    %v5120 = vsel %vm374, %v5116, 0.0
    %5121 = vadd.xlane.f32.xlu0 %v5120
    %v5122 = vpop.xlane.xlu0 %5121
    %v5123 = vsel %vm374, %v5117, 0.0
    %5124 = vadd.xlane.f32.xlu0 %v5123
    %v5125 = vpop.xlane.xlu0 %5124
    %v5126 = vsel %vm374, %v5118, 0.0
    %5127 = vadd.xlane.f32.xlu0 %v5126
    %v5128 = vpop.xlane.xlu0 %5127
    %v5129 = vsel %vm374, %v5119, 0.0
    %5130 = vadd.xlane.f32.xlu0 %v5129
    %v5131 = vpop.xlane.xlu0 %5130
    %v5132 = vadd.f32 %v5122, %v5125
    %v5133 = vrot.slane %v5132, 4
    %v5134 = vadd.f32 %v5132, %v5133
    %v5135 = vrot.slane %v5134, 2
    %v5136 = vadd.f32 %v5134, %v5135
    %v5137 = vrot.slane %v5136, 1
    %v5138 = vadd.f32 %v5136, %v5137
    %v5139 = vadd.f32 %v5128, %v5131
    %v5140 = vrot.slane %v5139, 4
    %v5141 = vadd.f32 %v5139, %v5140
    %v5142 = vrot.slane %v5141, 2
    %v5143 = vadd.f32 %v5141, %v5142
    %v5144 = vrot.slane %v5143, 1
    %v5145 = vadd.f32 %v5143, %v5144
    %v5146 = vlaneseq
    %v5147 = vand.u32 %v5146, 127
    %vm5148 = vcmp.eq.s32.totalorder %v174, %v5147
    %v5149 = vsel %vm5148, 1, 0
    %v5150 = vcvt.s32.f32 %v5149
    %v5152 = vrot.slane %v5150, 1
    %v5155 = vmul.f32 %v5138, %v5150
    %v5156 = vmul.f32 %v5145, %v5152
    %v5159 = vrot.slane %v5156, 7
    %vm5160 = vcmask 1041409
    %v5161 = vsel %vm5160, %v5159, %v5155
    %vm5163 = vcmask 9216
    %v5164 = vsel %vm5163, %v5161, 0.0
    %v5165 = vrot.slane %v5164, 4
    %v5166 = vadd.f32 %v5164, %v5165
    %v5167 = vrot.slane %v5166, 2
    %v5168 = vadd.f32 %v5166, %v5167
    %v5169 = vrot.slane %v5168, 1
    %v5170 = vadd.f32 %v5168, %v5169
    %s5171 = sld [smem:[#allocation2]]
    %v5172 = vstv %s5171
    %v5173 = vadd.f32 %v5170, %v5172
    %vm5174 = vcmask 8192
    %5175 = vst.msk [vmem:[#allocation3] sm:$0x1] %vm5174, %v5173
    // Predicated region
    $region30: #{tpu_custom_call.1} parent=1 // pred_check
      _
    $region31: #{tpu_custom_call.1} parent=1 // pred_check_branch
      %5177 = sbr.rel (0) target = $region33
    $region32: #{tpu_custom_call.1} parent=1 // pred_region
      %s5179 = ssub.s32 16, 16
      %5180 = vsyncadd [#allocation4], %s5179
      %s5182 = sshll.u32 [#allocation3], 4
      %s5183 = int_to_ptr.vmem [resolvable:$true] %s5182
      %5185 = dma.vmem_to_hbm [thread:$0]  %s5183, 16, %s7, [#allocation4]
    $region33: #{tpu_custom_call.1} parent=1 // pred_fallthru
      _
    // Predicated region
    $region34: #{tpu_custom_call.1} parent=1 // pred_check
      _
    $region35: #{tpu_custom_call.1} parent=1 // pred_check_branch
      %5187 = sbr.rel (0) target = $region37
    $region36: #{tpu_custom_call.1} parent=1 // pred_region
      %5188 = dma.done [#allocation4], 16
    $region37: #{tpu_custom_call.1} parent=1 // pred_fallthru
      _
    %5189 = vsyncpa [#allocation4], 1

</llo_original>
